<compile_context>
chip_gen: v6e
topology: v6e:2x2x1
jax: 0.10.0
libtpu: 0.0.40
codegen_flags: <defaults>
</compile_context>

<pallas_src>
import jax
import jax.numpy as jnp
from jax.experimental import pallas as pl
from jax.experimental.pallas import tpu as pltpu  # noqa: F401  (kept for CompilerParams if needed)

# Values for the external `config` dict referenced by the module (chosen deterministically).
# CONS must be 0: the reference would otherwise call F.mse_loss(None, label_sim) and crash.
CONFIG = {"MULTI": 0.0, "SSL": 0.5, "CONS": 0.0, "DIS": 0.0, "EDGE": 0.0,
          "DDI": 0.06, "SYM_NUM": 4}

NHEAD = 2           # nn.TransformerEncoderLayer(nhead=2)
FFN_DIM = 2048      # PyTorch default dim_feedforward
LN_EPS = 1e-5
SSL_TEMP = 0.1
NEG_BIG = -1e30     # large finite negative for key_padding_mask (NaN-safe)


# ----------------------------- small in-kernel helpers -----------------------------

def _layernorm(x, w, b, eps=LN_EPS):
    mu = jnp.mean(x, axis=-1, keepdims=True)
    var = jnp.mean((x - mu) ** 2, axis=-1, keepdims=True)
    return (x - mu) * jax.lax.rsqrt(var + eps) * w + b


def _softmax_last(x):
    m = jnp.max(x, axis=-1, keepdims=True)
    e = jnp.exp(x - m)
    return e / jnp.sum(e, axis=-1, keepdims=True)


# ----------------------------- fused forward kernel -----------------------------
# Single invocation (no grid): everything fits VMEM (~1.8 MB of weights, tiny activations).

def fused_forward_kernel(
    # data
    x_ref, mask_ref, pid_ref, drugs_ref,
    # encoder (rnns_global) weights: pre-transposed [in, out], MHA pre-split per head
    wq_ref, bq_ref, wk_ref, bk_ref, wv_ref, bv_ref, wo_ref, bo_ref,
    ln1w_ref, ln1b_ref, ln2w_ref, ln2b_ref,
    f1w_ref, f1b_ref, f2w_ref, f2b_ref,
    # projection / expert weights (pre-transposed [in, out])
    p1w_ref, p2w_ref,
    gelnw_ref, gelnb_ref, gew_ref,
    lelnw_ref, lelnb_ref, lew_ref,
    # outputs
    loss_ref, yprob_ref, pg_ref, plcl_ref,
):
    x = x_ref[...]                                   # [N, T, D]  N = 2B (global ++ local)
    m = mask_ref[...]                                # [N, T]     1.0 = valid visit
    N, T, D = x.shape
    Dh = D // NHEAD
    scale = 1.0 / float(Dh) ** 0.5
    B = N // 2

    # --- get_last_visit index: robust int32 compare (no float equality) -----------
    lengths = jnp.sum(m.astype(jnp.int32), axis=1, keepdims=True)          # [N, 1]
    t_ids = jax.lax.broadcasted_iota(jnp.int32, (N, T), 1)
    last_1h = (t_ids == (lengths - 1)).astype(jnp.float32)                 # [N, T]

    # Only the last-visit output row is consumed downstream; for a post-norm
    # TransformerEncoderLayer each output row depends only on its own query row,
    # so gather the last-visit input rows up front (bit-identical result).
    x_last = jnp.sum(x * last_1h[:, :, None], axis=1)                      # [N, D]
    x_flat = x.reshape(N * T, D)                                           # K/V over all visits

    # --- multi-head self-attention (queries = last-visit rows only) ---------------
    attn = bo_ref[...]                                                     # [1, D] out_proj bias
    for h in range(NHEAD):
        q_h = jnp.dot(x_last, wq_ref[h],
                      preferred_element_type=jnp.float32) + bq_ref[h]      # [N, Dh]
        k_h = (jnp.dot(x_flat, wk_ref[h],
                       preferred_element_type=jnp.float32) + bk_ref[h]).reshape(N, T, Dh)
        v_h = (jnp.dot(x_flat, wv_ref[h],
                       preferred_element_type=jnp.float32) + bv_ref[h]).reshape(N, T, Dh)
        s = jnp.sum((q_h * scale)[:, None, :] * k_h, axis=-1)              # [N, T]
        s = jnp.where(m > 0.5, s, NEG_BIG)                                 # src_key_padding_mask
        p = _softmax_last(s)
        ctx = jnp.sum(p[:, :, None] * v_h, axis=1)                         # [N, Dh]
        attn = attn + jnp.dot(ctx, wo_ref[h], preferred_element_type=jnp.float32)
    # attn: [N, D]; dropout in eval mode = identity

    # --- post-norm encoder tail on the N last-visit rows only ---------------------
    x1 = _layernorm(x_last + attn, ln1w_ref[...], ln1b_ref[...])
    ff = jnp.maximum(jnp.dot(x1, f1w_ref[...],
                             preferred_element_type=jnp.float32) + f1b_ref[...], 0.0)
    ff = jnp.dot(ff, f2w_ref[...], preferred_element_type=jnp.float32) + f2b_ref[...]
    enc = _layernorm(x1 + ff, ln2w_ref[...], ln2b_ref[...])                # [N, D]

    g_last = enc[:B]                                                       # global view  [B, D]
    l_last = enc[B:]                                                       # local view   [B, D]

    # --- projections, expert heads, max-vote, softmaxes ---------------------------
    pid = pid_ref[...]                                                     # [B, D]
    pid_g = jnp.dot(pid, p1w_ref[...], preferred_element_type=jnp.float32)  # proj1  [B, E]
    pid_l = jnp.dot(pid, p2w_ref[...], preferred_element_type=jnp.float32)  # proj2
    g_cat = jnp.concatenate([pid_g, g_last], axis=1)                       # [B, 4E] (lane-dense 128)
    l_cat = jnp.concatenate([pid_l, l_last], axis=1)

    lg = jnp.dot(_layernorm(g_cat, gelnw_ref[...], gelnb_ref[...]), gew_ref[...],
                 preferred_element_type=jnp.float32)                       # global_expert [B, V]
    ll = jnp.dot(_layernorm(l_cat, lelnw_ref[...], lelnb_ref[...]), lew_ref[...],
                 preferred_element_type=jnp.float32)                       # local_expert

    logits = jnp.maximum(lg, ll)                                           # vote == 'max'
    yprob_ref[...] = _softmax_last(logits)
    pg_ref[...] = _softmax_last(lg)
    plcl_ref[...] = _softmax_last(ll)

    # --- loss: soft-target cross-entropy + SSL InfoNCE ----------------------------
    mx = jnp.max(logits, axis=-1, keepdims=True)
    sh = logits - mx
    logp = sh - jnp.log(jnp.sum(jnp.exp(sh), axis=-1, keepdims=True))
    # F.cross_entropy with probability targets, reduction='mean'
    ce = jnp.mean(-jnp.sum(drugs_ref[...] * logp, axis=-1, keepdims=True))

    def l2norm(v):                                                         # F.normalize(p=2, dim=-1)
        n = jnp.sqrt(jnp.sum(v * v, axis=-1, keepdims=True))
        return v / jnp.maximum(n, 1e-12)

    gv = l2norm(g_last)
    lv = l2norm(l_last)
    pos_e = jnp.exp(jnp.sum(gv * lv, axis=1, keepdims=True) / SSL_TEMP)    # [B, 1]
    neg = jax.lax.dot_general(gv, lv, (((1,), (1,)), ((), ())),
                              preferred_element_type=jnp.float32)          # [B, B] (no transpose)
    neg_e = jnp.sum(jnp.exp(neg / SSL_TEMP), axis=1, keepdims=True)
    ssl = jnp.sum(-jnp.log(pos_e / (neg_e + 1e-8)))

    loss_ref[...] = jnp.reshape(CONFIG["SSL"] * ssl + ce, (1, 1))


# ----------------------------- parameter init (PyTorch layout, synthetic) ---------------------

def init_params_torch_layout(key, E=32, V=128, ffn=FFN_DIM):
    """Weights in the layout Rec_Layer's state_dict would hold them ([out, in] linears)."""
    D = 3 * E
    keys = iter(jax.random.split(key, 40))

    def nrm(shape, scale=0.05):
        return jax.random.normal(next(keys), shape, jnp.float32) * scale

    def ln(n):
        return 1.0 + nrm((1, n), 0.02), nrm((1, n), 0.02)

    p = dict(
        in_w=nrm((3 * D, D)), in_b=nrm((1, 3 * D), 0.02),      # MHA in_proj
        out_w=nrm((D, D)), out_b=nrm((1, D), 0.02),            # MHA out_proj
        ff1_w=nrm((ffn, D)), ff1_b=nrm((1, ffn), 0.02),
        ff2_w=nrm((D, ffn)), ff2_b=nrm((1, D), 0.02),
        proj1_w=nrm((E, D)), proj2_w=nrm((E, D)),
        ge_w=nrm((V, 4 * E)), le_w=nrm((V, 4 * E)),
    )
    p["ln1_w"], p["ln1_b"] = ln(D)
    p["ln2_w"], p["ln2_b"] = ln(D)
    p["ge_lnw"], p["ge_lnb"] = ln(4 * E)
    p["le_lnw"], p["le_lnb"] = ln(4 * E)
    return p


def prepare_params(tp, E):
    """Host-side re-layout (free at trace time): pre-transpose every linear to [in, out]
    and pre-split the MHA in/out projections per head so the kernel never transposes
    or slices at non-128-aligned boundaries (D=96, Dh=48)."""
    D = 3 * E
    Dh = D // NHEAD
    in_w, in_b = tp["in_w"], tp["in_b"][0]
    wq_f, wk_f, wv_f = in_w[:D], in_w[D:2 * D], in_w[2 * D:]
    bq_f, bk_f, bv_f = in_b[:D], in_b[D:2 * D], in_b[2 * D:]

    def split_w(w):   # [D, D] (out, in) -> [H, D, Dh] (in, out-per-head)
        return jnp.stack([w[h * Dh:(h + 1) * Dh, :].T for h in range(NHEAD)], axis=0)

    def split_b(b):   # [D] -> [H, 1, Dh]
        return jnp.stack([b[h * Dh:(h + 1) * Dh][None, :] for h in range(NHEAD)], axis=0)

    return dict(
        wq=split_w(wq_f), bq=split_b(bq_f),
        wk=split_w(wk_f), bk=split_b(bk_f),
        wv=split_w(wv_f), bv=split_b(bv_f),
        # out_proj: concat(heads) @ out_w.T  ==  sum_h ctx_h @ out_w[:, h*Dh:(h+1)*Dh].T
        wo=jnp.stack([tp["out_w"][:, h * Dh:(h + 1) * Dh].T for h in range(NHEAD)], axis=0),
        bo=tp["out_b"],
        ln1_w=tp["ln1_w"], ln1_b=tp["ln1_b"], ln2_w=tp["ln2_w"], ln2_b=tp["ln2_b"],
        ff1_w=tp["ff1_w"].T, ff1_b=tp["ff1_b"],
        ff2_w=tp["ff2_w"].T, ff2_b=tp["ff2_b"],
        proj1_w=tp["proj1_w"].T, proj2_w=tp["proj2_w"].T,
        ge_lnw=tp["ge_lnw"], ge_lnb=tp["ge_lnb"], ge_w=tp["ge_w"].T,
        le_lnw=tp["le_lnw"], le_lnb=tp["le_lnb"], le_w=tp["le_w"].T,
    )


# ----------------------------- forward pass (single pallas_call) -----------------------------

def rec_layer_forward(params, patient_id, pe_global, pe_local, drugs, ddi_adj, mask):
    del ddi_adj  # self.ddi_weight is hard-coded to 0.0 in the reference; DDI term never computed
    B, T, D = pe_global.shape
    V = params["ge_w"].shape[1]

    # The reference applies self.rnns_global to BOTH views (rnns_local is never used),
    # so the two encoder passes share weights and fuse into one stacked batch.
    mask_f = mask.astype(jnp.float32)                        # [B, T]
    x_stacked = jnp.concatenate([pe_global, pe_local], axis=0)   # [2B, T, D]
    mask2 = jnp.concatenate([mask_f, mask_f], axis=0)            # [2B, T]

    # TODO(synk): emb_split = cat(patient_emb_global[mask].split(E,1)) has a data-dependent
    # shape (boolean-mask gather); it only feeds intent_dis_loss, which is dead for DIS=0.

    loss, y_prob, p_g, p_l = pl.pallas_call(
        fused_forward_kernel,
        out_shape=(jax.ShapeDtypeStruct((1, 1), jnp.float32),
                   jax.ShapeDtypeStruct((B, V), jnp.float32),
                   jax.ShapeDtypeStruct((B, V), jnp.float32),
                   jax.ShapeDtypeStruct((B, V), jnp.float32)),
    )(x_stacked, mask2, patient_id, drugs,
      params["wq"], params["bq"], params["wk"], params["bk"],
      params["wv"], params["bv"], params["wo"], params["bo"],
      params["ln1_w"], params["ln1_b"], params["ln2_w"], params["ln2_b"],
      params["ff1_w"], params["ff1_b"], params["ff2_w"], params["ff2_b"],
      params["proj1_w"], params["proj2_w"],
      params["ge_lnw"], params["ge_lnb"], params["ge_w"],
      params["le_lnw"], params["le_lnb"], params["le_w"])

    # MULTI / EDGE / CONS / DIS loss terms skipped: drug_indexes / aux_reg are None and
    # their weights are 0, exactly as in the reference configuration.
    return loss[0, 0], y_prob, p_g, p_l


# ----------------------------- main -----------------------------

if __name__ == "__main__":
    B, T, E, V = 4, 8, 32, 128
    D = 3 * E
    torch_layout = init_params_torch_layout(jax.random.PRNGKey(42), E=E, V=V)
    params = prepare_params(torch_layout, E)

    k = jax.random.split(jax.random.PRNGKey(0), 6)
    patient_id = jax.random.normal(k[0], (B, D), jnp.float32)
    pe_global = jax.random.normal(k[1], (B, T, D), jnp.float32)
    pe_local = jax.random.normal(k[2], (B, T, D), jnp.float32)
    drugs = (jax.random.uniform(k[3], (B, V)) < 0.2).astype(jnp.float32)     # multi-hot labels
    ddi_adj = (jax.random.uniform(k[4], (V, V)) < 0.1).astype(jnp.float32)
    lengths = jnp.array([8, 5, 3, 1], dtype=jnp.int32)
    mask = jnp.arange(T)[None, :] < lengths[:, None]                         # [B, T] bool

    fwd = jax.jit(rec_layer_forward)
    loss, y_prob, p_global, p_local = fwd(
        params, patient_id, pe_global, pe_local, drugs, ddi_adj, mask)
    jax.block_until_ready((loss, y_prob, p_global, p_local))

    assert y_prob.shape == (B, V) and p_global.shape == (B, V) and p_local.shape == (B, V)
    assert bool(jnp.isfinite(loss))
    assert bool(jnp.all(jnp.isfinite(y_prob)))
    print("KERNEL_OK")
</pallas_src>

<mosaic_0001>
module attributes {stable_mosaic.version = 11 : i64} {
  func.func @fused_forward_kernel(%arg0: memref<8x8x96xf32, #tpu.memory_space<vmem>>, %arg1: memref<8x8xf32, #tpu.memory_space<vmem>>, %arg2: memref<4x96xf32, #tpu.memory_space<vmem>>, %arg3: memref<4x128xf32, #tpu.memory_space<vmem>>, %arg4: memref<2x96x48xf32, #tpu.memory_space<vmem>>, %arg5: memref<2x1x48xf32, #tpu.memory_space<vmem>>, %arg6: memref<2x96x48xf32, #tpu.memory_space<vmem>>, %arg7: memref<2x1x48xf32, #tpu.memory_space<vmem>>, %arg8: memref<2x96x48xf32, #tpu.memory_space<vmem>>, %arg9: memref<2x1x48xf32, #tpu.memory_space<vmem>>, %arg10: memref<2x48x96xf32, #tpu.memory_space<vmem>>, %arg11: memref<1x96xf32, #tpu.memory_space<vmem>>, %arg12: memref<1x96xf32, #tpu.memory_space<vmem>>, %arg13: memref<1x96xf32, #tpu.memory_space<vmem>>, %arg14: memref<1x96xf32, #tpu.memory_space<vmem>>, %arg15: memref<1x96xf32, #tpu.memory_space<vmem>>, %arg16: memref<96x2048xf32, #tpu.memory_space<vmem>>, %arg17: memref<1x2048xf32, #tpu.memory_space<vmem>>, %arg18: memref<2048x96xf32, #tpu.memory_space<vmem>>, %arg19: memref<1x96xf32, #tpu.memory_space<vmem>>, %arg20: memref<96x32xf32, #tpu.memory_space<vmem>>, %arg21: memref<96x32xf32, #tpu.memory_space<vmem>>, %arg22: memref<1x128xf32, #tpu.memory_space<vmem>>, %arg23: memref<1x128xf32, #tpu.memory_space<vmem>>, %arg24: memref<128x128xf32, #tpu.memory_space<vmem>>, %arg25: memref<1x128xf32, #tpu.memory_space<vmem>>, %arg26: memref<1x128xf32, #tpu.memory_space<vmem>>, %arg27: memref<128x128xf32, #tpu.memory_space<vmem>>, %arg28: memref<1x1xf32, #tpu.memory_space<vmem>>, %arg29: memref<4x128xf32, #tpu.memory_space<vmem>>, %arg30: memref<4x128xf32, #tpu.memory_space<vmem>>, %arg31: memref<4x128xf32, #tpu.memory_space<vmem>>) attributes {dimension_semantics = [], scalar_prefetch = 0 : i64, scratch_operands = 0 : i64, tpu.core_type = #tpu.core_type<tc>} {
    %c0 = arith.constant 0 : index
    %c0_0 = arith.constant 0 : index
    %c0_1 = arith.constant 0 : index
    %0 = vector.load %arg0[%c0, %c0_0, %c0_1] : memref<8x8x96xf32, #tpu.memory_space<vmem>>, vector<8x8x96xf32>
    %c0_2 = arith.constant 0 : index
    %c0_3 = arith.constant 0 : index
    %1 = vector.load %arg1[%c0_2, %c0_3] : memref<8x8xf32, #tpu.memory_space<vmem>>, vector<8x8xf32>
    %2 = arith.fptosi %1 : vector<8x8xf32> to vector<8x8xi32>
    %cst = arith.constant dense<0> : vector<8xi32>
    %3 = vector.multi_reduction <add>, %2, %cst [1] : vector<8x8xi32> to vector<8xi32>
    %4 = vector.shape_cast %3 : vector<8xi32> to vector<8x1xi32>
    %5 = tpu.iota {dimensions = array<i32: 1>} : vector<8x8xi32>
    %c1_i32 = arith.constant 1 : i32
    %6 = vector.broadcast %c1_i32 : i32 to vector<8x1xi32>
    %7 = arith.subi %4, %6 : vector<8x1xi32>
    %8 = vector.broadcast %7 : vector<8x1xi32> to vector<8x8xi32>
    %9 = arith.cmpi eq, %5, %8 : vector<8x8xi32>
    %10 = arith.extui %9 : vector<8x8xi1> to vector<8x8xi32>
    %11 = arith.sitofp %10 : vector<8x8xi32> to vector<8x8xf32>
    %12 = vector.shape_cast %11 : vector<8x8xf32> to vector<8x8x1xf32>
    %13 = vector.broadcast %12 : vector<8x8x1xf32> to vector<8x8x96xf32>
    %14 = arith.mulf %0, %13 : vector<8x8x96xf32>
    %cst_4 = arith.constant dense<0.000000e+00> : vector<8x96xf32>
    %15 = vector.multi_reduction <add>, %14, %cst_4 [1] : vector<8x8x96xf32> to vector<8x96xf32>
    %16 = vector.shape_cast %0 : vector<8x8x96xf32> to vector<64x96xf32>
    %c0_5 = arith.constant 0 : index
    %c0_6 = arith.constant 0 : index
    %17 = vector.load %arg11[%c0_5, %c0_6] : memref<1x96xf32, #tpu.memory_space<vmem>>, vector<1x96xf32>
    %c0_7 = arith.constant 0 : index
    %c0_8 = arith.constant 0 : index
    %c0_9 = arith.constant 0 : index
    %18 = vector.load %arg4[%c0_7, %c0_8, %c0_9] : memref<2x96x48xf32, #tpu.memory_space<vmem>>, vector<1x96x48xf32>
    %19 = vector.shape_cast %18 : vector<1x96x48xf32> to vector<96x48xf32>
    %cst_10 = arith.constant dense<0.000000e+00> : vector<8x48xf32>
    %20 = tpu.matmul %15, %19, %cst_10 {dimension_numbers = #tpu.dot_dimension_numbers<[1], [0], [0], [1], [0, 0, 1, 1], [], []>} : vector<8x96xf32>, vector<96x48xf32>, vector<8x48xf32> -> vector<8x48xf32>
    %c0_11 = arith.constant 0 : index
    %c0_12 = arith.constant 0 : index
    %c0_13 = arith.constant 0 : index
    %21 = vector.load %arg5[%c0_11, %c0_12, %c0_13] : memref<2x1x48xf32, #tpu.memory_space<vmem>>, vector<1x1x48xf32>
    %22 = vector.shape_cast %21 : vector<1x1x48xf32> to vector<1x48xf32>
    %23 = vector.broadcast %22 : vector<1x48xf32> to vector<8x48xf32>
    %24 = arith.addf %20, %23 : vector<8x48xf32>
    %c0_14 = arith.constant 0 : index
    %c0_15 = arith.constant 0 : index
    %c0_16 = arith.constant 0 : index
    %25 = vector.load %arg6[%c0_14, %c0_15, %c0_16] : memref<2x96x48xf32, #tpu.memory_space<vmem>>, vector<1x96x48xf32>
    %26 = vector.shape_cast %25 : vector<1x96x48xf32> to vector<96x48xf32>
    %cst_17 = arith.constant dense<0.000000e+00> : vector<64x48xf32>
    %27 = tpu.matmul %16, %26, %cst_17 {dimension_numbers = #tpu.dot_dimension_numbers<[1], [0], [0], [1], [0, 0, 1, 1], [], []>} : vector<64x96xf32>, vector<96x48xf32>, vector<64x48xf32> -> vector<64x48xf32>
    %c0_18 = arith.constant 0 : index
    %c0_19 = arith.constant 0 : index
    %c0_20 = arith.constant 0 : index
    %28 = vector.load %arg7[%c0_18, %c0_19, %c0_20] : memref<2x1x48xf32, #tpu.memory_space<vmem>>, vector<1x1x48xf32>
    %29 = vector.shape_cast %28 : vector<1x1x48xf32> to vector<1x48xf32>
    %30 = vector.broadcast %29 : vector<1x48xf32> to vector<64x48xf32>
    %31 = arith.addf %27, %30 : vector<64x48xf32>
    %32 = vector.shape_cast %31 : vector<64x48xf32> to vector<8x8x48xf32>
    %c0_21 = arith.constant 0 : index
    %c0_22 = arith.constant 0 : index
    %c0_23 = arith.constant 0 : index
    %33 = vector.load %arg8[%c0_21, %c0_22, %c0_23] : memref<2x96x48xf32, #tpu.memory_space<vmem>>, vector<1x96x48xf32>
    %34 = vector.shape_cast %33 : vector<1x96x48xf32> to vector<96x48xf32>
    %cst_24 = arith.constant dense<0.000000e+00> : vector<64x48xf32>
    %35 = tpu.matmul %16, %34, %cst_24 {dimension_numbers = #tpu.dot_dimension_numbers<[1], [0], [0], [1], [0, 0, 1, 1], [], []>} : vector<64x96xf32>, vector<96x48xf32>, vector<64x48xf32> -> vector<64x48xf32>
    %c0_25 = arith.constant 0 : index
    %c0_26 = arith.constant 0 : index
    %c0_27 = arith.constant 0 : index
    %36 = vector.load %arg9[%c0_25, %c0_26, %c0_27] : memref<2x1x48xf32, #tpu.memory_space<vmem>>, vector<1x1x48xf32>
    %37 = vector.shape_cast %36 : vector<1x1x48xf32> to vector<1x48xf32>
    %38 = vector.broadcast %37 : vector<1x48xf32> to vector<64x48xf32>
    %39 = arith.addf %35, %38 : vector<64x48xf32>
    %40 = vector.shape_cast %39 : vector<64x48xf32> to vector<8x8x48xf32>
    %cst_28 = arith.constant 0.144337565 : f32
    %41 = vector.broadcast %cst_28 : f32 to vector<8x48xf32>
    %42 = arith.mulf %24, %41 : vector<8x48xf32>
    %43 = vector.shape_cast %42 : vector<8x48xf32> to vector<8x1x48xf32>
    %44 = vector.broadcast %43 : vector<8x1x48xf32> to vector<8x8x48xf32>
    %45 = arith.mulf %44, %32 : vector<8x8x48xf32>
    %cst_29 = arith.constant dense<0.000000e+00> : vector<8x8xf32>
    %46 = vector.multi_reduction <add>, %45, %cst_29 [2] : vector<8x8x48xf32> to vector<8x8xf32>
    %cst_30 = arith.constant 5.000000e-01 : f32
    %47 = vector.broadcast %cst_30 : f32 to vector<8x8xf32>
    %48 = arith.cmpf ogt, %1, %47 : vector<8x8xf32>
    %cst_31 = arith.constant -1.000000e+30 : f32
    %49 = vector.broadcast %cst_31 : f32 to vector<8x8xf32>
    %50 = arith.select %48, %46, %49 : vector<8x8xi1>, vector<8x8xf32>
    %cst_32 = arith.constant dense<0xFF800000> : vector<8xf32>
    %51 = vector.multi_reduction <maximumf>, %50, %cst_32 [1] : vector<8x8xf32> to vector<8xf32>
    %52 = vector.shape_cast %51 : vector<8xf32> to vector<8x1xf32>
    %53 = vector.broadcast %52 : vector<8x1xf32> to vector<8x8xf32>
    %54 = arith.subf %50, %53 : vector<8x8xf32>
    %55 = math.exp %54 : vector<8x8xf32>
    %cst_33 = arith.constant dense<0.000000e+00> : vector<8xf32>
    %56 = vector.multi_reduction <add>, %55, %cst_33 [1] : vector<8x8xf32> to vector<8xf32>
    %57 = vector.shape_cast %56 : vector<8xf32> to vector<8x1xf32>
    %58 = vector.broadcast %57 : vector<8x1xf32> to vector<8x8xf32>
    %59 = arith.divf %55, %58 : vector<8x8xf32>
    %60 = vector.shape_cast %59 : vector<8x8xf32> to vector<8x8x1xf32>
    %61 = vector.broadcast %60 : vector<8x8x1xf32> to vector<8x8x48xf32>
    %62 = arith.mulf %61, %40 : vector<8x8x48xf32>
    %cst_34 = arith.constant dense<0.000000e+00> : vector<8x48xf32>
    %63 = vector.multi_reduction <add>, %62, %cst_34 [1] : vector<8x8x48xf32> to vector<8x48xf32>
    %c0_35 = arith.constant 0 : index
    %c0_36 = arith.constant 0 : index
    %c0_37 = arith.constant 0 : index
    %64 = vector.load %arg10[%c0_35, %c0_36, %c0_37] : memref<2x48x96xf32, #tpu.memory_space<vmem>>, vector<1x48x96xf32>
    %65 = vector.shape_cast %64 : vector<1x48x96xf32> to vector<48x96xf32>
    %cst_38 = arith.constant dense<0.000000e+00> : vector<8x96xf32>
    %66 = tpu.matmul %63, %65, %cst_38 {dimension_numbers = #tpu.dot_dimension_numbers<[1], [0], [0], [1], [0, 0, 1, 1], [], []>} : vector<8x48xf32>, vector<48x96xf32>, vector<8x96xf32> -> vector<8x96xf32>
    %67 = vector.broadcast %17 : vector<1x96xf32> to vector<8x96xf32>
    %68 = arith.addf %67, %66 : vector<8x96xf32>
    %c1 = arith.constant 1 : index
    %c0_39 = arith.constant 0 : index
    %c0_40 = arith.constant 0 : index
    %69 = vector.load %arg4[%c1, %c0_39, %c0_40] : memref<2x96x48xf32, #tpu.memory_space<vmem>>, vector<1x96x48xf32>
    %70 = vector.shape_cast %69 : vector<1x96x48xf32> to vector<96x48xf32>
    %cst_41 = arith.constant dense<0.000000e+00> : vector<8x48xf32>
    %71 = tpu.matmul %15, %70, %cst_41 {dimension_numbers = #tpu.dot_dimension_numbers<[1], [0], [0], [1], [0, 0, 1, 1], [], []>} : vector<8x96xf32>, vector<96x48xf32>, vector<8x48xf32> -> vector<8x48xf32>
    %c1_42 = arith.constant 1 : index
    %c0_43 = arith.constant 0 : index
    %c0_44 = arith.constant 0 : index
    %72 = vector.load %arg5[%c1_42, %c0_43, %c0_44] : memref<2x1x48xf32, #tpu.memory_space<vmem>>, vector<1x1x48xf32>
    %73 = vector.shape_cast %72 : vector<1x1x48xf32> to vector<1x48xf32>
    %74 = vector.broadcast %73 : vector<1x48xf32> to vector<8x48xf32>
    %75 = arith.addf %71, %74 : vector<8x48xf32>
    %c1_45 = arith.constant 1 : index
    %c0_46 = arith.constant 0 : index
    %c0_47 = arith.constant 0 : index
    %76 = vector.load %arg6[%c1_45, %c0_46, %c0_47] : memref<2x96x48xf32, #tpu.memory_space<vmem>>, vector<1x96x48xf32>
    %77 = vector.shape_cast %76 : vector<1x96x48xf32> to vector<96x48xf32>
    %cst_48 = arith.constant dense<0.000000e+00> : vector<64x48xf32>
    %78 = tpu.matmul %16, %77, %cst_48 {dimension_numbers = #tpu.dot_dimension_numbers<[1], [0], [0], [1], [0, 0, 1, 1], [], []>} : vector<64x96xf32>, vector<96x48xf32>, vector<64x48xf32> -> vector<64x48xf32>
    %c1_49 = arith.constant 1 : index
    %c0_50 = arith.constant 0 : index
    %c0_51 = arith.constant 0 : index
    %79 = vector.load %arg7[%c1_49, %c0_50, %c0_51] : memref<2x1x48xf32, #tpu.memory_space<vmem>>, vector<1x1x48xf32>
    %80 = vector.shape_cast %79 : vector<1x1x48xf32> to vector<1x48xf32>
    %81 = vector.broadcast %80 : vector<1x48xf32> to vector<64x48xf32>
    %82 = arith.addf %78, %81 : vector<64x48xf32>
    %83 = vector.shape_cast %82 : vector<64x48xf32> to vector<8x8x48xf32>
    %c1_52 = arith.constant 1 : index
    %c0_53 = arith.constant 0 : index
    %c0_54 = arith.constant 0 : index
    %84 = vector.load %arg8[%c1_52, %c0_53, %c0_54] : memref<2x96x48xf32, #tpu.memory_space<vmem>>, vector<1x96x48xf32>
    %85 = vector.shape_cast %84 : vector<1x96x48xf32> to vector<96x48xf32>
    %cst_55 = arith.constant dense<0.000000e+00> : vector<64x48xf32>
    %86 = tpu.matmul %16, %85, %cst_55 {dimension_numbers = #tpu.dot_dimension_numbers<[1], [0], [0], [1], [0, 0, 1, 1], [], []>} : vector<64x96xf32>, vector<96x48xf32>, vector<64x48xf32> -> vector<64x48xf32>
    %c1_56 = arith.constant 1 : index
    %c0_57 = arith.constant 0 : index
    %c0_58 = arith.constant 0 : index
    %87 = vector.load %arg9[%c1_56, %c0_57, %c0_58] : memref<2x1x48xf32, #tpu.memory_space<vmem>>, vector<1x1x48xf32>
    %88 = vector.shape_cast %87 : vector<1x1x48xf32> to vector<1x48xf32>
    %89 = vector.broadcast %88 : vector<1x48xf32> to vector<64x48xf32>
    %90 = arith.addf %86, %89 : vector<64x48xf32>
    %91 = vector.shape_cast %90 : vector<64x48xf32> to vector<8x8x48xf32>
    %cst_59 = arith.constant 0.144337565 : f32
    %92 = vector.broadcast %cst_59 : f32 to vector<8x48xf32>
    %93 = arith.mulf %75, %92 : vector<8x48xf32>
    %94 = vector.shape_cast %93 : vector<8x48xf32> to vector<8x1x48xf32>
    %95 = vector.broadcast %94 : vector<8x1x48xf32> to vector<8x8x48xf32>
    %96 = arith.mulf %95, %83 : vector<8x8x48xf32>
    %cst_60 = arith.constant dense<0.000000e+00> : vector<8x8xf32>
    %97 = vector.multi_reduction <add>, %96, %cst_60 [2] : vector<8x8x48xf32> to vector<8x8xf32>
    %cst_61 = arith.constant 5.000000e-01 : f32
    %98 = vector.broadcast %cst_61 : f32 to vector<8x8xf32>
    %99 = arith.cmpf ogt, %1, %98 : vector<8x8xf32>
    %cst_62 = arith.constant -1.000000e+30 : f32
    %100 = vector.broadcast %cst_62 : f32 to vector<8x8xf32>
    %101 = arith.select %99, %97, %100 : vector<8x8xi1>, vector<8x8xf32>
    %cst_63 = arith.constant dense<0xFF800000> : vector<8xf32>
    %102 = vector.multi_reduction <maximumf>, %101, %cst_63 [1] : vector<8x8xf32> to vector<8xf32>
    %103 = vector.shape_cast %102 : vector<8xf32> to vector<8x1xf32>
    %104 = vector.broadcast %103 : vector<8x1xf32> to vector<8x8xf32>
    %105 = arith.subf %101, %104 : vector<8x8xf32>
    %106 = math.exp %105 : vector<8x8xf32>
    %cst_64 = arith.constant dense<0.000000e+00> : vector<8xf32>
    %107 = vector.multi_reduction <add>, %106, %cst_64 [1] : vector<8x8xf32> to vector<8xf32>
    %108 = vector.shape_cast %107 : vector<8xf32> to vector<8x1xf32>
    %109 = vector.broadcast %108 : vector<8x1xf32> to vector<8x8xf32>
    %110 = arith.divf %106, %109 : vector<8x8xf32>
    %111 = vector.shape_cast %110 : vector<8x8xf32> to vector<8x8x1xf32>
    %112 = vector.broadcast %111 : vector<8x8x1xf32> to vector<8x8x48xf32>
    %113 = arith.mulf %112, %91 : vector<8x8x48xf32>
    %cst_65 = arith.constant dense<0.000000e+00> : vector<8x48xf32>
    %114 = vector.multi_reduction <add>, %113, %cst_65 [1] : vector<8x8x48xf32> to vector<8x48xf32>
    %c1_66 = arith.constant 1 : index
    %c0_67 = arith.constant 0 : index
    %c0_68 = arith.constant 0 : index
    %115 = vector.load %arg10[%c1_66, %c0_67, %c0_68] : memref<2x48x96xf32, #tpu.memory_space<vmem>>, vector<1x48x96xf32>
    %116 = vector.shape_cast %115 : vector<1x48x96xf32> to vector<48x96xf32>
    %cst_69 = arith.constant dense<0.000000e+00> : vector<8x96xf32>
    %117 = tpu.matmul %114, %116, %cst_69 {dimension_numbers = #tpu.dot_dimension_numbers<[1], [0], [0], [1], [0, 0, 1, 1], [], []>} : vector<8x48xf32>, vector<48x96xf32>, vector<8x96xf32> -> vector<8x96xf32>
    %118 = arith.addf %68, %117 : vector<8x96xf32>
    %119 = arith.addf %15, %118 : vector<8x96xf32>
    %c0_70 = arith.constant 0 : index
    %c0_71 = arith.constant 0 : index
    %120 = vector.load %arg12[%c0_70, %c0_71] : memref<1x96xf32, #tpu.memory_space<vmem>>, vector<1x96xf32>
    %c0_72 = arith.constant 0 : index
    %c0_73 = arith.constant 0 : index
    %121 = vector.load %arg13[%c0_72, %c0_73] : memref<1x96xf32, #tpu.memory_space<vmem>>, vector<1x96xf32>
    %cst_74 = arith.constant dense<0.000000e+00> : vector<8xf32>
    %122 = vector.multi_reduction <add>, %119, %cst_74 [1] : vector<8x96xf32> to vector<8xf32>
    %123 = vector.shape_cast %122 : vector<8xf32> to vector<8x1xf32>
    %cst_75 = arith.constant 9.600000e+01 : f32
    %124 = vector.broadcast %cst_75 : f32 to vector<8x1xf32>
    %125 = arith.divf %123, %124 : vector<8x1xf32>
    %126 = vector.broadcast %125 : vector<8x1xf32> to vector<8x96xf32>
    %127 = arith.subf %119, %126 : vector<8x96xf32>
    %128 = arith.mulf %127, %127 : vector<8x96xf32>
    %cst_76 = arith.constant dense<0.000000e+00> : vector<8xf32>
    %129 = vector.multi_reduction <add>, %128, %cst_76 [1] : vector<8x96xf32> to vector<8xf32>
    %130 = vector.shape_cast %129 : vector<8xf32> to vector<8x1xf32>
    %cst_77 = arith.constant 9.600000e+01 : f32
    %131 = vector.broadcast %cst_77 : f32 to vector<8x1xf32>
    %132 = arith.divf %130, %131 : vector<8x1xf32>
    %133 = vector.broadcast %125 : vector<8x1xf32> to vector<8x96xf32>
    %134 = arith.subf %119, %133 : vector<8x96xf32>
    %cst_78 = arith.constant 9.99999974E-6 : f32
    %135 = vector.broadcast %cst_78 : f32 to vector<8x1xf32>
    %136 = arith.addf %132, %135 : vector<8x1xf32>
    %137 = math.rsqrt %136 : vector<8x1xf32>
    %138 = vector.broadcast %137 : vector<8x1xf32> to vector<8x96xf32>
    %139 = arith.mulf %134, %138 : vector<8x96xf32>
    %140 = vector.broadcast %120 : vector<1x96xf32> to vector<8x96xf32>
    %141 = arith.mulf %139, %140 : vector<8x96xf32>
    %142 = vector.broadcast %121 : vector<1x96xf32> to vector<8x96xf32>
    %143 = arith.addf %141, %142 : vector<8x96xf32>
    %c0_79 = arith.constant 0 : index
    %c0_80 = arith.constant 0 : index
    %144 = vector.load %arg16[%c0_79, %c0_80] : memref<96x2048xf32, #tpu.memory_space<vmem>>, vector<96x2048xf32>
    %cst_81 = arith.constant dense<0.000000e+00> : vector<8x2048xf32>
    %145 = tpu.matmul %143, %144, %cst_81 {dimension_numbers = #tpu.dot_dimension_numbers<[1], [0], [0], [1], [0, 0, 1, 1], [], []>} : vector<8x96xf32>, vector<96x2048xf32>, vector<8x2048xf32> -> vector<8x2048xf32>
    %c0_82 = arith.constant 0 : index
    %c0_83 = arith.constant 0 : index
    %146 = vector.load %arg17[%c0_82, %c0_83] : memref<1x2048xf32, #tpu.memory_space<vmem>>, vector<1x2048xf32>
    %147 = vector.broadcast %146 : vector<1x2048xf32> to vector<8x2048xf32>
    %148 = arith.addf %145, %147 : vector<8x2048xf32>
    %cst_84 = arith.constant 0.000000e+00 : f32
    %149 = vector.broadcast %cst_84 : f32 to vector<8x2048xf32>
    %150 = arith.maximumf %148, %149 : vector<8x2048xf32>
    %c0_85 = arith.constant 0 : index
    %c0_86 = arith.constant 0 : index
    %151 = vector.load %arg18[%c0_85, %c0_86] : memref<2048x96xf32, #tpu.memory_space<vmem>>, vector<2048x96xf32>
    %cst_87 = arith.constant dense<0.000000e+00> : vector<8x96xf32>
    %152 = tpu.matmul %150, %151, %cst_87 {dimension_numbers = #tpu.dot_dimension_numbers<[1], [0], [0], [1], [0, 0, 1, 1], [], []>} : vector<8x2048xf32>, vector<2048x96xf32>, vector<8x96xf32> -> vector<8x96xf32>
    %c0_88 = arith.constant 0 : index
    %c0_89 = arith.constant 0 : index
    %153 = vector.load %arg19[%c0_88, %c0_89] : memref<1x96xf32, #tpu.memory_space<vmem>>, vector<1x96xf32>
    %154 = vector.broadcast %153 : vector<1x96xf32> to vector<8x96xf32>
    %155 = arith.addf %152, %154 : vector<8x96xf32>
    %156 = arith.addf %143, %155 : vector<8x96xf32>
    %c0_90 = arith.constant 0 : index
    %c0_91 = arith.constant 0 : index
    %157 = vector.load %arg14[%c0_90, %c0_91] : memref<1x96xf32, #tpu.memory_space<vmem>>, vector<1x96xf32>
    %c0_92 = arith.constant 0 : index
    %c0_93 = arith.constant 0 : index
    %158 = vector.load %arg15[%c0_92, %c0_93] : memref<1x96xf32, #tpu.memory_space<vmem>>, vector<1x96xf32>
    %cst_94 = arith.constant dense<0.000000e+00> : vector<8xf32>
    %159 = vector.multi_reduction <add>, %156, %cst_94 [1] : vector<8x96xf32> to vector<8xf32>
    %160 = vector.shape_cast %159 : vector<8xf32> to vector<8x1xf32>
    %cst_95 = arith.constant 9.600000e+01 : f32
    %161 = vector.broadcast %cst_95 : f32 to vector<8x1xf32>
    %162 = arith.divf %160, %161 : vector<8x1xf32>
    %163 = vector.broadcast %162 : vector<8x1xf32> to vector<8x96xf32>
    %164 = arith.subf %156, %163 : vector<8x96xf32>
    %165 = arith.mulf %164, %164 : vector<8x96xf32>
    %cst_96 = arith.constant dense<0.000000e+00> : vector<8xf32>
    %166 = vector.multi_reduction <add>, %165, %cst_96 [1] : vector<8x96xf32> to vector<8xf32>
    %167 = vector.shape_cast %166 : vector<8xf32> to vector<8x1xf32>
    %cst_97 = arith.constant 9.600000e+01 : f32
    %168 = vector.broadcast %cst_97 : f32 to vector<8x1xf32>
    %169 = arith.divf %167, %168 : vector<8x1xf32>
    %170 = vector.broadcast %162 : vector<8x1xf32> to vector<8x96xf32>
    %171 = arith.subf %156, %170 : vector<8x96xf32>
    %cst_98 = arith.constant 9.99999974E-6 : f32
    %172 = vector.broadcast %cst_98 : f32 to vector<8x1xf32>
    %173 = arith.addf %169, %172 : vector<8x1xf32>
    %174 = math.rsqrt %173 : vector<8x1xf32>
    %175 = vector.broadcast %174 : vector<8x1xf32> to vector<8x96xf32>
    %176 = arith.mulf %171, %175 : vector<8x96xf32>
    %177 = vector.broadcast %157 : vector<1x96xf32> to vector<8x96xf32>
    %178 = arith.mulf %176, %177 : vector<8x96xf32>
    %179 = vector.broadcast %158 : vector<1x96xf32> to vector<8x96xf32>
    %180 = arith.addf %178, %179 : vector<8x96xf32>
    %181 = vector.extract_strided_slice %180 {offsets = [0, 0], sizes = [4, 96], strides = [1, 1]} : vector<8x96xf32> to vector<4x96xf32>
    %182 = vector.extract_strided_slice %180 {offsets = [4, 0], sizes = [4, 96], strides = [1, 1]} : vector<8x96xf32> to vector<4x96xf32>
    %c0_99 = arith.constant 0 : index
    %c0_100 = arith.constant 0 : index
    %183 = vector.load %arg2[%c0_99, %c0_100] : memref<4x96xf32, #tpu.memory_space<vmem>>, vector<4x96xf32>
    %c0_101 = arith.constant 0 : index
    %c0_102 = arith.constant 0 : index
    %184 = vector.load %arg20[%c0_101, %c0_102] : memref<96x32xf32, #tpu.memory_space<vmem>>, vector<96x32xf32>
    %cst_103 = arith.constant dense<0.000000e+00> : vector<4x32xf32>
    %185 = tpu.matmul %183, %184, %cst_103 {dimension_numbers = #tpu.dot_dimension_numbers<[1], [0], [0], [1], [0, 0, 1, 1], [], []>} : vector<4x96xf32>, vector<96x32xf32>, vector<4x32xf32> -> vector<4x32xf32>
    %c0_104 = arith.constant 0 : index
    %c0_105 = arith.constant 0 : index
    %186 = vector.load %arg21[%c0_104, %c0_105] : memref<96x32xf32, #tpu.memory_space<vmem>>, vector<96x32xf32>
    %cst_106 = arith.constant dense<0.000000e+00> : vector<4x32xf32>
    %187 = tpu.matmul %183, %186, %cst_106 {dimension_numbers = #tpu.dot_dimension_numbers<[1], [0], [0], [1], [0, 0, 1, 1], [], []>} : vector<4x96xf32>, vector<96x32xf32>, vector<4x32xf32> -> vector<4x32xf32>
    %188 = tpu.concatenate %185, %181 in 1 : vector<4x32xf32>, vector<4x96xf32> -> vector<4x128xf32>
    %189 = tpu.concatenate %187, %182 in 1 : vector<4x32xf32>, vector<4x96xf32> -> vector<4x128xf32>
    %c0_107 = arith.constant 0 : index
    %c0_108 = arith.constant 0 : index
    %190 = vector.load %arg22[%c0_107, %c0_108] : memref<1x128xf32, #tpu.memory_space<vmem>>, vector<1x128xf32>
    %c0_109 = arith.constant 0 : index
    %c0_110 = arith.constant 0 : index
    %191 = vector.load %arg23[%c0_109, %c0_110] : memref<1x128xf32, #tpu.memory_space<vmem>>, vector<1x128xf32>
    %cst_111 = arith.constant dense<0.000000e+00> : vector<4xf32>
    %192 = vector.multi_reduction <add>, %188, %cst_111 [1] : vector<4x128xf32> to vector<4xf32>
    %193 = vector.shape_cast %192 : vector<4xf32> to vector<4x1xf32>
    %cst_112 = arith.constant 1.280000e+02 : f32
    %194 = vector.broadcast %cst_112 : f32 to vector<4x1xf32>
    %195 = arith.divf %193, %194 : vector<4x1xf32>
    %196 = vector.broadcast %195 : vector<4x1xf32> to vector<4x128xf32>
    %197 = arith.subf %188, %196 : vector<4x128xf32>
    %198 = arith.mulf %197, %197 : vector<4x128xf32>
    %cst_113 = arith.constant dense<0.000000e+00> : vector<4xf32>
    %199 = vector.multi_reduction <add>, %198, %cst_113 [1] : vector<4x128xf32> to vector<4xf32>
    %200 = vector.shape_cast %199 : vector<4xf32> to vector<4x1xf32>
    %cst_114 = arith.constant 1.280000e+02 : f32
    %201 = vector.broadcast %cst_114 : f32 to vector<4x1xf32>
    %202 = arith.divf %200, %201 : vector<4x1xf32>
    %203 = vector.broadcast %195 : vector<4x1xf32> to vector<4x128xf32>
    %204 = arith.subf %188, %203 : vector<4x128xf32>
    %cst_115 = arith.constant 9.99999974E-6 : f32
    %205 = vector.broadcast %cst_115 : f32 to vector<4x1xf32>
    %206 = arith.addf %202, %205 : vector<4x1xf32>
    %207 = math.rsqrt %206 : vector<4x1xf32>
    %208 = vector.broadcast %207 : vector<4x1xf32> to vector<4x128xf32>
    %209 = arith.mulf %204, %208 : vector<4x128xf32>
    %210 = vector.broadcast %190 : vector<1x128xf32> to vector<4x128xf32>
    %211 = arith.mulf %209, %210 : vector<4x128xf32>
    %212 = vector.broadcast %191 : vector<1x128xf32> to vector<4x128xf32>
    %213 = arith.addf %211, %212 : vector<4x128xf32>
    %c0_116 = arith.constant 0 : index
    %c0_117 = arith.constant 0 : index
    %214 = vector.load %arg24[%c0_116, %c0_117] : memref<128x128xf32, #tpu.memory_space<vmem>>, vector<128x128xf32>
    %cst_118 = arith.constant dense<0.000000e+00> : vector<4x128xf32>
    %215 = tpu.matmul %213, %214, %cst_118 {dimension_numbers = #tpu.dot_dimension_numbers<[1], [0], [0], [1], [0, 0, 1, 1], [], []>} : vector<4x128xf32>, vector<128x128xf32>, vector<4x128xf32> -> vector<4x128xf32>
    %c0_119 = arith.constant 0 : index
    %c0_120 = arith.constant 0 : index
    %216 = vector.load %arg25[%c0_119, %c0_120] : memref<1x128xf32, #tpu.memory_space<vmem>>, vector<1x128xf32>
    %c0_121 = arith.constant 0 : index
    %c0_122 = arith.constant 0 : index
    %217 = vector.load %arg26[%c0_121, %c0_122] : memref<1x128xf32, #tpu.memory_space<vmem>>, vector<1x128xf32>
    %cst_123 = arith.constant dense<0.000000e+00> : vector<4xf32>
    %218 = vector.multi_reduction <add>, %189, %cst_123 [1] : vector<4x128xf32> to vector<4xf32>
    %219 = vector.shape_cast %218 : vector<4xf32> to vector<4x1xf32>
    %cst_124 = arith.constant 1.280000e+02 : f32
    %220 = vector.broadcast %cst_124 : f32 to vector<4x1xf32>
    %221 = arith.divf %219, %220 : vector<4x1xf32>
    %222 = vector.broadcast %221 : vector<4x1xf32> to vector<4x128xf32>
    %223 = arith.subf %189, %222 : vector<4x128xf32>
    %224 = arith.mulf %223, %223 : vector<4x128xf32>
    %cst_125 = arith.constant dense<0.000000e+00> : vector<4xf32>
    %225 = vector.multi_reduction <add>, %224, %cst_125 [1] : vector<4x128xf32> to vector<4xf32>
    %226 = vector.shape_cast %225 : vector<4xf32> to vector<4x1xf32>
    %cst_126 = arith.constant 1.280000e+02 : f32
    %227 = vector.broadcast %cst_126 : f32 to vector<4x1xf32>
    %228 = arith.divf %226, %227 : vector<4x1xf32>
    %229 = vector.broadcast %221 : vector<4x1xf32> to vector<4x128xf32>
    %230 = arith.subf %189, %229 : vector<4x128xf32>
    %cst_127 = arith.constant 9.99999974E-6 : f32
    %231 = vector.broadcast %cst_127 : f32 to vector<4x1xf32>
    %232 = arith.addf %228, %231 : vector<4x1xf32>
    %233 = math.rsqrt %232 : vector<4x1xf32>
    %234 = vector.broadcast %233 : vector<4x1xf32> to vector<4x128xf32>
    %235 = arith.mulf %230, %234 : vector<4x128xf32>
    %236 = vector.broadcast %216 : vector<1x128xf32> to vector<4x128xf32>
    %237 = arith.mulf %235, %236 : vector<4x128xf32>
    %238 = vector.broadcast %217 : vector<1x128xf32> to vector<4x128xf32>
    %239 = arith.addf %237, %238 : vector<4x128xf32>
    %c0_128 = arith.constant 0 : index
    %c0_129 = arith.constant 0 : index
    %240 = vector.load %arg27[%c0_128, %c0_129] : memref<128x128xf32, #tpu.memory_space<vmem>>, vector<128x128xf32>
    %cst_130 = arith.constant dense<0.000000e+00> : vector<4x128xf32>
    %241 = tpu.matmul %239, %240, %cst_130 {dimension_numbers = #tpu.dot_dimension_numbers<[1], [0], [0], [1], [0, 0, 1, 1], [], []>} : vector<4x128xf32>, vector<128x128xf32>, vector<4x128xf32> -> vector<4x128xf32>
    %242 = arith.maximumf %215, %241 : vector<4x128xf32>
    %cst_131 = arith.constant dense<0xFF800000> : vector<4xf32>
    %243 = vector.multi_reduction <maximumf>, %242, %cst_131 [1] : vector<4x128xf32> to vector<4xf32>
    %244 = vector.shape_cast %243 : vector<4xf32> to vector<4x1xf32>
    %245 = vector.broadcast %244 : vector<4x1xf32> to vector<4x128xf32>
    %246 = arith.subf %242, %245 : vector<4x128xf32>
    %247 = math.exp %246 : vector<4x128xf32>
    %cst_132 = arith.constant dense<0.000000e+00> : vector<4xf32>
    %248 = vector.multi_reduction <add>, %247, %cst_132 [1] : vector<4x128xf32> to vector<4xf32>
    %249 = vector.shape_cast %248 : vector<4xf32> to vector<4x1xf32>
    %250 = vector.broadcast %249 : vector<4x1xf32> to vector<4x128xf32>
    %251 = arith.divf %247, %250 : vector<4x128xf32>
    %c0_133 = arith.constant 0 : index
    %c0_134 = arith.constant 0 : index
    %252 = vector.load %arg29[%c0_133, %c0_134] : memref<4x128xf32, #tpu.memory_space<vmem>>, vector<4x128xf32>
    tpu.vector_store %arg29[%c0_133, %c0_134], %251 {strides = array<i32>} : memref<4x128xf32, #tpu.memory_space<vmem>>, vector<4x128xf32>,
    %cst_135 = arith.constant dense<0xFF800000> : vector<4xf32>
    %253 = vector.multi_reduction <maximumf>, %215, %cst_135 [1] : vector<4x128xf32> to vector<4xf32>
    %254 = vector.shape_cast %253 : vector<4xf32> to vector<4x1xf32>
    %255 = vector.broadcast %254 : vector<4x1xf32> to vector<4x128xf32>
    %256 = arith.subf %215, %255 : vector<4x128xf32>
    %257 = math.exp %256 : vector<4x128xf32>
    %cst_136 = arith.constant dense<0.000000e+00> : vector<4xf32>
    %258 = vector.multi_reduction <add>, %257, %cst_136 [1] : vector<4x128xf32> to vector<4xf32>
    %259 = vector.shape_cast %258 : vector<4xf32> to vector<4x1xf32>
    %260 = vector.broadcast %259 : vector<4x1xf32> to vector<4x128xf32>
    %261 = arith.divf %257, %260 : vector<4x128xf32>
    %c0_137 = arith.constant 0 : index
    %c0_138 = arith.constant 0 : index
    %262 = vector.load %arg30[%c0_137, %c0_138] : memref<4x128xf32, #tpu.memory_space<vmem>>, vector<4x128xf32>
    tpu.vector_store %arg30[%c0_137, %c0_138], %261 {strides = array<i32>} : memref<4x128xf32, #tpu.memory_space<vmem>>, vector<4x128xf32>,
    %cst_139 = arith.constant dense<0xFF800000> : vector<4xf32>
    %263 = vector.multi_reduction <maximumf>, %241, %cst_139 [1] : vector<4x128xf32> to vector<4xf32>
    %264 = vector.shape_cast %263 : vector<4xf32> to vector<4x1xf32>
    %265 = vector.broadcast %264 : vector<4x1xf32> to vector<4x128xf32>
    %266 = arith.subf %241, %265 : vector<4x128xf32>
    %267 = math.exp %266 : vector<4x128xf32>
    %cst_140 = arith.constant dense<0.000000e+00> : vector<4xf32>
    %268 = vector.multi_reduction <add>, %267, %cst_140 [1] : vector<4x128xf32> to vector<4xf32>
    %269 = vector.shape_cast %268 : vector<4xf32> to vector<4x1xf32>
    %270 = vector.broadcast %269 : vector<4x1xf32> to vector<4x128xf32>
    %271 = arith.divf %267, %270 : vector<4x128xf32>
    %c0_141 = arith.constant 0 : index
    %c0_142 = arith.constant 0 : index
    %272 = vector.load %arg31[%c0_141, %c0_142] : memref<4x128xf32, #tpu.memory_space<vmem>>, vector<4x128xf32>
    tpu.vector_store %arg31[%c0_141, %c0_142], %271 {strides = array<i32>} : memref<4x128xf32, #tpu.memory_space<vmem>>, vector<4x128xf32>,
    %cst_143 = arith.constant dense<0xFF800000> : vector<4xf32>
    %273 = vector.multi_reduction <maximumf>, %242, %cst_143 [1] : vector<4x128xf32> to vector<4xf32>
    %274 = vector.shape_cast %273 : vector<4xf32> to vector<4x1xf32>
    %275 = vector.broadcast %274 : vector<4x1xf32> to vector<4x128xf32>
    %276 = arith.subf %242, %275 : vector<4x128xf32>
    %277 = math.exp %276 : vector<4x128xf32>
    %cst_144 = arith.constant dense<0.000000e+00> : vector<4xf32>
    %278 = vector.multi_reduction <add>, %277, %cst_144 [1] : vector<4x128xf32> to vector<4xf32>
    %279 = vector.shape_cast %278 : vector<4xf32> to vector<4x1xf32>
    %280 = math.log %279 : vector<4x1xf32>
    %281 = vector.broadcast %280 : vector<4x1xf32> to vector<4x128xf32>
    %282 = arith.subf %276, %281 : vector<4x128xf32>
    %c0_145 = arith.constant 0 : index
    %c0_146 = arith.constant 0 : index
    %283 = vector.load %arg3[%c0_145, %c0_146] : memref<4x128xf32, #tpu.memory_space<vmem>>, vector<4x128xf32>
    %284 = arith.mulf %283, %282 : vector<4x128xf32>
    %cst_147 = arith.constant dense<0.000000e+00> : vector<4xf32>
    %285 = vector.multi_reduction <add>, %284, %cst_147 [1] : vector<4x128xf32> to vector<4xf32>
    %286 = vector.shape_cast %285 : vector<4xf32> to vector<4x1xf32>
    %cst_148 = arith.constant 0.000000e+00 : f32
    %287 = vector.broadcast %cst_148 : f32 to vector<4x1xf32>
    %288 = arith.subf %287, %286 : vector<4x1xf32>
    %289 = vector.shape_cast %288 : vector<4x1xf32> to vector<1x4x1xf32>
    %cst_149 = arith.constant dense<0.000000e+00> : vector<1xf32>
    %290 = vector.multi_reduction <add>, %289, %cst_149 [1, 2] : vector<1x4x1xf32> to vector<1xf32>
    %291 = vector.shape_cast %290 : vector<1xf32> to vector<1x1x1xf32>
    %292 = vector.extract %291[0, 0, 0] : f32 from vector<1x1x1xf32>
    %cst_150 = arith.constant 4.000000e+00 : f32
    %293 = arith.divf %292, %cst_150 : f32
    %294 = arith.mulf %181, %181 : vector<4x96xf32>
    %cst_151 = arith.constant dense<0.000000e+00> : vector<4xf32>
    %295 = vector.multi_reduction <add>, %294, %cst_151 [1] : vector<4x96xf32> to vector<4xf32>
    %296 = vector.shape_cast %295 : vector<4xf32> to vector<4x1xf32>
    %297 = math.sqrt %296 : vector<4x1xf32>
    %cst_152 = arith.constant 9.99999996E-13 : f32
    %298 = vector.broadcast %cst_152 : f32 to vector<4x1xf32>
    %299 = arith.maximumf %297, %298 : vector<4x1xf32>
    %300 = vector.broadcast %299 : vector<4x1xf32> to vector<4x96xf32>
    %301 = arith.divf %181, %300 : vector<4x96xf32>
    %302 = arith.mulf %182, %182 : vector<4x96xf32>
    %cst_153 = arith.constant dense<0.000000e+00> : vector<4xf32>
    %303 = vector.multi_reduction <add>, %302, %cst_153 [1] : vector<4x96xf32> to vector<4xf32>
    %304 = vector.shape_cast %303 : vector<4xf32> to vector<4x1xf32>
    %305 = math.sqrt %304 : vector<4x1xf32>
    %cst_154 = arith.constant 9.99999996E-13 : f32
    %306 = vector.broadcast %cst_154 : f32 to vector<4x1xf32>
    %307 = arith.maximumf %305, %306 : vector<4x1xf32>
    %308 = vector.broadcast %307 : vector<4x1xf32> to vector<4x96xf32>
    %309 = arith.divf %182, %308 : vector<4x96xf32>
    %310 = arith.mulf %301, %309 : vector<4x96xf32>
    %cst_155 = arith.constant dense<0.000000e+00> : vector<4xf32>
    %311 = vector.multi_reduction <add>, %310, %cst_155 [1] : vector<4x96xf32> to vector<4xf32>
    %312 = vector.shape_cast %311 : vector<4xf32> to vector<4x1xf32>
    %cst_156 = arith.constant 1.000000e-01 : f32
    %313 = vector.broadcast %cst_156 : f32 to vector<4x1xf32>
    %314 = arith.divf %312, %313 : vector<4x1xf32>
    %315 = math.exp %314 : vector<4x1xf32>
    %cst_157 = arith.constant dense<0.000000e+00> : vector<4x4xf32>
    %316 = tpu.matmul %301, %309, %cst_157 {dimension_numbers = #tpu.dot_dimension_numbers<[1], [1], [0], [0], [0, 0, 1, 0], [], []>} : vector<4x96xf32>, vector<4x96xf32>, vector<4x4xf32> -> vector<4x4xf32>
    %cst_158 = arith.constant 1.000000e-01 : f32
    %317 = vector.broadcast %cst_158 : f32 to vector<4x4xf32>
    %318 = arith.divf %316, %317 : vector<4x4xf32>
    %319 = math.exp %318 : vector<4x4xf32>
    %cst_159 = arith.constant dense<0.000000e+00> : vector<4xf32>
    %320 = vector.multi_reduction <add>, %319, %cst_159 [1] : vector<4x4xf32> to vector<4xf32>
    %321 = vector.shape_cast %320 : vector<4xf32> to vector<4x1xf32>
    %cst_160 = arith.constant 9.99999993E-9 : f32
    %322 = vector.broadcast %cst_160 : f32 to vector<4x1xf32>
    %323 = arith.addf %321, %322 : vector<4x1xf32>
    %324 = arith.divf %315, %323 : vector<4x1xf32>
    %325 = math.log %324 : vector<4x1xf32>
    %cst_161 = arith.constant 0.000000e+00 : f32
    %326 = vector.broadcast %cst_161 : f32 to vector<4x1xf32>
    %327 = arith.subf %326, %325 : vector<4x1xf32>
    %328 = vector.shape_cast %327 : vector<4x1xf32> to vector<1x4x1xf32>
    %cst_162 = arith.constant dense<0.000000e+00> : vector<1xf32>
    %329 = vector.multi_reduction <add>, %328, %cst_162 [1, 2] : vector<1x4x1xf32> to vector<1xf32>
    %330 = vector.shape_cast %329 : vector<1xf32> to vector<1x1x1xf32>
    %331 = vector.extract %330[0, 0, 0] : f32 from vector<1x1x1xf32>
    %cst_163 = arith.constant 5.000000e-01 : f32
    %332 = arith.mulf %cst_163, %331 : f32
    %333 = arith.addf %332, %293 : f32
    %334 = vector.broadcast %333 : f32 to vector<1x1xf32>
    %c0_164 = arith.constant 0 : index
    %c0_165 = arith.constant 0 : index
    %335 = vector.load %arg28[%c0_164, %c0_165] : memref<1x1xf32, #tpu.memory_space<vmem>>, vector<1x1xf32>
    tpu.vector_store %arg28[%c0_164, %c0_165], %334 {strides = array<i32>} : memref<1x1xf32, #tpu.memory_space<vmem>>, vector<1x1xf32>,
    return
  }
}

</mosaic_0001>

<llo_original>
// kernel: rec_layer_forward.1
$region0: #{rec_layer_forward.1}
  #allocation0 [shape = 'u32[]', space=smem, size = 0x4, offset = 0x4, fixed_abs, tag = 'smem constant byte address 0x4 - core index']
  #allocation1 [shape = 'u32[144,128]{1,0:T(1,128)}', space=vmem, size = 0x12000, scoped, tag = 'internal scratch']
  %s0 = inlined_call_operand.smem [shape: u32[32], index: -1, kind: input, shape index: {}]
  %s1 = sld [smem:[%s0]]
  %s2 = scalar_lea.smem %s0, 1
  %s3 = sld [smem:[%s2]]
  %s4 = scalar_lea.smem %s0, 2
  %s5 = sld [smem:[%s4]]
  %s6 = scalar_lea.smem %s0, 3
  %s7 = sld [smem:[%s6]]
  %s8 = scalar_lea.smem %s0, 4
  %s9 = sld [smem:[%s8]]
  %s10 = scalar_lea.smem %s0, 5
  %s11 = sld [smem:[%s10]]
  %s12 = scalar_lea.smem %s0, 6
  %s13 = sld [smem:[%s12]]
  %s14 = scalar_lea.smem %s0, 7
  %s15 = sld [smem:[%s14]]
  %s16 = scalar_lea.smem %s0, 8
  %s17 = sld [smem:[%s16]]
  %s18 = scalar_lea.smem %s0, 9
  %s19 = sld [smem:[%s18]]
  %s20 = scalar_lea.smem %s0, 10
  %s21 = sld [smem:[%s20]]
  %s22 = scalar_lea.smem %s0, 11
  %s23 = sld [smem:[%s22]]
  %s24 = scalar_lea.smem %s0, 12
  %s25 = sld [smem:[%s24]]
  %s26 = scalar_lea.smem %s0, 13
  %s27 = sld [smem:[%s26]]
  %s28 = scalar_lea.smem %s0, 14
  %s29 = sld [smem:[%s28]]
  %s30 = scalar_lea.smem %s0, 15
  %s31 = sld [smem:[%s30]]
  %s32 = scalar_lea.smem %s0, 16
  %s33 = sld [smem:[%s32]]
  %s34 = scalar_lea.smem %s0, 17
  %s35 = sld [smem:[%s34]]
  %s36 = scalar_lea.smem %s0, 18
  %s37 = sld [smem:[%s36]]
  %s38 = scalar_lea.smem %s0, 19
  %s39 = sld [smem:[%s38]]
  %s40 = scalar_lea.smem %s0, 20
  %s41 = sld [smem:[%s40]]
  %s42 = scalar_lea.smem %s0, 21
  %s43 = sld [smem:[%s42]]
  %s44 = scalar_lea.smem %s0, 22
  %s45 = sld [smem:[%s44]]
  %s46 = scalar_lea.smem %s0, 23
  %s47 = sld [smem:[%s46]]
  %s48 = scalar_lea.smem %s0, 24
  %s49 = sld [smem:[%s48]]
  %s50 = scalar_lea.smem %s0, 25
  %s51 = sld [smem:[%s50]]
  %s52 = scalar_lea.smem %s0, 26
  %s53 = sld [smem:[%s52]]
  %s54 = scalar_lea.smem %s0, 27
  %s55 = sld [smem:[%s54]]
  %s56 = scalar_lea.smem %s0, 28
  %s57 = sld [smem:[%s56]]
  %s58 = scalar_lea.smem %s0, 29
  %s59 = sld [smem:[%s58]]
  %s60 = scalar_lea.smem %s0, 30
  %s61 = sld [smem:[%s60]]
  %s62 = scalar_lea.smem %s0, 31
  %s63 = sld [smem:[%s62]]
  %64 = xla_tuple %s57, %s59, %s61, %s63
  %s65 = sld [smem:[#allocation0]]
  $region146: #{rec_layer_forward.1} parent=0
    _
  %s67 = ssub.s32 1, %s65
  %s68 = scalar_select 0, %s67, %s65
  $region1: #{rec_layer_forward.1} parent=0
    #allocation2 [shape = 'u8[512]{0}', space=vmem, size = 0x400, scoped, tag = 'output window, operand 0, single buffered']
    #allocation3 [shape = 's32[1]{0}', space=sflag, size = 0x4, scoped, tag = 'scoped memory for rec_layer_forward.1']
    #allocation4 [shape = 'u8[2048]{0}', space=vmem, size = 0x800, scoped, tag = 'output window, operand 1, single buffered']
    #allocation5 [shape = 's32[1]{0}', space=sflag, size = 0x4, scoped, tag = 'scoped memory for rec_layer_forward.1']
    #allocation6 [shape = 'u8[2048]{0}', space=vmem, size = 0x800, scoped, tag = 'output window, operand 2, single buffered']
    #allocation7 [shape = 'u8[2048]{0}', space=vmem, size = 0x800, scoped, tag = 'output window, operand 3, single buffered']
    #allocation8 [shape = 's32[1]{0}', space=sflag, size = 0x4, scoped, tag = 'scoped memory for rec_layer_forward.1']
    %69 = vsyncpa [#allocation3], 0
    %70 = vsyncpa [#allocation5], 0
    %71 = vsyncpa [#allocation8], 0
    // Predicated region
    $region2: #{rec_layer_forward.1} parent=1 // pred_check
      _
    $region3: #{rec_layer_forward.1} parent=1 // pred_check_branch
      %73 = sbr.rel (0) target = $region5
    $region4: #{rec_layer_forward.1} parent=1 // pred_region
      _
    $region5: #{rec_layer_forward.1} parent=1 // pred_fallthru
      _
    // Predicated region
    $region6: #{rec_layer_forward.1} parent=1 // pred_check
      _
    $region7: #{rec_layer_forward.1} parent=1 // pred_check_branch
      %75 = sbr.rel (0) target = $region9
    $region8: #{rec_layer_forward.1} parent=1 // pred_region
      _
    $region9: #{rec_layer_forward.1} parent=1 // pred_fallthru
      _
    // Predicated region
    $region10: #{rec_layer_forward.1} parent=1 // pred_check
      _
    $region11: #{rec_layer_forward.1} parent=1 // pred_check_branch
      %77 = sbr.rel (0) target = $region13
    $region12: #{rec_layer_forward.1} parent=1 // pred_region
      _
    $region13: #{rec_layer_forward.1} parent=1 // pred_fallthru
      _
    // Predicated region
    $region14: #{rec_layer_forward.1} parent=1 // pred_check
      _
    $region15: #{rec_layer_forward.1} parent=1 // pred_check_branch
      %79 = sbr.rel (0) target = $region17
    $region16: #{rec_layer_forward.1} parent=1 // pred_region
      _
    $region17: #{rec_layer_forward.1} parent=1 // pred_fallthru
      _
    // Predicated region
    $region18: #{rec_layer_forward.1} parent=1 // pred_check
      _
    $region19: #{rec_layer_forward.1} parent=1 // pred_check_branch
      %81 = sbr.rel (0) target = $region21
    $region20: #{rec_layer_forward.1} parent=1 // pred_region
      _
    $region21: #{rec_layer_forward.1} parent=1 // pred_fallthru
      _
    // Predicated region
    $region22: #{rec_layer_forward.1} parent=1 // pred_check
      _
    $region23: #{rec_layer_forward.1} parent=1 // pred_check_branch
      %83 = sbr.rel (0) target = $region25
    $region24: #{rec_layer_forward.1} parent=1 // pred_region
      _
    $region25: #{rec_layer_forward.1} parent=1 // pred_fallthru
      _
    // Predicated region
    $region26: #{rec_layer_forward.1} parent=1 // pred_check
      _
    $region27: #{rec_layer_forward.1} parent=1 // pred_check_branch
      %85 = sbr.rel (0) target = $region29
    $region28: #{rec_layer_forward.1} parent=1 // pred_region
      _
    $region29: #{rec_layer_forward.1} parent=1 // pred_fallthru
      _
    // Predicated region
    $region30: #{rec_layer_forward.1} parent=1 // pred_check
      _
    $region31: #{rec_layer_forward.1} parent=1 // pred_check_branch
      %87 = sbr.rel (0) target = $region33
    $region32: #{rec_layer_forward.1} parent=1 // pred_region
      _
    $region33: #{rec_layer_forward.1} parent=1 // pred_fallthru
      _
    // Predicated region
    $region34: #{rec_layer_forward.1} parent=1 // pred_check
      _
    $region35: #{rec_layer_forward.1} parent=1 // pred_check_branch
      %89 = sbr.rel (0) target = $region37
    $region36: #{rec_layer_forward.1} parent=1 // pred_region
      _
    $region37: #{rec_layer_forward.1} parent=1 // pred_fallthru
      _
    // Predicated region
    $region38: #{rec_layer_forward.1} parent=1 // pred_check
      _
    $region39: #{rec_layer_forward.1} parent=1 // pred_check_branch
      %91 = sbr.rel (0) target = $region41
    $region40: #{rec_layer_forward.1} parent=1 // pred_region
      _
    $region41: #{rec_layer_forward.1} parent=1 // pred_fallthru
      _
    // Predicated region
    $region42: #{rec_layer_forward.1} parent=1 // pred_check
      _
    $region43: #{rec_layer_forward.1} parent=1 // pred_check_branch
      %93 = sbr.rel (0) target = $region45
    $region44: #{rec_layer_forward.1} parent=1 // pred_region
      _
    $region45: #{rec_layer_forward.1} parent=1 // pred_fallthru
      _
    // Predicated region
    $region46: #{rec_layer_forward.1} parent=1 // pred_check
      _
    $region47: #{rec_layer_forward.1} parent=1 // pred_check_branch
      %95 = sbr.rel (0) target = $region49
    $region48: #{rec_layer_forward.1} parent=1 // pred_region
      _
    $region49: #{rec_layer_forward.1} parent=1 // pred_fallthru
      _
    // Predicated region
    $region50: #{rec_layer_forward.1} parent=1 // pred_check
      _
    $region51: #{rec_layer_forward.1} parent=1 // pred_check_branch
      %97 = sbr.rel (0) target = $region53
    $region52: #{rec_layer_forward.1} parent=1 // pred_region
      _
    $region53: #{rec_layer_forward.1} parent=1 // pred_fallthru
      _
    // Predicated region
    $region54: #{rec_layer_forward.1} parent=1 // pred_check
      _
    $region55: #{rec_layer_forward.1} parent=1 // pred_check_branch
      %99 = sbr.rel (0) target = $region57
    $region56: #{rec_layer_forward.1} parent=1 // pred_region
      _
    $region57: #{rec_layer_forward.1} parent=1 // pred_fallthru
      _
    // Predicated region
    $region58: #{rec_layer_forward.1} parent=1 // pred_check
      _
    $region59: #{rec_layer_forward.1} parent=1 // pred_check_branch
      %101 = sbr.rel (0) target = $region61
    $region60: #{rec_layer_forward.1} parent=1 // pred_region
      _
    $region61: #{rec_layer_forward.1} parent=1 // pred_fallthru
      _
    // Predicated region
    $region62: #{rec_layer_forward.1} parent=1 // pred_check
      _
    $region63: #{rec_layer_forward.1} parent=1 // pred_check_branch
      %103 = sbr.rel (0) target = $region65
    $region64: #{rec_layer_forward.1} parent=1 // pred_region
      _
    $region65: #{rec_layer_forward.1} parent=1 // pred_fallthru
      _
    // Predicated region
    $region66: #{rec_layer_forward.1} parent=1 // pred_check
      _
    $region67: #{rec_layer_forward.1} parent=1 // pred_check_branch
      %105 = sbr.rel (0) target = $region69
    $region68: #{rec_layer_forward.1} parent=1 // pred_region
      _
    $region69: #{rec_layer_forward.1} parent=1 // pred_fallthru
      _
    // Predicated region
    $region70: #{rec_layer_forward.1} parent=1 // pred_check
      _
    $region71: #{rec_layer_forward.1} parent=1 // pred_check_branch
      %107 = sbr.rel (0) target = $region73
    $region72: #{rec_layer_forward.1} parent=1 // pred_region
      _
    $region73: #{rec_layer_forward.1} parent=1 // pred_fallthru
      _
    // Predicated region
    $region74: #{rec_layer_forward.1} parent=1 // pred_check
      _
    $region75: #{rec_layer_forward.1} parent=1 // pred_check_branch
      %109 = sbr.rel (0) target = $region77
    $region76: #{rec_layer_forward.1} parent=1 // pred_region
      _
    $region77: #{rec_layer_forward.1} parent=1 // pred_fallthru
      _
    // Predicated region
    $region78: #{rec_layer_forward.1} parent=1 // pred_check
      _
    $region79: #{rec_layer_forward.1} parent=1 // pred_check_branch
      %111 = sbr.rel (0) target = $region81
    $region80: #{rec_layer_forward.1} parent=1 // pred_region
      _
    $region81: #{rec_layer_forward.1} parent=1 // pred_fallthru
      _
    // Predicated region
    $region82: #{rec_layer_forward.1} parent=1 // pred_check
      _
    $region83: #{rec_layer_forward.1} parent=1 // pred_check_branch
      %113 = sbr.rel (0) target = $region85
    $region84: #{rec_layer_forward.1} parent=1 // pred_region
      _
    $region85: #{rec_layer_forward.1} parent=1 // pred_fallthru
      _
    // Predicated region
    $region86: #{rec_layer_forward.1} parent=1 // pred_check
      _
    $region87: #{rec_layer_forward.1} parent=1 // pred_check_branch
      %115 = sbr.rel (0) target = $region89
    $region88: #{rec_layer_forward.1} parent=1 // pred_region
      _
    $region89: #{rec_layer_forward.1} parent=1 // pred_fallthru
      _
    // Predicated region
    $region90: #{rec_layer_forward.1} parent=1 // pred_check
      _
    $region91: #{rec_layer_forward.1} parent=1 // pred_check_branch
      %117 = sbr.rel (0) target = $region93
    $region92: #{rec_layer_forward.1} parent=1 // pred_region
      _
    $region93: #{rec_layer_forward.1} parent=1 // pred_fallthru
      _
    // Predicated region
    $region94: #{rec_layer_forward.1} parent=1 // pred_check
      _
    $region95: #{rec_layer_forward.1} parent=1 // pred_check_branch
      %119 = sbr.rel (0) target = $region97
    $region96: #{rec_layer_forward.1} parent=1 // pred_region
      _
    $region97: #{rec_layer_forward.1} parent=1 // pred_fallthru
      _
    // Predicated region
    $region98: #{rec_layer_forward.1} parent=1 // pred_check
      _
    $region99: #{rec_layer_forward.1} parent=1 // pred_check_branch
      %121 = sbr.rel (0) target = $region101
    $region100: #{rec_layer_forward.1} parent=1 // pred_region
      _
    $region101: #{rec_layer_forward.1} parent=1 // pred_fallthru
      _
    // Predicated region
    $region102: #{rec_layer_forward.1} parent=1 // pred_check
      _
    $region103: #{rec_layer_forward.1} parent=1 // pred_check_branch
      %123 = sbr.rel (0) target = $region105
    $region104: #{rec_layer_forward.1} parent=1 // pred_region
      _
    $region105: #{rec_layer_forward.1} parent=1 // pred_fallthru
      _
    // Predicated region
    $region106: #{rec_layer_forward.1} parent=1 // pred_check
      _
    $region107: #{rec_layer_forward.1} parent=1 // pred_check_branch
      %125 = sbr.rel (0) target = $region109
    $region108: #{rec_layer_forward.1} parent=1 // pred_region
      _
    $region109: #{rec_layer_forward.1} parent=1 // pred_fallthru
      _
    // Predicated region
    $region110: #{rec_layer_forward.1} parent=1 // pred_check
      _
    $region111: #{rec_layer_forward.1} parent=1 // pred_check_branch
      %127 = sbr.rel (0) target = $region113
    $region112: #{rec_layer_forward.1} parent=1 // pred_region
      _
    $region113: #{rec_layer_forward.1} parent=1 // pred_fallthru
      _
    %v128 = vld [vmem:[%s1] sm:$0xff]
    %v129 = vld [vmem:[%s1 + $0x8] sm:$0xff]
    %v130 = vld [vmem:[%s1 + $0x10] sm:$0xff]
    %v131 = vld [vmem:[%s1 + $0x18] sm:$0xff]
    %v132 = vld [vmem:[%s1 + $0x20] sm:$0xff]
    %v133 = vld [vmem:[%s1 + $0x28] sm:$0xff]
    %v134 = vld [vmem:[%s1 + $0x30] sm:$0xff]
    %v135 = vld [vmem:[%s1 + $0x38] sm:$0xff]
    %v136 = vld [vmem:[%s3] sm:$0xff]
    %v137 = vcvt.f32.s32.to.zero.pseudo %v136
    %vm138 = vcmask 64512
    %v139 = vsel %vm138, %v137, 0
    %v140 = vand.u32 %v139, 65535
    %v141 = vshrl.u32 %v139, 16
    %v142 = vcvt.s32.f32 %v140
    %v143 = vcvt.s32.f32 %v141
    %144 = vadd.xlane.f32.xlu0 %v142
    %v145 = vpop.xlane.xlu0 %144
    %146 = vadd.xlane.f32.xlu0 %v143
    %v147 = vpop.xlane.xlu0 %146
    %v148 = vcvt.f32.s32 %v145
    %v149 = vcvt.f32.s32 %v147
    %v150 = vshll.u32 %v149, 16
    %v151 = vadd.s32 %v150, %v148
    %v152 = vlaneseq
    %v153 = vand.u32 %v152, 127
    %v154 = vsub.s32 %v151, 1
    %vm155 = vcmp.eq.s32.totalorder %v153, %v154
    %v156 = vsel %vm155, 1, 0
    %v157 = vcvt.s32.f32 %v156
    %v158 = vlaneseq
    %v159 = vshrl.u32 %v158, 7
    %v160 = vsub.s32 0, %v159
    %v161 = vrot.slane %v157, %v160
    %163 = vbcast.lane.b32.xlu0 %v161, 256
    %v164 = vpop.permute.xlu0 %163
    %v165 = vlaneseq
    %v166 = vshrl.u32 %v165, 7
    %v167 = vsub.s32 1, %v166
    %v168 = vrot.slane %v157, %v167
    %170 = vbcast.lane.b32.xlu0 %v168, 256
    %v171 = vpop.permute.xlu0 %170
    %v172 = vlaneseq
    %v173 = vshrl.u32 %v172, 7
    %v174 = vsub.s32 2, %v173
    %v175 = vrot.slane %v157, %v174
    %177 = vbcast.lane.b32.xlu0 %v175, 256
    %v178 = vpop.permute.xlu0 %177
    %v179 = vlaneseq
    %v180 = vshrl.u32 %v179, 7
    %v181 = vsub.s32 3, %v180
    %v182 = vrot.slane %v157, %v181
    %184 = vbcast.lane.b32.xlu0 %v182, 256
    %v185 = vpop.permute.xlu0 %184
    %v186 = vlaneseq
    %v187 = vshrl.u32 %v186, 7
    %v188 = vsub.s32 4, %v187
    %v189 = vrot.slane %v157, %v188
    %191 = vbcast.lane.b32.xlu0 %v189, 256
    %v192 = vpop.permute.xlu0 %191
    %v193 = vlaneseq
    %v194 = vshrl.u32 %v193, 7
    %v195 = vsub.s32 5, %v194
    %v196 = vrot.slane %v157, %v195
    %198 = vbcast.lane.b32.xlu0 %v196, 256
    %v199 = vpop.permute.xlu0 %198
    %v200 = vlaneseq
    %v201 = vshrl.u32 %v200, 7
    %v202 = vsub.s32 6, %v201
    %v203 = vrot.slane %v157, %v202
    %205 = vbcast.lane.b32.xlu0 %v203, 256
    %v206 = vpop.permute.xlu0 %205
    %v207 = vlaneseq
    %v208 = vshrl.u32 %v207, 7
    %v209 = vsub.s32 7, %v208
    %v210 = vrot.slane %v157, %v209
    %212 = vbcast.lane.b32.xlu0 %v210, 256
    %v213 = vpop.permute.xlu0 %212
    %v214 = vmul.f32 %v128, %v164
    %v215 = vmul.f32 %v129, %v171
    %v216 = vmul.f32 %v130, %v178
    %v217 = vmul.f32 %v131, %v185
    %v218 = vmul.f32 %v132, %v192
    %v219 = vmul.f32 %v133, %v199
    %v220 = vmul.f32 %v134, %v206
    %v221 = vmul.f32 %v135, %v213
    %vm222 = vcmask 785408
    %v223 = vsel %vm222, %v214, 0.0
    %v224 = vrot.slane %v223, 4
    %v225 = vadd.f32 %v223, %v224
    %v226 = vrot.slane %v225, 2
    %v227 = vadd.f32 %v225, %v226
    %v228 = vrot.slane %v227, 1
    %v229 = vadd.f32 %v227, %v228
    %v230 = vsel %vm222, %v215, 0.0
    %v231 = vrot.slane %v230, 4
    %v232 = vadd.f32 %v230, %v231
    %v233 = vrot.slane %v232, 2
    %v234 = vadd.f32 %v232, %v233
    %v235 = vrot.slane %v234, 1
    %v236 = vadd.f32 %v234, %v235
    %v237 = vsel %vm222, %v216, 0.0
    %v238 = vrot.slane %v237, 4
    %v239 = vadd.f32 %v237, %v238
    %v240 = vrot.slane %v239, 2
    %v241 = vadd.f32 %v239, %v240
    %v242 = vrot.slane %v241, 1
    %v243 = vadd.f32 %v241, %v242
    %v244 = vsel %vm222, %v217, 0.0
    %v245 = vrot.slane %v244, 4
    %v246 = vadd.f32 %v244, %v245
    %v247 = vrot.slane %v246, 2
    %v248 = vadd.f32 %v246, %v247
    %v249 = vrot.slane %v248, 1
    %v250 = vadd.f32 %v248, %v249
    %v251 = vsel %vm222, %v218, 0.0
    %v252 = vrot.slane %v251, 4
    %v253 = vadd.f32 %v251, %v252
    %v254 = vrot.slane %v253, 2
    %v255 = vadd.f32 %v253, %v254
    %v256 = vrot.slane %v255, 1
    %v257 = vadd.f32 %v255, %v256
    %v258 = vsel %vm222, %v219, 0.0
    %v259 = vrot.slane %v258, 4
    %v260 = vadd.f32 %v258, %v259
    %v261 = vrot.slane %v260, 2
    %v262 = vadd.f32 %v260, %v261
    %v263 = vrot.slane %v262, 1
    %v264 = vadd.f32 %v262, %v263
    %v265 = vsel %vm222, %v220, 0.0
    %v266 = vrot.slane %v265, 4
    %v267 = vadd.f32 %v265, %v266
    %v268 = vrot.slane %v267, 2
    %v269 = vadd.f32 %v267, %v268
    %v270 = vrot.slane %v269, 1
    %v271 = vadd.f32 %v269, %v270
    %v272 = vsel %vm222, %v221, 0.0
    %v273 = vrot.slane %v272, 4
    %v274 = vadd.f32 %v272, %v273
    %v275 = vrot.slane %v274, 2
    %v276 = vadd.f32 %v274, %v275
    %v277 = vrot.slane %v276, 1
    %v278 = vadd.f32 %v276, %v277
    %v279 = vld [vmem:[%s23] sm:$0x1]
    %v280 = vld [vmem:[%s9] sm:$0xff]
    %v281 = vld [vmem:[%s9 + $0x8] sm:$0xff]
    %v282 = vld [vmem:[%s9 + $0x10] sm:$0xff]
    %v283 = vld [vmem:[%s9 + $0x18] sm:$0xff]
    %v284 = vld [vmem:[%s9 + $0x20] sm:$0xff]
    %v285 = vld [vmem:[%s9 + $0x28] sm:$0xff]
    %v286 = vld [vmem:[%s9 + $0x30] sm:$0xff]
    %v287 = vld [vmem:[%s9 + $0x38] sm:$0xff]
    %v288 = vld [vmem:[%s9 + $0x40] sm:$0xff]
    %v289 = vld [vmem:[%s9 + $0x48] sm:$0xff]
    %v290 = vld [vmem:[%s9 + $0x50] sm:$0xff]
    %v291 = vld [vmem:[%s9 + $0x58] sm:$0xff]
    %v292 = vld [vmem:[%s11] sm:$0x1]
    %v294 = vlaneseq
    %v295 = vshrl.u32 %v294, 7
    %v296 = vsub.s32 0, %v295
    %v297 = vrot.slane %v292, %v296
    %vm307 = vcmask 1041409
    %v308 = vsel %vm307, %v236, %v229
    %vm309 = vcmask 1042434
    %v310 = vsel %vm309, %v243, %v308
    %vm311 = vcmask 1043459
    %v312 = vsel %vm311, %v250, %v310
    %vm313 = vcmask 1044484
    %v314 = vsel %vm313, %v257, %v312
    %vm315 = vcmask 1045509
    %v316 = vsel %vm315, %v264, %v314
    %vm317 = vcmask 1046534
    %v318 = vsel %vm317, %v271, %v316
    %vm319 = vcmask 1047559
    %v320 = vsel %vm319, %v278, %v318
    %v321 = vsel %vm222, %v320, 0
    %323 = vmatprep.subr.mxu0 0.0
    %324 = vmatpush1.msra.mxu0 0.0
    %325 = vmatprep.subr.mxu0 0.0
    %326 = vmatpush1.msra.mxu0 0.0
    %327 = vmatprep.subr.mxu0 0.0
    %328 = vmatpush1.msra.mxu0 0.0
    %329 = vmatprep.subr.mxu0 0.0
    %330 = vmatpush1.msra.mxu0 0.0
    %331 = vmatprep.subr.mxu0 0.0
    %332 = vmatpush1.msra.mxu0 %v291
    %333 = vmatprep.subr.mxu0 0.0
    %334 = vmatpush1.msra.mxu0 %v290
    %335 = vmatprep.subr.mxu0 0.0
    %336 = vmatpush1.msra.mxu0 %v289
    %337 = vmatprep.subr.mxu0 0.0
    %338 = vmatpush1.msra.mxu0 %v288
    %339 = vmatprep.subr.mxu0 0.0
    %340 = vmatpush1.msra.mxu0 %v287
    %341 = vmatprep.subr.mxu0 0.0
    %342 = vmatpush1.msra.mxu0 %v286
    %343 = vmatprep.subr.mxu0 0.0
    %344 = vmatpush1.msra.mxu0 %v285
    %345 = vmatprep.subr.mxu0 0.0
    %346 = vmatpush1.msra.mxu0 %v284
    %347 = vmatprep.subr.mxu0 0.0
    %348 = vmatpush1.msra.mxu0 %v283
    %349 = vmatprep.subr.mxu0 0.0
    %350 = vmatpush1.msra.mxu0 %v282
    %351 = vmatprep.subr.mxu0 0.0
    %352 = vmatpush1.msra.mxu0 %v281
    %353 = vmatprep.subr.mxu0 0.0
    %354 = vmatpush1.msra.mxu0 %v280
    %355 = vmatprep.subr.mxu0 0.0
    %356 = vmatpush2.msra.mxu0 0.0
    %357 = vmatprep.subr.mxu0 0.0
    %358 = vmatpush2.msra.mxu0 0.0
    %359 = vmatprep.subr.mxu0 0.0
    %360 = vmatpush2.msra.mxu0 0.0
    %361 = vmatprep.subr.mxu0 0.0
    %362 = vmatpush2.msra.mxu0 0.0
    %363 = vmatprep.subr.mxu0 0.0
    %364 = vmatpush2.msra.mxu0 0.0
    %365 = vmatprep.subr.mxu0 0.0
    %366 = vmatpush2.msra.mxu0 0.0
    %367 = vmatprep.subr.mxu0 0.0
    %368 = vmatpush2.msra.mxu0 0.0
    %369 = vmatprep.subr.mxu0 0.0
    %370 = vmatpush2.msra.mxu0 0.0
    %371 = vmatprep.subr.mxu0 0.0
    %372 = vmatpush2.msra.mxu0 0.0
    %373 = vmatprep.subr.mxu0 0.0
    %374 = vmatpush2.msra.mxu0 0.0
    %375 = vmatprep.subr.mxu0 0.0
    %376 = vmatpush2.msra.mxu0 0.0
    %377 = vmatprep.subr.mxu0 0.0
    %378 = vmatpush2.msra.mxu0 0.0
    %379 = vmatprep.subr.mxu0 0.0
    %380 = vmatpush2.msra.mxu0 0.0
    %381 = vmatprep.subr.mxu0 0.0
    %382 = vmatpush2.msra.mxu0 0.0
    %383 = vmatprep.subr.mxu0 0.0
    %384 = vmatpush2.msra.mxu0 0.0
    %385 = vmatprep.subr.mxu0 0.0
    %386 = vmatpush2.msra.mxu0 0.0
    %387 = vmatprep.mubr.f32.mxu0 0.0
    %388 = vmatmul.mubr.f32.gmra.mxu0 %v321
    %v389 = vpop.f32.mrf.mxu0
    %v390 = vadd.f32 %v297, %v389
    %v391 = vpop.f32.mrf.mxu0
    %392 = vdwg.mxu0
    %v393 = vld [vmem:[%s13] sm:$0xff]
    %v394 = vld [vmem:[%s13 + $0x8] sm:$0xff]
    %v395 = vld [vmem:[%s13 + $0x10] sm:$0xff]
    %v396 = vld [vmem:[%s13 + $0x18] sm:$0xff]
    %v397 = vld [vmem:[%s13 + $0x20] sm:$0xff]
    %v398 = vld [vmem:[%s13 + $0x28] sm:$0xff]
    %v399 = vld [vmem:[%s13 + $0x30] sm:$0xff]
    %v400 = vld [vmem:[%s13 + $0x38] sm:$0xff]
    %v401 = vld [vmem:[%s13 + $0x40] sm:$0xff]
    %v402 = vld [vmem:[%s13 + $0x48] sm:$0xff]
    %v403 = vld [vmem:[%s13 + $0x50] sm:$0xff]
    %v404 = vld [vmem:[%s13 + $0x58] sm:$0xff]
    %v405 = vld [vmem:[%s15] sm:$0x1]
    %v407 = vlaneseq
    %v408 = vshrl.u32 %v407, 7
    %v409 = vsub.s32 0, %v408
    %v410 = vrot.slane %v405, %v409
    %v413 = vsel %vm222, %v128, 0
    %v416 = vsel %vm222, %v129, 0
    %v419 = vsel %vm222, %v130, 0
    %v422 = vsel %vm222, %v131, 0
    %v425 = vsel %vm222, %v132, 0
    %v428 = vsel %vm222, %v133, 0
    %v431 = vsel %vm222, %v134, 0
    %v434 = vsel %vm222, %v135, 0
    %436 = vmatprep.subr.mxu0 0.0
    %437 = vmatpush1.msra.mxu0 0.0
    %438 = vmatprep.subr.mxu0 0.0
    %439 = vmatpush1.msra.mxu0 0.0
    %440 = vmatprep.subr.mxu0 0.0
    %441 = vmatpush1.msra.mxu0 0.0
    %442 = vmatprep.subr.mxu0 0.0
    %443 = vmatpush1.msra.mxu0 0.0
    %444 = vmatprep.subr.mxu0 0.0
    %445 = vmatpush1.msra.mxu0 %v404
    %446 = vmatprep.subr.mxu0 0.0
    %447 = vmatpush1.msra.mxu0 %v403
    %448 = vmatprep.subr.mxu0 0.0
    %449 = vmatpush1.msra.mxu0 %v402
    %450 = vmatprep.subr.mxu0 0.0
    %451 = vmatpush1.msra.mxu0 %v401
    %452 = vmatprep.subr.mxu0 0.0
    %453 = vmatpush1.msra.mxu0 %v400
    %454 = vmatprep.subr.mxu0 0.0
    %455 = vmatpush1.msra.mxu0 %v399
    %456 = vmatprep.subr.mxu0 0.0
    %457 = vmatpush1.msra.mxu0 %v398
    %458 = vmatprep.subr.mxu0 0.0
    %459 = vmatpush1.msra.mxu0 %v397
    %460 = vmatprep.subr.mxu0 0.0
    %461 = vmatpush1.msra.mxu0 %v396
    %462 = vmatprep.subr.mxu0 0.0
    %463 = vmatpush1.msra.mxu0 %v395
    %464 = vmatprep.subr.mxu0 0.0
    %465 = vmatpush1.msra.mxu0 %v394
    %466 = vmatprep.subr.mxu0 0.0
    %467 = vmatpush1.msra.mxu0 %v393
    %468 = vmatprep.subr.mxu0 0.0
    %469 = vmatpush2.msra.mxu0 0.0
    %470 = vmatprep.subr.mxu0 0.0
    %471 = vmatpush2.msra.mxu0 0.0
    %472 = vmatprep.subr.mxu0 0.0
    %473 = vmatpush2.msra.mxu0 0.0
    %474 = vmatprep.subr.mxu0 0.0
    %475 = vmatpush2.msra.mxu0 0.0
    %476 = vmatprep.subr.mxu0 0.0
    %477 = vmatpush2.msra.mxu0 0.0
    %478 = vmatprep.subr.mxu0 0.0
    %479 = vmatpush2.msra.mxu0 0.0
    %480 = vmatprep.subr.mxu0 0.0
    %481 = vmatpush2.msra.mxu0 0.0
    %482 = vmatprep.subr.mxu0 0.0
    %483 = vmatpush2.msra.mxu0 0.0
    %484 = vmatprep.subr.mxu0 0.0
    %485 = vmatpush2.msra.mxu0 0.0
    %486 = vmatprep.subr.mxu0 0.0
    %487 = vmatpush2.msra.mxu0 0.0
    %488 = vmatprep.subr.mxu0 0.0
    %489 = vmatpush2.msra.mxu0 0.0
    %490 = vmatprep.subr.mxu0 0.0
    %491 = vmatpush2.msra.mxu0 0.0
    %492 = vmatprep.subr.mxu0 0.0
    %493 = vmatpush2.msra.mxu0 0.0
    %494 = vmatprep.subr.mxu0 0.0
    %495 = vmatpush2.msra.mxu0 0.0
    %496 = vmatprep.subr.mxu0 0.0
    %497 = vmatpush2.msra.mxu0 0.0
    %498 = vmatprep.subr.mxu0 0.0
    %499 = vmatpush2.msra.mxu0 0.0
    %500 = vmatprep.mubr.f32.mxu0 0.0
    %501 = vmatmul.mubr.f32.gmra.mxu0 %v413
    %v502 = vpop.f32.mrf.mxu0
    %v503 = vadd.f32 %v410, %v502
    %v504 = vpop.f32.mrf.mxu0
    %505 = vmatprep.mubr.f32.mxu0 0.0
    %506 = vmatmul.mubr.f32.gmra.mxu0 %v416
    %v507 = vpop.f32.mrf.mxu0
    %v508 = vadd.f32 %v410, %v507
    %v509 = vpop.f32.mrf.mxu0
    %510 = vmatprep.mubr.f32.mxu0 0.0
    %511 = vmatmul.mubr.f32.gmra.mxu0 %v419
    %v512 = vpop.f32.mrf.mxu0
    %v513 = vadd.f32 %v410, %v512
    %v514 = vpop.f32.mrf.mxu0
    %515 = vmatprep.mubr.f32.mxu0 0.0
    %516 = vmatmul.mubr.f32.gmra.mxu0 %v422
    %v517 = vpop.f32.mrf.mxu0
    %v518 = vadd.f32 %v410, %v517
    %v519 = vpop.f32.mrf.mxu0
    %520 = vmatprep.mubr.f32.mxu0 0.0
    %521 = vmatmul.mubr.f32.gmra.mxu0 %v425
    %v522 = vpop.f32.mrf.mxu0
    %v523 = vadd.f32 %v410, %v522
    %v524 = vpop.f32.mrf.mxu0
    %525 = vmatprep.mubr.f32.mxu0 0.0
    %526 = vmatmul.mubr.f32.gmra.mxu0 %v428
    %v527 = vpop.f32.mrf.mxu0
    %v528 = vadd.f32 %v410, %v527
    %v529 = vpop.f32.mrf.mxu0
    %530 = vmatprep.mubr.f32.mxu0 0.0
    %531 = vmatmul.mubr.f32.gmra.mxu0 %v431
    %v532 = vpop.f32.mrf.mxu0
    %v533 = vadd.f32 %v410, %v532
    %v534 = vpop.f32.mrf.mxu0
    %535 = vmatprep.mubr.f32.mxu0 0.0
    %536 = vmatmul.mubr.f32.gmra.mxu0 %v434
    %v537 = vpop.f32.mrf.mxu0
    %v538 = vadd.f32 %v410, %v537
    %v539 = vpop.f32.mrf.mxu0
    %540 = vdwg.mxu0
    %v541 = vld [vmem:[%s17] sm:$0xff]
    %v542 = vld [vmem:[%s17 + $0x8] sm:$0xff]
    %v543 = vld [vmem:[%s17 + $0x10] sm:$0xff]
    %v544 = vld [vmem:[%s17 + $0x18] sm:$0xff]
    %v545 = vld [vmem:[%s17 + $0x20] sm:$0xff]
    %v546 = vld [vmem:[%s17 + $0x28] sm:$0xff]
    %v547 = vld [vmem:[%s17 + $0x30] sm:$0xff]
    %v548 = vld [vmem:[%s17 + $0x38] sm:$0xff]
    %v549 = vld [vmem:[%s17 + $0x40] sm:$0xff]
    %v550 = vld [vmem:[%s17 + $0x48] sm:$0xff]
    %v551 = vld [vmem:[%s17 + $0x50] sm:$0xff]
    %v552 = vld [vmem:[%s17 + $0x58] sm:$0xff]
    %v553 = vld [vmem:[%s19] sm:$0x1]
    %v555 = vlaneseq
    %v556 = vshrl.u32 %v555, 7
    %v557 = vsub.s32 0, %v556
    %v558 = vrot.slane %v553, %v557
    %560 = vmatprep.subr.mxu0 0.0
    %561 = vmatpush1.msra.mxu0 0.0
    %562 = vmatprep.subr.mxu0 0.0
    %563 = vmatpush1.msra.mxu0 0.0
    %564 = vmatprep.subr.mxu0 0.0
    %565 = vmatpush1.msra.mxu0 0.0
    %566 = vmatprep.subr.mxu0 0.0
    %567 = vmatpush1.msra.mxu0 0.0
    %568 = vmatprep.subr.mxu0 0.0
    %569 = vmatpush1.msra.mxu0 %v552
    %570 = vmatprep.subr.mxu0 0.0
    %571 = vmatpush1.msra.mxu0 %v551
    %572 = vmatprep.subr.mxu0 0.0
    %573 = vmatpush1.msra.mxu0 %v550
    %574 = vmatprep.subr.mxu0 0.0
    %575 = vmatpush1.msra.mxu0 %v549
    %576 = vmatprep.subr.mxu0 0.0
    %577 = vmatpush1.msra.mxu0 %v548
    %578 = vmatprep.subr.mxu0 0.0
    %579 = vmatpush1.msra.mxu0 %v547
    %580 = vmatprep.subr.mxu0 0.0
    %581 = vmatpush1.msra.mxu0 %v546
    %582 = vmatprep.subr.mxu0 0.0
    %583 = vmatpush1.msra.mxu0 %v545
    %584 = vmatprep.subr.mxu0 0.0
    %585 = vmatpush1.msra.mxu0 %v544
    %586 = vmatprep.subr.mxu0 0.0
    %587 = vmatpush1.msra.mxu0 %v543
    %588 = vmatprep.subr.mxu0 0.0
    %589 = vmatpush1.msra.mxu0 %v542
    %590 = vmatprep.subr.mxu0 0.0
    %591 = vmatpush1.msra.mxu0 %v541
    %592 = vmatprep.subr.mxu0 0.0
    %593 = vmatpush2.msra.mxu0 0.0
    %594 = vmatprep.subr.mxu0 0.0
    %595 = vmatpush2.msra.mxu0 0.0
    %596 = vmatprep.subr.mxu0 0.0
    %597 = vmatpush2.msra.mxu0 0.0
    %598 = vmatprep.subr.mxu0 0.0
    %599 = vmatpush2.msra.mxu0 0.0
    %600 = vmatprep.subr.mxu0 0.0
    %601 = vmatpush2.msra.mxu0 0.0
    %602 = vmatprep.subr.mxu0 0.0
    %603 = vmatpush2.msra.mxu0 0.0
    %604 = vmatprep.subr.mxu0 0.0
    %605 = vmatpush2.msra.mxu0 0.0
    %606 = vmatprep.subr.mxu0 0.0
    %607 = vmatpush2.msra.mxu0 0.0
    %608 = vmatprep.subr.mxu0 0.0
    %609 = vmatpush2.msra.mxu0 0.0
    %610 = vmatprep.subr.mxu0 0.0
    %611 = vmatpush2.msra.mxu0 0.0
    %612 = vmatprep.subr.mxu0 0.0
    %613 = vmatpush2.msra.mxu0 0.0
    %614 = vmatprep.subr.mxu0 0.0
    %615 = vmatpush2.msra.mxu0 0.0
    %616 = vmatprep.subr.mxu0 0.0
    %617 = vmatpush2.msra.mxu0 0.0
    %618 = vmatprep.subr.mxu0 0.0
    %619 = vmatpush2.msra.mxu0 0.0
    %620 = vmatprep.subr.mxu0 0.0
    %621 = vmatpush2.msra.mxu0 0.0
    %622 = vmatprep.subr.mxu0 0.0
    %623 = vmatpush2.msra.mxu0 0.0
    %624 = vmatprep.mubr.f32.mxu0 0.0
    %625 = vmatmul.mubr.f32.gmra.mxu0 %v413
    %v626 = vpop.f32.mrf.mxu0
    %v627 = vadd.f32 %v558, %v626
    %v628 = vpop.f32.mrf.mxu0
    %629 = vmatprep.mubr.f32.mxu0 0.0
    %630 = vmatmul.mubr.f32.gmra.mxu0 %v416
    %v631 = vpop.f32.mrf.mxu0
    %v632 = vadd.f32 %v558, %v631
    %v633 = vpop.f32.mrf.mxu0
    %634 = vmatprep.mubr.f32.mxu0 0.0
    %635 = vmatmul.mubr.f32.gmra.mxu0 %v419
    %v636 = vpop.f32.mrf.mxu0
    %v637 = vadd.f32 %v558, %v636
    %v638 = vpop.f32.mrf.mxu0
    %639 = vmatprep.mubr.f32.mxu0 0.0
    %640 = vmatmul.mubr.f32.gmra.mxu0 %v422
    %v641 = vpop.f32.mrf.mxu0
    %v642 = vadd.f32 %v558, %v641
    %v643 = vpop.f32.mrf.mxu0
    %644 = vmatprep.mubr.f32.mxu0 0.0
    %645 = vmatmul.mubr.f32.gmra.mxu0 %v425
    %v646 = vpop.f32.mrf.mxu0
    %v647 = vadd.f32 %v558, %v646
    %v648 = vpop.f32.mrf.mxu0
    %649 = vmatprep.mubr.f32.mxu0 0.0
    %650 = vmatmul.mubr.f32.gmra.mxu0 %v428
    %v651 = vpop.f32.mrf.mxu0
    %v652 = vadd.f32 %v558, %v651
    %v653 = vpop.f32.mrf.mxu0
    %654 = vmatprep.mubr.f32.mxu0 0.0
    %655 = vmatmul.mubr.f32.gmra.mxu0 %v431
    %v656 = vpop.f32.mrf.mxu0
    %v657 = vadd.f32 %v558, %v656
    %v658 = vpop.f32.mrf.mxu0
    %659 = vmatprep.mubr.f32.mxu0 0.0
    %660 = vmatmul.mubr.f32.gmra.mxu0 %v434
    %v661 = vpop.f32.mrf.mxu0
    %v662 = vadd.f32 %v558, %v661
    %v663 = vpop.f32.mrf.mxu0
    %664 = vdwg.mxu0
    %v665 = vmul.f32 %v390, 0.14433756
    %v667 = vcombine.high %v665, %v665
    %v669 = vunpack.c.l.s4 1966171168
    %v670 = vunpack.c.0.s8 %v669
    %v671 = vlaneseq
    %v672 = vshrl.u32 %v671, 7
    %v673 = vsub.s32 %v670, %v672
    %v674 = vrot.slane %v665, %v673
    %v676 = vunpack.c.l.s4 1966171168
    %v677 = vunpack.c.0.s8 %v676
    %v678 = vlaneseq
    %v679 = vshrl.u32 %v678, 7
    %v680 = vsub.s32 %v677, %v679
    %v681 = vrot.slane %v667, %v680
    %v682 = vcombine.high %v674, %v674
    %v683 = vcombine.high %v681, %v681
    %v685 = vunpack.c.l.s4 1966171168
    %v686 = vunpack.c.0.s8 %v685
    %v687 = vlaneseq
    %v688 = vshrl.u32 %v687, 7
    %v689 = vsub.s32 %v686, %v688
    %v690 = vrot.slane %v674, %v689
    %v692 = vunpack.c.l.s4 1966171168
    %v693 = vunpack.c.0.s8 %v692
    %v694 = vlaneseq
    %v695 = vshrl.u32 %v694, 7
    %v696 = vsub.s32 %v693, %v695
    %v697 = vrot.slane %v681, %v696
    %v699 = vunpack.c.l.s4 1966171168
    %v700 = vunpack.c.0.s8 %v699
    %v701 = vlaneseq
    %v702 = vshrl.u32 %v701, 7
    %v703 = vsub.s32 %v700, %v702
    %v704 = vrot.slane %v682, %v703
    %v706 = vunpack.c.l.s4 1966171168
    %v707 = vunpack.c.0.s8 %v706
    %v708 = vlaneseq
    %v709 = vshrl.u32 %v708, 7
    %v710 = vsub.s32 %v707, %v709
    %v711 = vrot.slane %v683, %v710
    %v712 = vcombine.high %v690, %v690
    %v713 = vcombine.high %v697, %v697
    %v714 = vcombine.high %v704, %v704
    %v715 = vcombine.high %v711, %v711
    %v716 = vlaneseq
    %v717 = vshrl.u32 %v716, 7
    %v718 = vsub.s32 0, %v717
    %v719 = vrot.slane %v690, %v718
    %v720 = vlaneseq
    %v721 = vshrl.u32 %v720, 7
    %v722 = vsub.s32 0, %v721
    %v723 = vrot.slane %v704, %v722
    %v724 = vlaneseq
    %v725 = vshrl.u32 %v724, 7
    %v726 = vsub.s32 0, %v725
    %v727 = vrot.slane %v712, %v726
    %v728 = vlaneseq
    %v729 = vshrl.u32 %v728, 7
    %v730 = vsub.s32 0, %v729
    %v731 = vrot.slane %v714, %v730
    %v732 = vlaneseq
    %v733 = vshrl.u32 %v732, 7
    %v734 = vsub.s32 0, %v733
    %v735 = vrot.slane %v697, %v734
    %v736 = vlaneseq
    %v737 = vshrl.u32 %v736, 7
    %v738 = vsub.s32 0, %v737
    %v739 = vrot.slane %v711, %v738
    %v740 = vlaneseq
    %v741 = vshrl.u32 %v740, 7
    %v742 = vsub.s32 0, %v741
    %v743 = vrot.slane %v713, %v742
    %v744 = vlaneseq
    %v745 = vshrl.u32 %v744, 7
    %v746 = vsub.s32 0, %v745
    %v747 = vrot.slane %v715, %v746
    %v756 = vmul.f32 %v719, %v503
    %v757 = vmul.f32 %v723, %v508
    %v758 = vmul.f32 %v727, %v513
    %v759 = vmul.f32 %v731, %v518
    %v760 = vmul.f32 %v735, %v523
    %v761 = vmul.f32 %v739, %v528
    %v762 = vmul.f32 %v743, %v533
    %v763 = vmul.f32 %v747, %v538
    %vm764 = vcmask 392192
    %v765 = vsel %vm764, %v756, 0.0
    %766 = vadd.xlane.f32.xlu0 %v765
    %v767 = vpop.xlane.xlu0 %766
    %v768 = vsel %vm764, %v757, 0.0
    %769 = vadd.xlane.f32.xlu0 %v768
    %v770 = vpop.xlane.xlu0 %769
    %v771 = vsel %vm764, %v758, 0.0
    %772 = vadd.xlane.f32.xlu0 %v771
    %v773 = vpop.xlane.xlu0 %772
    %v774 = vsel %vm764, %v759, 0.0
    %775 = vadd.xlane.f32.xlu0 %v774
    %v776 = vpop.xlane.xlu0 %775
    %v777 = vsel %vm764, %v760, 0.0
    %778 = vadd.xlane.f32.xlu0 %v777
    %v779 = vpop.xlane.xlu0 %778
    %v780 = vsel %vm764, %v761, 0.0
    %781 = vadd.xlane.f32.xlu0 %v780
    %v782 = vpop.xlane.xlu0 %781
    %v783 = vsel %vm764, %v762, 0.0
    %784 = vadd.xlane.f32.xlu0 %v783
    %v785 = vpop.xlane.xlu0 %784
    %v786 = vsel %vm764, %v763, 0.0
    %787 = vadd.xlane.f32.xlu0 %v786
    %v788 = vpop.xlane.xlu0 %787
    %vm789 = vcmp.gt.f32.partialorder %v136, 0.5
    %v798 = vlaneseq
    %v799 = vshrl.u32 %v798, 7
    %v800 = vsub.s32 %v153, %v799
    %v801 = vrot.slane %v767, %v800
    %v802 = vlaneseq
    %v803 = vshrl.u32 %v802, 7
    %v804 = vsub.s32 %v153, %v803
    %v805 = vrot.slane %v770, %v804
    %v806 = vlaneseq
    %v807 = vshrl.u32 %v806, 7
    %v808 = vsub.s32 %v153, %v807
    %v809 = vrot.slane %v773, %v808
    %v810 = vlaneseq
    %v811 = vshrl.u32 %v810, 7
    %v812 = vsub.s32 %v153, %v811
    %v813 = vrot.slane %v776, %v812
    %v814 = vlaneseq
    %v815 = vshrl.u32 %v814, 7
    %v816 = vsub.s32 %v153, %v815
    %v817 = vrot.slane %v779, %v816
    %v818 = vlaneseq
    %v819 = vshrl.u32 %v818, 7
    %v820 = vsub.s32 %v153, %v819
    %v821 = vrot.slane %v782, %v820
    %v822 = vlaneseq
    %v823 = vshrl.u32 %v822, 7
    %v824 = vsub.s32 %v153, %v823
    %v825 = vrot.slane %v785, %v824
    %v826 = vlaneseq
    %v827 = vshrl.u32 %v826, 7
    %v828 = vsub.s32 %v153, %v827
    %v829 = vrot.slane %v788, %v828
    %v830 = vsel %vm307, %v805, %v801
    %v831 = vsel %vm309, %v809, %v830
    %v832 = vsel %vm311, %v813, %v831
    %v833 = vsel %vm313, %v817, %v832
    %v834 = vsel %vm315, %v821, %v833
    %v835 = vsel %vm317, %v825, %v834
    %v836 = vsel %vm319, %v829, %v835
    %v838 = vsel %vm789, %v836, -1e+30
    %v839 = vsel %vm138, %v838, -inf
    %840 = vmax.xlane.f32.xlu0 %v839
    %v841 = vpop.xlane.xlu0 %840
    %v842 = vsub.f32 %v838, %v841
    %v843 = vmul.f32 %v842, 1.442695
    %v844 = vpow.pop %v843
    %v845 = vsel %vm138, %v844, 0.0
    %846 = vadd.xlane.f32.xlu0 %v845
    %v847 = vpop.xlane.xlu0 %846
    %v848 = vrcp.pop %v847
    %v849 = vmul.f32 %v844, %v848
    %v850 = vlaneseq
    %v851 = vshrl.u32 %v850, 7
    %v852 = vsub.s32 0, %v851
    %v853 = vrot.slane %v849, %v852
    %855 = vbcast.lane.b32.xlu0 %v853, 256
    %v856 = vpop.permute.xlu0 %855
    %v857 = vlaneseq
    %v858 = vshrl.u32 %v857, 7
    %v859 = vsub.s32 1, %v858
    %v860 = vrot.slane %v849, %v859
    %862 = vbcast.lane.b32.xlu0 %v860, 256
    %v863 = vpop.permute.xlu0 %862
    %v864 = vlaneseq
    %v865 = vshrl.u32 %v864, 7
    %v866 = vsub.s32 2, %v865
    %v867 = vrot.slane %v849, %v866
    %869 = vbcast.lane.b32.xlu0 %v867, 256
    %v870 = vpop.permute.xlu0 %869
    %v871 = vlaneseq
    %v872 = vshrl.u32 %v871, 7
    %v873 = vsub.s32 3, %v872
    %v874 = vrot.slane %v849, %v873
    %876 = vbcast.lane.b32.xlu0 %v874, 256
    %v877 = vpop.permute.xlu0 %876
    %v878 = vlaneseq
    %v879 = vshrl.u32 %v878, 7
    %v880 = vsub.s32 4, %v879
    %v881 = vrot.slane %v849, %v880
    %883 = vbcast.lane.b32.xlu0 %v881, 256
    %v884 = vpop.permute.xlu0 %883
    %v885 = vlaneseq
    %v886 = vshrl.u32 %v885, 7
    %v887 = vsub.s32 5, %v886
    %v888 = vrot.slane %v849, %v887
    %890 = vbcast.lane.b32.xlu0 %v888, 256
    %v891 = vpop.permute.xlu0 %890
    %v892 = vlaneseq
    %v893 = vshrl.u32 %v892, 7
    %v894 = vsub.s32 6, %v893
    %v895 = vrot.slane %v849, %v894
    %897 = vbcast.lane.b32.xlu0 %v895, 256
    %v898 = vpop.permute.xlu0 %897
    %v899 = vlaneseq
    %v900 = vshrl.u32 %v899, 7
    %v901 = vsub.s32 7, %v900
    %v902 = vrot.slane %v849, %v901
    %904 = vbcast.lane.b32.xlu0 %v902, 256
    %v905 = vpop.permute.xlu0 %904
    %v906 = vmul.f32 %v856, %v627
    %v907 = vmul.f32 %v863, %v632
    %v908 = vmul.f32 %v870, %v637
    %v909 = vmul.f32 %v877, %v642
    %v910 = vmul.f32 %v884, %v647
    %v911 = vmul.f32 %v891, %v652
    %v912 = vmul.f32 %v898, %v657
    %v913 = vmul.f32 %v905, %v662
    %v914 = vsel %vm764, %v906, 0.0
    %v915 = vrot.slane %v914, 4
    %v916 = vadd.f32 %v914, %v915
    %v917 = vrot.slane %v916, 2
    %v918 = vadd.f32 %v916, %v917
    %v919 = vrot.slane %v918, 1
    %v920 = vadd.f32 %v918, %v919
    %v921 = vsel %vm764, %v907, 0.0
    %v922 = vrot.slane %v921, 4
    %v923 = vadd.f32 %v921, %v922
    %v924 = vrot.slane %v923, 2
    %v925 = vadd.f32 %v923, %v924
    %v926 = vrot.slane %v925, 1
    %v927 = vadd.f32 %v925, %v926
    %v928 = vsel %vm764, %v908, 0.0
    %v929 = vrot.slane %v928, 4
    %v930 = vadd.f32 %v928, %v929
    %v931 = vrot.slane %v930, 2
    %v932 = vadd.f32 %v930, %v931
    %v933 = vrot.slane %v932, 1
    %v934 = vadd.f32 %v932, %v933
    %v935 = vsel %vm764, %v909, 0.0
    %v936 = vrot.slane %v935, 4
    %v937 = vadd.f32 %v935, %v936
    %v938 = vrot.slane %v937, 2
    %v939 = vadd.f32 %v937, %v938
    %v940 = vrot.slane %v939, 1
    %v941 = vadd.f32 %v939, %v940
    %v942 = vsel %vm764, %v910, 0.0
    %v943 = vrot.slane %v942, 4
    %v944 = vadd.f32 %v942, %v943
    %v945 = vrot.slane %v944, 2
    %v946 = vadd.f32 %v944, %v945
    %v947 = vrot.slane %v946, 1
    %v948 = vadd.f32 %v946, %v947
    %v949 = vsel %vm764, %v911, 0.0
    %v950 = vrot.slane %v949, 4
    %v951 = vadd.f32 %v949, %v950
    %v952 = vrot.slane %v951, 2
    %v953 = vadd.f32 %v951, %v952
    %v954 = vrot.slane %v953, 1
    %v955 = vadd.f32 %v953, %v954
    %v956 = vsel %vm764, %v912, 0.0
    %v957 = vrot.slane %v956, 4
    %v958 = vadd.f32 %v956, %v957
    %v959 = vrot.slane %v958, 2
    %v960 = vadd.f32 %v958, %v959
    %v961 = vrot.slane %v960, 1
    %v962 = vadd.f32 %v960, %v961
    %v963 = vsel %vm764, %v913, 0.0
    %v964 = vrot.slane %v963, 4
    %v965 = vadd.f32 %v963, %v964
    %v966 = vrot.slane %v965, 2
    %v967 = vadd.f32 %v965, %v966
    %v968 = vrot.slane %v967, 1
    %v969 = vadd.f32 %v967, %v968
    %v970 = vld [vmem:[%s21] sm:$0xff]
    %v971 = vld [vmem:[%s21 + $0x8] sm:$0xff]
    %v972 = vld [vmem:[%s21 + $0x10] sm:$0xff]
    %v973 = vld [vmem:[%s21 + $0x18] sm:$0xff]
    %v974 = vld [vmem:[%s21 + $0x20] sm:$0xff]
    %v975 = vld [vmem:[%s21 + $0x28] sm:$0xff]
    %v984 = vsel %vm307, %v927, %v920
    %v985 = vsel %vm309, %v934, %v984
    %v986 = vsel %vm311, %v941, %v985
    %v987 = vsel %vm313, %v948, %v986
    %v988 = vsel %vm315, %v955, %v987
    %v989 = vsel %vm317, %v962, %v988
    %v990 = vsel %vm319, %v969, %v989
    %v991 = vsel %vm764, %v990, 0
    %993 = vmatprep.subr.mxu0 0.0
    %994 = vmatpush1.msra.mxu0 0.0
    %995 = vmatprep.subr.mxu0 0.0
    %996 = vmatpush1.msra.mxu0 0.0
    %997 = vmatprep.subr.mxu0 0.0
    %998 = vmatpush1.msra.mxu0 0.0
    %999 = vmatprep.subr.mxu0 0.0
    %1000 = vmatpush1.msra.mxu0 0.0
    %1001 = vmatprep.subr.mxu0 0.0
    %1002 = vmatpush1.msra.mxu0 0.0
    %1003 = vmatprep.subr.mxu0 0.0
    %1004 = vmatpush1.msra.mxu0 0.0
    %1005 = vmatprep.subr.mxu0 0.0
    %1006 = vmatpush1.msra.mxu0 0.0
    %1007 = vmatprep.subr.mxu0 0.0
    %1008 = vmatpush1.msra.mxu0 0.0
    %1009 = vmatprep.subr.mxu0 0.0
    %1010 = vmatpush1.msra.mxu0 0.0
    %1011 = vmatprep.subr.mxu0 0.0
    %1012 = vmatpush1.msra.mxu0 0.0
    %1013 = vmatprep.subr.mxu0 0.0
    %1014 = vmatpush1.msra.mxu0 %v975
    %1015 = vmatprep.subr.mxu0 0.0
    %1016 = vmatpush1.msra.mxu0 %v974
    %1017 = vmatprep.subr.mxu0 0.0
    %1018 = vmatpush1.msra.mxu0 %v973
    %1019 = vmatprep.subr.mxu0 0.0
    %1020 = vmatpush1.msra.mxu0 %v972
    %1021 = vmatprep.subr.mxu0 0.0
    %1022 = vmatpush1.msra.mxu0 %v971
    %1023 = vmatprep.subr.mxu0 0.0
    %1024 = vmatpush1.msra.mxu0 %v970
    %1025 = vmatprep.subr.mxu0 0.0
    %1026 = vmatpush2.msra.mxu0 0.0
    %1027 = vmatprep.subr.mxu0 0.0
    %1028 = vmatpush2.msra.mxu0 0.0
    %1029 = vmatprep.subr.mxu0 0.0
    %1030 = vmatpush2.msra.mxu0 0.0
    %1031 = vmatprep.subr.mxu0 0.0
    %1032 = vmatpush2.msra.mxu0 0.0
    %1033 = vmatprep.subr.mxu0 0.0
    %1034 = vmatpush2.msra.mxu0 0.0
    %1035 = vmatprep.subr.mxu0 0.0
    %1036 = vmatpush2.msra.mxu0 0.0
    %1037 = vmatprep.subr.mxu0 0.0
    %1038 = vmatpush2.msra.mxu0 0.0
    %1039 = vmatprep.subr.mxu0 0.0
    %1040 = vmatpush2.msra.mxu0 0.0
    %1041 = vmatprep.subr.mxu0 0.0
    %1042 = vmatpush2.msra.mxu0 0.0
    %1043 = vmatprep.subr.mxu0 0.0
    %1044 = vmatpush2.msra.mxu0 0.0
    %1045 = vmatprep.subr.mxu0 0.0
    %1046 = vmatpush2.msra.mxu0 0.0
    %1047 = vmatprep.subr.mxu0 0.0
    %1048 = vmatpush2.msra.mxu0 0.0
    %1049 = vmatprep.subr.mxu0 0.0
    %1050 = vmatpush2.msra.mxu0 0.0
    %1051 = vmatprep.subr.mxu0 0.0
    %1052 = vmatpush2.msra.mxu0 0.0
    %1053 = vmatprep.subr.mxu0 0.0
    %1054 = vmatpush2.msra.mxu0 0.0
    %1055 = vmatprep.subr.mxu0 0.0
    %1056 = vmatpush2.msra.mxu0 0.0
    %1057 = vmatprep.mubr.f32.mxu0 0.0
    %1058 = vmatmul.mubr.f32.gmra.mxu0 %v991
    %v1059 = vpop.f32.mrf.mxu0
    %v1060 = vadd.f32 0.0, %v1059
    %v1061 = vpop.f32.mrf.mxu0
    %1062 = vdwg.mxu0
    %v1064 = vlaneseq
    %v1065 = vshrl.u32 %v1064, 7
    %v1066 = vsub.s32 0, %v1065
    %v1067 = vrot.slane %v279, %v1066
    %v1069 = vadd.f32 %v1067, %v1060
    %s1070 = scalar_lea.vmem %s9, 96
    %v1071 = vld [vmem:[%s1070] sm:$0xff]
    %v1072 = vld [vmem:[%s1070 + $0x8] sm:$0xff]
    %v1073 = vld [vmem:[%s1070 + $0x10] sm:$0xff]
    %v1074 = vld [vmem:[%s1070 + $0x18] sm:$0xff]
    %v1075 = vld [vmem:[%s1070 + $0x20] sm:$0xff]
    %v1076 = vld [vmem:[%s1070 + $0x28] sm:$0xff]
    %v1077 = vld [vmem:[%s1070 + $0x30] sm:$0xff]
    %v1078 = vld [vmem:[%s1070 + $0x38] sm:$0xff]
    %v1079 = vld [vmem:[%s1070 + $0x40] sm:$0xff]
    %v1080 = vld [vmem:[%s1070 + $0x48] sm:$0xff]
    %v1081 = vld [vmem:[%s1070 + $0x50] sm:$0xff]
    %v1082 = vld [vmem:[%s1070 + $0x58] sm:$0xff]
    %s1083 = scalar_lea.vmem %s11, 1
    %v1084 = vld [vmem:[%s1083] sm:$0x1]
    %v1086 = vlaneseq
    %v1087 = vshrl.u32 %v1086, 7
    %v1088 = vsub.s32 0, %v1087
    %v1089 = vrot.slane %v1084, %v1088
    %1091 = vmatprep.subr.mxu0 0.0
    %1092 = vmatpush1.msra.mxu0 0.0
    %1093 = vmatprep.subr.mxu0 0.0
    %1094 = vmatpush1.msra.mxu0 0.0
    %1095 = vmatprep.subr.mxu0 0.0
    %1096 = vmatpush1.msra.mxu0 0.0
    %1097 = vmatprep.subr.mxu0 0.0
    %1098 = vmatpush1.msra.mxu0 0.0
    %1099 = vmatprep.subr.mxu0 0.0
    %1100 = vmatpush1.msra.mxu0 %v1082
    %1101 = vmatprep.subr.mxu0 0.0
    %1102 = vmatpush1.msra.mxu0 %v1081
    %1103 = vmatprep.subr.mxu0 0.0
    %1104 = vmatpush1.msra.mxu0 %v1080
    %1105 = vmatprep.subr.mxu0 0.0
    %1106 = vmatpush1.msra.mxu0 %v1079
    %1107 = vmatprep.subr.mxu0 0.0
    %1108 = vmatpush1.msra.mxu0 %v1078
    %1109 = vmatprep.subr.mxu0 0.0
    %1110 = vmatpush1.msra.mxu0 %v1077
    %1111 = vmatprep.subr.mxu0 0.0
    %1112 = vmatpush1.msra.mxu0 %v1076
    %1113 = vmatprep.subr.mxu0 0.0
    %1114 = vmatpush1.msra.mxu0 %v1075
    %1115 = vmatprep.subr.mxu0 0.0
    %1116 = vmatpush1.msra.mxu0 %v1074
    %1117 = vmatprep.subr.mxu0 0.0
    %1118 = vmatpush1.msra.mxu0 %v1073
    %1119 = vmatprep.subr.mxu0 0.0
    %1120 = vmatpush1.msra.mxu0 %v1072
    %1121 = vmatprep.subr.mxu0 0.0
    %1122 = vmatpush1.msra.mxu0 %v1071
    %1123 = vmatprep.subr.mxu0 0.0
    %1124 = vmatpush2.msra.mxu0 0.0
    %1125 = vmatprep.subr.mxu0 0.0
    %1126 = vmatpush2.msra.mxu0 0.0
    %1127 = vmatprep.subr.mxu0 0.0
    %1128 = vmatpush2.msra.mxu0 0.0
    %1129 = vmatprep.subr.mxu0 0.0
    %1130 = vmatpush2.msra.mxu0 0.0
    %1131 = vmatprep.subr.mxu0 0.0
    %1132 = vmatpush2.msra.mxu0 0.0
    %1133 = vmatprep.subr.mxu0 0.0
    %1134 = vmatpush2.msra.mxu0 0.0
    %1135 = vmatprep.subr.mxu0 0.0
    %1136 = vmatpush2.msra.mxu0 0.0
    %1137 = vmatprep.subr.mxu0 0.0
    %1138 = vmatpush2.msra.mxu0 0.0
    %1139 = vmatprep.subr.mxu0 0.0
    %1140 = vmatpush2.msra.mxu0 0.0
    %1141 = vmatprep.subr.mxu0 0.0
    %1142 = vmatpush2.msra.mxu0 0.0
    %1143 = vmatprep.subr.mxu0 0.0
    %1144 = vmatpush2.msra.mxu0 0.0
    %1145 = vmatprep.subr.mxu0 0.0
    %1146 = vmatpush2.msra.mxu0 0.0
    %1147 = vmatprep.subr.mxu0 0.0
    %1148 = vmatpush2.msra.mxu0 0.0
    %1149 = vmatprep.subr.mxu0 0.0
    %1150 = vmatpush2.msra.mxu0 0.0
    %1151 = vmatprep.subr.mxu0 0.0
    %1152 = vmatpush2.msra.mxu0 0.0
    %1153 = vmatprep.subr.mxu0 0.0
    %1154 = vmatpush2.msra.mxu0 0.0
    %1155 = vmatprep.mubr.f32.mxu0 0.0
    %1156 = vmatmul.mubr.f32.gmra.mxu0 %v321
    %v1157 = vpop.f32.mrf.mxu0
    %v1158 = vadd.f32 %v1089, %v1157
    %v1159 = vpop.f32.mrf.mxu0
    %1160 = vdwg.mxu0
    %s1161 = scalar_lea.vmem %s13, 96
    %v1162 = vld [vmem:[%s1161] sm:$0xff]
    %v1163 = vld [vmem:[%s1161 + $0x8] sm:$0xff]
    %v1164 = vld [vmem:[%s1161 + $0x10] sm:$0xff]
    %v1165 = vld [vmem:[%s1161 + $0x18] sm:$0xff]
    %v1166 = vld [vmem:[%s1161 + $0x20] sm:$0xff]
    %v1167 = vld [vmem:[%s1161 + $0x28] sm:$0xff]
    %v1168 = vld [vmem:[%s1161 + $0x30] sm:$0xff]
    %v1169 = vld [vmem:[%s1161 + $0x38] sm:$0xff]
    %v1170 = vld [vmem:[%s1161 + $0x40] sm:$0xff]
    %v1171 = vld [vmem:[%s1161 + $0x48] sm:$0xff]
    %v1172 = vld [vmem:[%s1161 + $0x50] sm:$0xff]
    %v1173 = vld [vmem:[%s1161 + $0x58] sm:$0xff]
    %s1174 = scalar_lea.vmem %s15, 1
    %v1175 = vld [vmem:[%s1174] sm:$0x1]
    %v1177 = vlaneseq
    %v1178 = vshrl.u32 %v1177, 7
    %v1179 = vsub.s32 0, %v1178
    %v1180 = vrot.slane %v1175, %v1179
    %1182 = vmatprep.subr.mxu0 0.0
    %1183 = vmatpush1.msra.mxu0 0.0
    %1184 = vmatprep.subr.mxu0 0.0
    %1185 = vmatpush1.msra.mxu0 0.0
    %1186 = vmatprep.subr.mxu0 0.0
    %1187 = vmatpush1.msra.mxu0 0.0
    %1188 = vmatprep.subr.mxu0 0.0
    %1189 = vmatpush1.msra.mxu0 0.0
    %1190 = vmatprep.subr.mxu0 0.0
    %1191 = vmatpush1.msra.mxu0 %v1173
    %1192 = vmatprep.subr.mxu0 0.0
    %1193 = vmatpush1.msra.mxu0 %v1172
    %1194 = vmatprep.subr.mxu0 0.0
    %1195 = vmatpush1.msra.mxu0 %v1171
    %1196 = vmatprep.subr.mxu0 0.0
    %1197 = vmatpush1.msra.mxu0 %v1170
    %1198 = vmatprep.subr.mxu0 0.0
    %1199 = vmatpush1.msra.mxu0 %v1169
    %1200 = vmatprep.subr.mxu0 0.0
    %1201 = vmatpush1.msra.mxu0 %v1168
    %1202 = vmatprep.subr.mxu0 0.0
    %1203 = vmatpush1.msra.mxu0 %v1167
    %1204 = vmatprep.subr.mxu0 0.0
    %1205 = vmatpush1.msra.mxu0 %v1166
    %1206 = vmatprep.subr.mxu0 0.0
    %1207 = vmatpush1.msra.mxu0 %v1165
    %1208 = vmatprep.subr.mxu0 0.0
    %1209 = vmatpush1.msra.mxu0 %v1164
    %1210 = vmatprep.subr.mxu0 0.0
    %1211 = vmatpush1.msra.mxu0 %v1163
    %1212 = vmatprep.subr.mxu0 0.0
    %1213 = vmatpush1.msra.mxu0 %v1162
    %1214 = vmatprep.subr.mxu0 0.0
    %1215 = vmatpush2.msra.mxu0 0.0
    %1216 = vmatprep.subr.mxu0 0.0
    %1217 = vmatpush2.msra.mxu0 0.0
    %1218 = vmatprep.subr.mxu0 0.0
    %1219 = vmatpush2.msra.mxu0 0.0
    %1220 = vmatprep.subr.mxu0 0.0
    %1221 = vmatpush2.msra.mxu0 0.0
    %1222 = vmatprep.subr.mxu0 0.0
    %1223 = vmatpush2.msra.mxu0 0.0
    %1224 = vmatprep.subr.mxu0 0.0
    %1225 = vmatpush2.msra.mxu0 0.0
    %1226 = vmatprep.subr.mxu0 0.0
    %1227 = vmatpush2.msra.mxu0 0.0
    %1228 = vmatprep.subr.mxu0 0.0
    %1229 = vmatpush2.msra.mxu0 0.0
    %1230 = vmatprep.subr.mxu0 0.0
    %1231 = vmatpush2.msra.mxu0 0.0
    %1232 = vmatprep.subr.mxu0 0.0
    %1233 = vmatpush2.msra.mxu0 0.0
    %1234 = vmatprep.subr.mxu0 0.0
    %1235 = vmatpush2.msra.mxu0 0.0
    %1236 = vmatprep.subr.mxu0 0.0
    %1237 = vmatpush2.msra.mxu0 0.0
    %1238 = vmatprep.subr.mxu0 0.0
    %1239 = vmatpush2.msra.mxu0 0.0
    %1240 = vmatprep.subr.mxu0 0.0
    %1241 = vmatpush2.msra.mxu0 0.0
    %1242 = vmatprep.subr.mxu0 0.0
    %1243 = vmatpush2.msra.mxu0 0.0
    %1244 = vmatprep.subr.mxu0 0.0
    %1245 = vmatpush2.msra.mxu0 0.0
    %1246 = vmatprep.mubr.f32.mxu0 0.0
    %1247 = vmatmul.mubr.f32.gmra.mxu0 %v413
    %v1248 = vpop.f32.mrf.mxu0
    %v1249 = vadd.f32 %v1180, %v1248
    %v1250 = vpop.f32.mrf.mxu0
    %1251 = vmatprep.mubr.f32.mxu0 0.0
    %1252 = vmatmul.mubr.f32.gmra.mxu0 %v416
    %v1253 = vpop.f32.mrf.mxu0
    %v1254 = vadd.f32 %v1180, %v1253
    %v1255 = vpop.f32.mrf.mxu0
    %1256 = vmatprep.mubr.f32.mxu0 0.0
    %1257 = vmatmul.mubr.f32.gmra.mxu0 %v419
    %v1258 = vpop.f32.mrf.mxu0
    %v1259 = vadd.f32 %v1180, %v1258
    %v1260 = vpop.f32.mrf.mxu0
    %1261 = vmatprep.mubr.f32.mxu0 0.0
    %1262 = vmatmul.mubr.f32.gmra.mxu0 %v422
    %v1263 = vpop.f32.mrf.mxu0
    %v1264 = vadd.f32 %v1180, %v1263
    %v1265 = vpop.f32.mrf.mxu0
    %1266 = vmatprep.mubr.f32.mxu0 0.0
    %1267 = vmatmul.mubr.f32.gmra.mxu0 %v425
    %v1268 = vpop.f32.mrf.mxu0
    %v1269 = vadd.f32 %v1180, %v1268
    %v1270 = vpop.f32.mrf.mxu0
    %1271 = vmatprep.mubr.f32.mxu0 0.0
    %1272 = vmatmul.mubr.f32.gmra.mxu0 %v428
    %v1273 = vpop.f32.mrf.mxu0
    %v1274 = vadd.f32 %v1180, %v1273
    %v1275 = vpop.f32.mrf.mxu0
    %1276 = vmatprep.mubr.f32.mxu0 0.0
    %1277 = vmatmul.mubr.f32.gmra.mxu0 %v431
    %v1278 = vpop.f32.mrf.mxu0
    %v1279 = vadd.f32 %v1180, %v1278
    %v1280 = vpop.f32.mrf.mxu0
    %1281 = vmatprep.mubr.f32.mxu0 0.0
    %1282 = vmatmul.mubr.f32.gmra.mxu0 %v434
    %v1283 = vpop.f32.mrf.mxu0
    %v1284 = vadd.f32 %v1180, %v1283
    %v1285 = vpop.f32.mrf.mxu0
    %1286 = vdwg.mxu0
    %s1287 = scalar_lea.vmem %s17, 96
    %v1288 = vld [vmem:[%s1287] sm:$0xff]
    %v1289 = vld [vmem:[%s1287 + $0x8] sm:$0xff]
    %v1290 = vld [vmem:[%s1287 + $0x10] sm:$0xff]
    %v1291 = vld [vmem:[%s1287 + $0x18] sm:$0xff]
    %v1292 = vld [vmem:[%s1287 + $0x20] sm:$0xff]
    %v1293 = vld [vmem:[%s1287 + $0x28] sm:$0xff]
    %v1294 = vld [vmem:[%s1287 + $0x30] sm:$0xff]
    %v1295 = vld [vmem:[%s1287 + $0x38] sm:$0xff]
    %v1296 = vld [vmem:[%s1287 + $0x40] sm:$0xff]
    %v1297 = vld [vmem:[%s1287 + $0x48] sm:$0xff]
    %v1298 = vld [vmem:[%s1287 + $0x50] sm:$0xff]
    %v1299 = vld [vmem:[%s1287 + $0x58] sm:$0xff]
    %s1300 = scalar_lea.vmem %s19, 1
    %v1301 = vld [vmem:[%s1300] sm:$0x1]
    %v1303 = vlaneseq
    %v1304 = vshrl.u32 %v1303, 7
    %v1305 = vsub.s32 0, %v1304
    %v1306 = vrot.slane %v1301, %v1305
    %1308 = vmatprep.subr.mxu0 0.0
    %1309 = vmatpush1.msra.mxu0 0.0
    %1310 = vmatprep.subr.mxu0 0.0
    %1311 = vmatpush1.msra.mxu0 0.0
    %1312 = vmatprep.subr.mxu0 0.0
    %1313 = vmatpush1.msra.mxu0 0.0
    %1314 = vmatprep.subr.mxu0 0.0
    %1315 = vmatpush1.msra.mxu0 0.0
    %1316 = vmatprep.subr.mxu0 0.0
    %1317 = vmatpush1.msra.mxu0 %v1299
    %1318 = vmatprep.subr.mxu0 0.0
    %1319 = vmatpush1.msra.mxu0 %v1298
    %1320 = vmatprep.subr.mxu0 0.0
    %1321 = vmatpush1.msra.mxu0 %v1297
    %1322 = vmatprep.subr.mxu0 0.0
    %1323 = vmatpush1.msra.mxu0 %v1296
    %1324 = vmatprep.subr.mxu0 0.0
    %1325 = vmatpush1.msra.mxu0 %v1295
    %1326 = vmatprep.subr.mxu0 0.0
    %1327 = vmatpush1.msra.mxu0 %v1294
    %1328 = vmatprep.subr.mxu0 0.0
    %1329 = vmatpush1.msra.mxu0 %v1293
    %1330 = vmatprep.subr.mxu0 0.0
    %1331 = vmatpush1.msra.mxu0 %v1292
    %1332 = vmatprep.subr.mxu0 0.0
    %1333 = vmatpush1.msra.mxu0 %v1291
    %1334 = vmatprep.subr.mxu0 0.0
    %1335 = vmatpush1.msra.mxu0 %v1290
    %1336 = vmatprep.subr.mxu0 0.0
    %1337 = vmatpush1.msra.mxu0 %v1289
    %1338 = vmatprep.subr.mxu0 0.0
    %1339 = vmatpush1.msra.mxu0 %v1288
    %1340 = vmatprep.subr.mxu0 0.0
    %1341 = vmatpush2.msra.mxu0 0.0
    %1342 = vmatprep.subr.mxu0 0.0
    %1343 = vmatpush2.msra.mxu0 0.0
    %1344 = vmatprep.subr.mxu0 0.0
    %1345 = vmatpush2.msra.mxu0 0.0
    %1346 = vmatprep.subr.mxu0 0.0
    %1347 = vmatpush2.msra.mxu0 0.0
    %1348 = vmatprep.subr.mxu0 0.0
    %1349 = vmatpush2.msra.mxu0 0.0
    %1350 = vmatprep.subr.mxu0 0.0
    %1351 = vmatpush2.msra.mxu0 0.0
    %1352 = vmatprep.subr.mxu0 0.0
    %1353 = vmatpush2.msra.mxu0 0.0
    %1354 = vmatprep.subr.mxu0 0.0
    %1355 = vmatpush2.msra.mxu0 0.0
    %1356 = vmatprep.subr.mxu0 0.0
    %1357 = vmatpush2.msra.mxu0 0.0
    %1358 = vmatprep.subr.mxu0 0.0
    %1359 = vmatpush2.msra.mxu0 0.0
    %1360 = vmatprep.subr.mxu0 0.0
    %1361 = vmatpush2.msra.mxu0 0.0
    %1362 = vmatprep.subr.mxu0 0.0
    %1363 = vmatpush2.msra.mxu0 0.0
    %1364 = vmatprep.subr.mxu0 0.0
    %1365 = vmatpush2.msra.mxu0 0.0
    %1366 = vmatprep.subr.mxu0 0.0
    %1367 = vmatpush2.msra.mxu0 0.0
    %1368 = vmatprep.subr.mxu0 0.0
    %1369 = vmatpush2.msra.mxu0 0.0
    %1370 = vmatprep.subr.mxu0 0.0
    %1371 = vmatpush2.msra.mxu0 0.0
    %1372 = vmatprep.mubr.f32.mxu0 0.0
    %1373 = vmatmul.mubr.f32.gmra.mxu0 %v413
    %v1374 = vpop.f32.mrf.mxu0
    %v1375 = vadd.f32 %v1306, %v1374
    %v1376 = vpop.f32.mrf.mxu0
    %1377 = vmatprep.mubr.f32.mxu0 0.0
    %1378 = vmatmul.mubr.f32.gmra.mxu0 %v416
    %v1379 = vpop.f32.mrf.mxu0
    %v1380 = vadd.f32 %v1306, %v1379
    %v1381 = vpop.f32.mrf.mxu0
    %1382 = vmatprep.mubr.f32.mxu0 0.0
    %1383 = vmatmul.mubr.f32.gmra.mxu0 %v419
    %v1384 = vpop.f32.mrf.mxu0
    %v1385 = vadd.f32 %v1306, %v1384
    %v1386 = vpop.f32.mrf.mxu0
    %1387 = vmatprep.mubr.f32.mxu0 0.0
    %1388 = vmatmul.mubr.f32.gmra.mxu0 %v422
    %v1389 = vpop.f32.mrf.mxu0
    %v1390 = vadd.f32 %v1306, %v1389
    %v1391 = vpop.f32.mrf.mxu0
    %1392 = vmatprep.mubr.f32.mxu0 0.0
    %1393 = vmatmul.mubr.f32.gmra.mxu0 %v425
    %v1394 = vpop.f32.mrf.mxu0
    %v1395 = vadd.f32 %v1306, %v1394
    %v1396 = vpop.f32.mrf.mxu0
    %1397 = vmatprep.mubr.f32.mxu0 0.0
    %1398 = vmatmul.mubr.f32.gmra.mxu0 %v428
    %v1399 = vpop.f32.mrf.mxu0
    %v1400 = vadd.f32 %v1306, %v1399
    %v1401 = vpop.f32.mrf.mxu0
    %1402 = vmatprep.mubr.f32.mxu0 0.0
    %1403 = vmatmul.mubr.f32.gmra.mxu0 %v431
    %v1404 = vpop.f32.mrf.mxu0
    %v1405 = vadd.f32 %v1306, %v1404
    %v1406 = vpop.f32.mrf.mxu0
    %1407 = vmatprep.mubr.f32.mxu0 0.0
    %1408 = vmatmul.mubr.f32.gmra.mxu0 %v434
    %v1409 = vpop.f32.mrf.mxu0
    %v1410 = vadd.f32 %v1306, %v1409
    %v1411 = vpop.f32.mrf.mxu0
    %1412 = vdwg.mxu0
    %v1413 = vmul.f32 %v1158, 0.14433756
    %v1415 = vcombine.high %v1413, %v1413
    %v1417 = vunpack.c.l.s4 1966171168
    %v1418 = vunpack.c.0.s8 %v1417
    %v1419 = vlaneseq
    %v1420 = vshrl.u32 %v1419, 7
    %v1421 = vsub.s32 %v1418, %v1420
    %v1422 = vrot.slane %v1413, %v1421
    %v1424 = vunpack.c.l.s4 1966171168
    %v1425 = vunpack.c.0.s8 %v1424
    %v1426 = vlaneseq
    %v1427 = vshrl.u32 %v1426, 7
    %v1428 = vsub.s32 %v1425, %v1427
    %v1429 = vrot.slane %v1415, %v1428
    %v1430 = vcombine.high %v1422, %v1422
    %v1431 = vcombine.high %v1429, %v1429
    %v1433 = vunpack.c.l.s4 1966171168
    %v1434 = vunpack.c.0.s8 %v1433
    %v1435 = vlaneseq
    %v1436 = vshrl.u32 %v1435, 7
    %v1437 = vsub.s32 %v1434, %v1436
    %v1438 = vrot.slane %v1422, %v1437
    %v1440 = vunpack.c.l.s4 1966171168
    %v1441 = vunpack.c.0.s8 %v1440
    %v1442 = vlaneseq
    %v1443 = vshrl.u32 %v1442, 7
    %v1444 = vsub.s32 %v1441, %v1443
    %v1445 = vrot.slane %v1429, %v1444
    %v1447 = vunpack.c.l.s4 1966171168
    %v1448 = vunpack.c.0.s8 %v1447
    %v1449 = vlaneseq
    %v1450 = vshrl.u32 %v1449, 7
    %v1451 = vsub.s32 %v1448, %v1450
    %v1452 = vrot.slane %v1430, %v1451
    %v1454 = vunpack.c.l.s4 1966171168
    %v1455 = vunpack.c.0.s8 %v1454
    %v1456 = vlaneseq
    %v1457 = vshrl.u32 %v1456, 7
    %v1458 = vsub.s32 %v1455, %v1457
    %v1459 = vrot.slane %v1431, %v1458
    %v1460 = vcombine.high %v1438, %v1438
    %v1461 = vcombine.high %v1445, %v1445
    %v1462 = vcombine.high %v1452, %v1452
    %v1463 = vcombine.high %v1459, %v1459
    %v1464 = vlaneseq
    %v1465 = vshrl.u32 %v1464, 7
    %v1466 = vsub.s32 0, %v1465
    %v1467 = vrot.slane %v1438, %v1466
    %v1468 = vlaneseq
    %v1469 = vshrl.u32 %v1468, 7
    %v1470 = vsub.s32 0, %v1469
    %v1471 = vrot.slane %v1452, %v1470
    %v1472 = vlaneseq
    %v1473 = vshrl.u32 %v1472, 7
    %v1474 = vsub.s32 0, %v1473
    %v1475 = vrot.slane %v1460, %v1474
    %v1476 = vlaneseq
    %v1477 = vshrl.u32 %v1476, 7
    %v1478 = vsub.s32 0, %v1477
    %v1479 = vrot.slane %v1462, %v1478
    %v1480 = vlaneseq
    %v1481 = vshrl.u32 %v1480, 7
    %v1482 = vsub.s32 0, %v1481
    %v1483 = vrot.slane %v1445, %v1482
    %v1484 = vlaneseq
    %v1485 = vshrl.u32 %v1484, 7
    %v1486 = vsub.s32 0, %v1485
    %v1487 = vrot.slane %v1459, %v1486
    %v1488 = vlaneseq
    %v1489 = vshrl.u32 %v1488, 7
    %v1490 = vsub.s32 0, %v1489
    %v1491 = vrot.slane %v1461, %v1490
    %v1492 = vlaneseq
    %v1493 = vshrl.u32 %v1492, 7
    %v1494 = vsub.s32 0, %v1493
    %v1495 = vrot.slane %v1463, %v1494
    %v1504 = vmul.f32 %v1467, %v1249
    %v1505 = vmul.f32 %v1471, %v1254
    %v1506 = vmul.f32 %v1475, %v1259
    %v1507 = vmul.f32 %v1479, %v1264
    %v1508 = vmul.f32 %v1483, %v1269
    %v1509 = vmul.f32 %v1487, %v1274
    %v1510 = vmul.f32 %v1491, %v1279
    %v1511 = vmul.f32 %v1495, %v1284
    %v1512 = vsel %vm764, %v1504, 0.0
    %1513 = vadd.xlane.f32.xlu0 %v1512
    %v1514 = vpop.xlane.xlu0 %1513
    %v1515 = vsel %vm764, %v1505, 0.0
    %1516 = vadd.xlane.f32.xlu0 %v1515
    %v1517 = vpop.xlane.xlu0 %1516
    %v1518 = vsel %vm764, %v1506, 0.0
    %1519 = vadd.xlane.f32.xlu0 %v1518
    %v1520 = vpop.xlane.xlu0 %1519
    %v1521 = vsel %vm764, %v1507, 0.0
    %1522 = vadd.xlane.f32.xlu0 %v1521
    %v1523 = vpop.xlane.xlu0 %1522
    %v1524 = vsel %vm764, %v1508, 0.0
    %1525 = vadd.xlane.f32.xlu0 %v1524
    %v1526 = vpop.xlane.xlu0 %1525
    %v1527 = vsel %vm764, %v1509, 0.0
    %1528 = vadd.xlane.f32.xlu0 %v1527
    %v1529 = vpop.xlane.xlu0 %1528
    %v1530 = vsel %vm764, %v1510, 0.0
    %1531 = vadd.xlane.f32.xlu0 %v1530
    %v1532 = vpop.xlane.xlu0 %1531
    %v1533 = vsel %vm764, %v1511, 0.0
    %1534 = vadd.xlane.f32.xlu0 %v1533
    %v1535 = vpop.xlane.xlu0 %1534
    %v1544 = vlaneseq
    %v1545 = vshrl.u32 %v1544, 7
    %v1546 = vsub.s32 %v153, %v1545
    %v1547 = vrot.slane %v1514, %v1546
    %v1548 = vlaneseq
    %v1549 = vshrl.u32 %v1548, 7
    %v1550 = vsub.s32 %v153, %v1549
    %v1551 = vrot.slane %v1517, %v1550
    %v1552 = vlaneseq
    %v1553 = vshrl.u32 %v1552, 7
    %v1554 = vsub.s32 %v153, %v1553
    %v1555 = vrot.slane %v1520, %v1554
    %v1556 = vlaneseq
    %v1557 = vshrl.u32 %v1556, 7
    %v1558 = vsub.s32 %v153, %v1557
    %v1559 = vrot.slane %v1523, %v1558
    %v1560 = vlaneseq
    %v1561 = vshrl.u32 %v1560, 7
    %v1562 = vsub.s32 %v153, %v1561
    %v1563 = vrot.slane %v1526, %v1562
    %v1564 = vlaneseq
    %v1565 = vshrl.u32 %v1564, 7
    %v1566 = vsub.s32 %v153, %v1565
    %v1567 = vrot.slane %v1529, %v1566
    %v1568 = vlaneseq
    %v1569 = vshrl.u32 %v1568, 7
    %v1570 = vsub.s32 %v153, %v1569
    %v1571 = vrot.slane %v1532, %v1570
    %v1572 = vlaneseq
    %v1573 = vshrl.u32 %v1572, 7
    %v1574 = vsub.s32 %v153, %v1573
    %v1575 = vrot.slane %v1535, %v1574
    %v1576 = vsel %vm307, %v1551, %v1547
    %v1577 = vsel %vm309, %v1555, %v1576
    %v1578 = vsel %vm311, %v1559, %v1577
    %v1579 = vsel %vm313, %v1563, %v1578
    %v1580 = vsel %vm315, %v1567, %v1579
    %v1581 = vsel %vm317, %v1571, %v1580
    %v1582 = vsel %vm319, %v1575, %v1581
    %v1584 = vsel %vm789, %v1582, -1e+30
    %v1585 = vsel %vm138, %v1584, -inf
    %1586 = vmax.xlane.f32.xlu0 %v1585
    %v1587 = vpop.xlane.xlu0 %1586
    %v1588 = vsub.f32 %v1584, %v1587
    %v1589 = vmul.f32 %v1588, 1.442695
    %v1590 = vpow.pop %v1589
    %v1591 = vsel %vm138, %v1590, 0.0
    %1592 = vadd.xlane.f32.xlu0 %v1591
    %v1593 = vpop.xlane.xlu0 %1592
    %v1594 = vrcp.pop %v1593
    %v1595 = vmul.f32 %v1590, %v1594
    %v1596 = vlaneseq
    %v1597 = vshrl.u32 %v1596, 7
    %v1598 = vsub.s32 0, %v1597
    %v1599 = vrot.slane %v1595, %v1598
    %1601 = vbcast.lane.b32.xlu0 %v1599, 256
    %v1602 = vpop.permute.xlu0 %1601
    %v1603 = vlaneseq
    %v1604 = vshrl.u32 %v1603, 7
    %v1605 = vsub.s32 1, %v1604
    %v1606 = vrot.slane %v1595, %v1605
    %1608 = vbcast.lane.b32.xlu0 %v1606, 256
    %v1609 = vpop.permute.xlu0 %1608
    %v1610 = vlaneseq
    %v1611 = vshrl.u32 %v1610, 7
    %v1612 = vsub.s32 2, %v1611
    %v1613 = vrot.slane %v1595, %v1612
    %1615 = vbcast.lane.b32.xlu0 %v1613, 256
    %v1616 = vpop.permute.xlu0 %1615
    %v1617 = vlaneseq
    %v1618 = vshrl.u32 %v1617, 7
    %v1619 = vsub.s32 3, %v1618
    %v1620 = vrot.slane %v1595, %v1619
    %1622 = vbcast.lane.b32.xlu0 %v1620, 256
    %v1623 = vpop.permute.xlu0 %1622
    %v1624 = vlaneseq
    %v1625 = vshrl.u32 %v1624, 7
    %v1626 = vsub.s32 4, %v1625
    %v1627 = vrot.slane %v1595, %v1626
    %1629 = vbcast.lane.b32.xlu0 %v1627, 256
    %v1630 = vpop.permute.xlu0 %1629
    %v1631 = vlaneseq
    %v1632 = vshrl.u32 %v1631, 7
    %v1633 = vsub.s32 5, %v1632
    %v1634 = vrot.slane %v1595, %v1633
    %1636 = vbcast.lane.b32.xlu0 %v1634, 256
    %v1637 = vpop.permute.xlu0 %1636
    %v1638 = vlaneseq
    %v1639 = vshrl.u32 %v1638, 7
    %v1640 = vsub.s32 6, %v1639
    %v1641 = vrot.slane %v1595, %v1640
    %1643 = vbcast.lane.b32.xlu0 %v1641, 256
    %v1644 = vpop.permute.xlu0 %1643
    %v1645 = vlaneseq
    %v1646 = vshrl.u32 %v1645, 7
    %v1647 = vsub.s32 7, %v1646
    %v1648 = vrot.slane %v1595, %v1647
    %1650 = vbcast.lane.b32.xlu0 %v1648, 256
    %v1651 = vpop.permute.xlu0 %1650
    %v1652 = vmul.f32 %v1602, %v1375
    %v1653 = vmul.f32 %v1609, %v1380
    %v1654 = vmul.f32 %v1616, %v1385
    %v1655 = vmul.f32 %v1623, %v1390
    %v1656 = vmul.f32 %v1630, %v1395
    %v1657 = vmul.f32 %v1637, %v1400
    %v1658 = vmul.f32 %v1644, %v1405
    %v1659 = vmul.f32 %v1651, %v1410
    %v1660 = vsel %vm764, %v1652, 0.0
    %v1661 = vrot.slane %v1660, 4
    %v1662 = vadd.f32 %v1660, %v1661
    %v1663 = vrot.slane %v1662, 2
    %v1664 = vadd.f32 %v1662, %v1663
    %v1665 = vrot.slane %v1664, 1
    %v1666 = vadd.f32 %v1664, %v1665
    %v1667 = vsel %vm764, %v1653, 0.0
    %v1668 = vrot.slane %v1667, 4
    %v1669 = vadd.f32 %v1667, %v1668
    %v1670 = vrot.slane %v1669, 2
    %v1671 = vadd.f32 %v1669, %v1670
    %v1672 = vrot.slane %v1671, 1
    %v1673 = vadd.f32 %v1671, %v1672
    %v1674 = vsel %vm764, %v1654, 0.0
    %v1675 = vrot.slane %v1674, 4
    %v1676 = vadd.f32 %v1674, %v1675
    %v1677 = vrot.slane %v1676, 2
    %v1678 = vadd.f32 %v1676, %v1677
    %v1679 = vrot.slane %v1678, 1
    %v1680 = vadd.f32 %v1678, %v1679
    %v1681 = vsel %vm764, %v1655, 0.0
    %v1682 = vrot.slane %v1681, 4
    %v1683 = vadd.f32 %v1681, %v1682
    %v1684 = vrot.slane %v1683, 2
    %v1685 = vadd.f32 %v1683, %v1684
    %v1686 = vrot.slane %v1685, 1
    %v1687 = vadd.f32 %v1685, %v1686
    %v1688 = vsel %vm764, %v1656, 0.0
    %v1689 = vrot.slane %v1688, 4
    %v1690 = vadd.f32 %v1688, %v1689
    %v1691 = vrot.slane %v1690, 2
    %v1692 = vadd.f32 %v1690, %v1691
    %v1693 = vrot.slane %v1692, 1
    %v1694 = vadd.f32 %v1692, %v1693
    %v1695 = vsel %vm764, %v1657, 0.0
    %v1696 = vrot.slane %v1695, 4
    %v1697 = vadd.f32 %v1695, %v1696
    %v1698 = vrot.slane %v1697, 2
    %v1699 = vadd.f32 %v1697, %v1698
    %v1700 = vrot.slane %v1699, 1
    %v1701 = vadd.f32 %v1699, %v1700
    %v1702 = vsel %vm764, %v1658, 0.0
    %v1703 = vrot.slane %v1702, 4
    %v1704 = vadd.f32 %v1702, %v1703
    %v1705 = vrot.slane %v1704, 2
    %v1706 = vadd.f32 %v1704, %v1705
    %v1707 = vrot.slane %v1706, 1
    %v1708 = vadd.f32 %v1706, %v1707
    %v1709 = vsel %vm764, %v1659, 0.0
    %v1710 = vrot.slane %v1709, 4
    %v1711 = vadd.f32 %v1709, %v1710
    %v1712 = vrot.slane %v1711, 2
    %v1713 = vadd.f32 %v1711, %v1712
    %v1714 = vrot.slane %v1713, 1
    %v1715 = vadd.f32 %v1713, %v1714
    %s1716 = scalar_lea.vmem %s21, 48
    %v1717 = vld [vmem:[%s1716] sm:$0xff]
    %v1718 = vld [vmem:[%s1716 + $0x8] sm:$0xff]
    %v1719 = vld [vmem:[%s1716 + $0x10] sm:$0xff]
    %v1720 = vld [vmem:[%s1716 + $0x18] sm:$0xff]
    %v1721 = vld [vmem:[%s1716 + $0x20] sm:$0xff]
    %v1722 = vld [vmem:[%s1716 + $0x28] sm:$0xff]
    %v1731 = vsel %vm307, %v1673, %v1666
    %v1732 = vsel %vm309, %v1680, %v1731
    %v1733 = vsel %vm311, %v1687, %v1732
    %v1734 = vsel %vm313, %v1694, %v1733
    %v1735 = vsel %vm315, %v1701, %v1734
    %v1736 = vsel %vm317, %v1708, %v1735
    %v1737 = vsel %vm319, %v1715, %v1736
    %v1738 = vsel %vm764, %v1737, 0
    %1740 = vmatprep.subr.mxu0 0.0
    %1741 = vmatpush1.msra.mxu0 0.0
    %1742 = vmatprep.subr.mxu0 0.0
    %1743 = vmatpush1.msra.mxu0 0.0
    %1744 = vmatprep.subr.mxu0 0.0
    %1745 = vmatpush1.msra.mxu0 0.0
    %1746 = vmatprep.subr.mxu0 0.0
    %1747 = vmatpush1.msra.mxu0 0.0
    %1748 = vmatprep.subr.mxu0 0.0
    %1749 = vmatpush1.msra.mxu0 0.0
    %1750 = vmatprep.subr.mxu0 0.0
    %1751 = vmatpush1.msra.mxu0 0.0
    %1752 = vmatprep.subr.mxu0 0.0
    %1753 = vmatpush1.msra.mxu0 0.0
    %1754 = vmatprep.subr.mxu0 0.0
    %1755 = vmatpush1.msra.mxu0 0.0
    %1756 = vmatprep.subr.mxu0 0.0
    %1757 = vmatpush1.msra.mxu0 0.0
    %1758 = vmatprep.subr.mxu0 0.0
    %1759 = vmatpush1.msra.mxu0 0.0
    %1760 = vmatprep.subr.mxu0 0.0
    %1761 = vmatpush1.msra.mxu0 %v1722
    %1762 = vmatprep.subr.mxu0 0.0
    %1763 = vmatpush1.msra.mxu0 %v1721
    %1764 = vmatprep.subr.mxu0 0.0
    %1765 = vmatpush1.msra.mxu0 %v1720
    %1766 = vmatprep.subr.mxu0 0.0
    %1767 = vmatpush1.msra.mxu0 %v1719
    %1768 = vmatprep.subr.mxu0 0.0
    %1769 = vmatpush1.msra.mxu0 %v1718
    %1770 = vmatprep.subr.mxu0 0.0
    %1771 = vmatpush1.msra.mxu0 %v1717
    %1772 = vmatprep.subr.mxu0 0.0
    %1773 = vmatpush2.msra.mxu0 0.0
    %1774 = vmatprep.subr.mxu0 0.0
    %1775 = vmatpush2.msra.mxu0 0.0
    %1776 = vmatprep.subr.mxu0 0.0
    %1777 = vmatpush2.msra.mxu0 0.0
    %1778 = vmatprep.subr.mxu0 0.0
    %1779 = vmatpush2.msra.mxu0 0.0
    %1780 = vmatprep.subr.mxu0 0.0
    %1781 = vmatpush2.msra.mxu0 0.0
    %1782 = vmatprep.subr.mxu0 0.0
    %1783 = vmatpush2.msra.mxu0 0.0
    %1784 = vmatprep.subr.mxu0 0.0
    %1785 = vmatpush2.msra.mxu0 0.0
    %1786 = vmatprep.subr.mxu0 0.0
    %1787 = vmatpush2.msra.mxu0 0.0
    %1788 = vmatprep.subr.mxu0 0.0
    %1789 = vmatpush2.msra.mxu0 0.0
    %1790 = vmatprep.subr.mxu0 0.0
    %1791 = vmatpush2.msra.mxu0 0.0
    %1792 = vmatprep.subr.mxu0 0.0
    %1793 = vmatpush2.msra.mxu0 0.0
    %1794 = vmatprep.subr.mxu0 0.0
    %1795 = vmatpush2.msra.mxu0 0.0
    %1796 = vmatprep.subr.mxu0 0.0
    %1797 = vmatpush2.msra.mxu0 0.0
    %1798 = vmatprep.subr.mxu0 0.0
    %1799 = vmatpush2.msra.mxu0 0.0
    %1800 = vmatprep.subr.mxu0 0.0
    %1801 = vmatpush2.msra.mxu0 0.0
    %1802 = vmatprep.subr.mxu0 0.0
    %1803 = vmatpush2.msra.mxu0 0.0
    %1804 = vmatprep.mubr.f32.mxu0 0.0
    %1805 = vmatmul.mubr.f32.gmra.mxu0 %v1738
    %v1806 = vpop.f32.mrf.mxu0
    %v1807 = vadd.f32 0.0, %v1806
    %v1808 = vpop.f32.mrf.mxu0
    %1809 = vdwg.mxu0
    %v1810 = vadd.f32 %v1069, %v1807
    %v1812 = vrot.slane %v1810, 1
    %v1813 = vrot.slane %v1810, 2
    %v1814 = vrot.slane %v1810, 3
    %v1815 = vrot.slane %v1810, 4
    %v1816 = vrot.slane %v1810, 5
    %v1817 = vrot.slane %v1810, 6
    %v1818 = vrot.slane %v1810, 7
    %v1827 = vadd.f32 %v229, %v1810
    %v1828 = vadd.f32 %v236, %v1812
    %v1829 = vadd.f32 %v243, %v1813
    %v1830 = vadd.f32 %v250, %v1814
    %v1831 = vadd.f32 %v257, %v1815
    %v1832 = vadd.f32 %v264, %v1816
    %v1833 = vadd.f32 %v271, %v1817
    %v1834 = vadd.f32 %v278, %v1818
    %v1835 = vld [vmem:[%s25] sm:$0x1]
    %v1836 = vld [vmem:[%s27] sm:$0x1]
    %v1845 = vrot.slane %v1828, 7
    %v1846 = vsel %vm307, %v1845, %v1827
    %v1847 = vrot.slane %v1829, 6
    %v1848 = vsel %vm309, %v1847, %v1846
    %v1849 = vrot.slane %v1830, 5
    %v1850 = vsel %vm311, %v1849, %v1848
    %v1851 = vrot.slane %v1831, 4
    %v1852 = vsel %vm313, %v1851, %v1850
    %v1853 = vrot.slane %v1832, 3
    %v1854 = vsel %vm315, %v1853, %v1852
    %v1855 = vrot.slane %v1833, 2
    %v1856 = vsel %vm317, %v1855, %v1854
    %v1857 = vrot.slane %v1834, 1
    %v1858 = vsel %vm319, %v1857, %v1856
    %v1860 = vsel %vm222, %v1858, 0.0
    %1861 = vadd.xlane.f32.xlu0 %v1860
    %v1862 = vpop.xlane.xlu0 %1861
    %v1863 = vrcp.pop 96.0
    %v1864 = vmul.f32 %v1862, %v1863
    %v1866 = vrot.slane %v1864, 1
    %v1867 = vrot.slane %v1864, 2
    %v1868 = vrot.slane %v1864, 3
    %v1869 = vrot.slane %v1864, 4
    %v1870 = vrot.slane %v1864, 5
    %v1871 = vrot.slane %v1864, 6
    %v1872 = vrot.slane %v1864, 7
    %v1881 = vsub.f32 %v1827, %v1864
    %v1882 = vsub.f32 %v1828, %v1866
    %v1883 = vsub.f32 %v1829, %v1867
    %v1884 = vsub.f32 %v1830, %v1868
    %v1885 = vsub.f32 %v1831, %v1869
    %v1886 = vsub.f32 %v1832, %v1870
    %v1887 = vsub.f32 %v1833, %v1871
    %v1888 = vsub.f32 %v1834, %v1872
    %v1889 = vmul.f32 %v1881, %v1881
    %v1890 = vmul.f32 %v1882, %v1882
    %v1891 = vmul.f32 %v1883, %v1883
    %v1892 = vmul.f32 %v1884, %v1884
    %v1893 = vmul.f32 %v1885, %v1885
    %v1894 = vmul.f32 %v1886, %v1886
    %v1895 = vmul.f32 %v1887, %v1887
    %v1896 = vmul.f32 %v1888, %v1888
    %v1905 = vrot.slane %v1890, 7
    %v1906 = vsel %vm307, %v1905, %v1889
    %v1907 = vrot.slane %v1891, 6
    %v1908 = vsel %vm309, %v1907, %v1906
    %v1909 = vrot.slane %v1892, 5
    %v1910 = vsel %vm311, %v1909, %v1908
    %v1911 = vrot.slane %v1893, 4
    %v1912 = vsel %vm313, %v1911, %v1910
    %v1913 = vrot.slane %v1894, 3
    %v1914 = vsel %vm315, %v1913, %v1912
    %v1915 = vrot.slane %v1895, 2
    %v1916 = vsel %vm317, %v1915, %v1914
    %v1917 = vrot.slane %v1896, 1
    %v1918 = vsel %vm319, %v1917, %v1916
    %v1920 = vsel %vm222, %v1918, 0.0
    %1921 = vadd.xlane.f32.xlu0 %v1920
    %v1922 = vpop.xlane.xlu0 %1921
    %v1923 = vmul.f32 %v1922, %v1863
    %v1924 = vadd.f32 %v1923, 1e-05
    %v1925 = vrsqrt.pop %v1924
    %v1927 = vrot.slane %v1925, 1
    %v1928 = vrot.slane %v1925, 2
    %v1929 = vrot.slane %v1925, 3
    %v1930 = vrot.slane %v1925, 4
    %v1931 = vrot.slane %v1925, 5
    %v1932 = vrot.slane %v1925, 6
    %v1933 = vrot.slane %v1925, 7
    %v1942 = vmul.f32 %v1881, %v1925
    %v1943 = vmul.f32 %v1882, %v1927
    %v1944 = vmul.f32 %v1883, %v1928
    %v1945 = vmul.f32 %v1884, %v1929
    %v1946 = vmul.f32 %v1885, %v1930
    %v1947 = vmul.f32 %v1886, %v1931
    %v1948 = vmul.f32 %v1887, %v1932
    %v1949 = vmul.f32 %v1888, %v1933
    %v1951 = vlaneseq
    %v1952 = vshrl.u32 %v1951, 7
    %v1953 = vsub.s32 0, %v1952
    %v1954 = vrot.slane %v1835, %v1953
    %v1956 = vmul.f32 %v1942, %v1954
    %v1957 = vmul.f32 %v1943, %v1954
    %v1958 = vmul.f32 %v1944, %v1954
    %v1959 = vmul.f32 %v1945, %v1954
    %v1960 = vmul.f32 %v1946, %v1954
    %v1961 = vmul.f32 %v1947, %v1954
    %v1962 = vmul.f32 %v1948, %v1954
    %v1963 = vmul.f32 %v1949, %v1954
    %v1965 = vlaneseq
    %v1966 = vshrl.u32 %v1965, 7
    %v1967 = vsub.s32 0, %v1966
    %v1968 = vrot.slane %v1836, %v1967
    %v1970 = vadd.f32 %v1956, %v1968
    %v1971 = vadd.f32 %v1957, %v1968
    %v1972 = vadd.f32 %v1958, %v1968
    %v1973 = vadd.f32 %v1959, %v1968
    %v1974 = vadd.f32 %v1960, %v1968
    %v1975 = vadd.f32 %v1961, %v1968
    %v1976 = vadd.f32 %v1962, %v1968
    %v1977 = vadd.f32 %v1963, %v1968
    %v1978 = vld [vmem:[%s33] sm:$0xff]
    %v1979 = vld [vmem:[%s33 + $0x8] sm:$0xff]
    %v1980 = vld [vmem:[%s33 + $0x10] sm:$0xff]
    %v1981 = vld [vmem:[%s33 + $0x18] sm:$0xff]
    %v1982 = vld [vmem:[%s33 + $0x20] sm:$0xff]
    %v1983 = vld [vmem:[%s33 + $0x28] sm:$0xff]
    %v1984 = vld [vmem:[%s33 + $0x30] sm:$0xff]
    %v1985 = vld [vmem:[%s33 + $0x38] sm:$0xff]
    %v1986 = vld [vmem:[%s33 + $0x40] sm:$0xff]
    %v1987 = vld [vmem:[%s33 + $0x48] sm:$0xff]
    %v1988 = vld [vmem:[%s33 + $0x50] sm:$0xff]
    %v1989 = vld [vmem:[%s33 + $0x58] sm:$0xff]
    %v1990 = vld [vmem:[%s33 + $0x60] sm:$0xff]
    %v1991 = vld [vmem:[%s33 + $0x68] sm:$0xff]
    %v1992 = vld [vmem:[%s33 + $0x70] sm:$0xff]
    %v1993 = vld [vmem:[%s33 + $0x78] sm:$0xff]
    %v1994 = vld [vmem:[%s33 + $0x80] sm:$0xff]
    %v1995 = vld [vmem:[%s33 + $0x88] sm:$0xff]
    %v1996 = vld [vmem:[%s33 + $0x90] sm:$0xff]
    %v1997 = vld [vmem:[%s33 + $0x98] sm:$0xff]
    %v1998 = vld [vmem:[%s33 + $0xa0] sm:$0xff]
    %v1999 = vld [vmem:[%s33 + $0xa8] sm:$0xff]
    %v2000 = vld [vmem:[%s33 + $0xb0] sm:$0xff]
    %v2001 = vld [vmem:[%s33 + $0xb8] sm:$0xff]
    %v2002 = vld [vmem:[%s33 + $0xc0] sm:$0xff]
    %v2003 = vld [vmem:[%s33 + $0xc8] sm:$0xff]
    %v2004 = vld [vmem:[%s33 + $0xd0] sm:$0xff]
    %v2005 = vld [vmem:[%s33 + $0xd8] sm:$0xff]
    %v2006 = vld [vmem:[%s33 + $0xe0] sm:$0xff]
    %v2007 = vld [vmem:[%s33 + $0xe8] sm:$0xff]
    %v2008 = vld [vmem:[%s33 + $0xf0] sm:$0xff]
    %v2009 = vld [vmem:[%s33 + $0xf8] sm:$0xff]
    %v2010 = vld [vmem:[%s33 + $0x100] sm:$0xff]
    %v2011 = vld [vmem:[%s33 + $0x108] sm:$0xff]
    %v2012 = vld [vmem:[%s33 + $0x110] sm:$0xff]
    %v2013 = vld [vmem:[%s33 + $0x118] sm:$0xff]
    %v2014 = vld [vmem:[%s33 + $0x120] sm:$0xff]
    %v2015 = vld [vmem:[%s33 + $0x128] sm:$0xff]
    %v2016 = vld [vmem:[%s33 + $0x130] sm:$0xff]
    %v2017 = vld [vmem:[%s33 + $0x138] sm:$0xff]
    %v2018 = vld [vmem:[%s33 + $0x140] sm:$0xff]
    %v2019 = vld [vmem:[%s33 + $0x148] sm:$0xff]
    %v2020 = vld [vmem:[%s33 + $0x150] sm:$0xff]
    %v2021 = vld [vmem:[%s33 + $0x158] sm:$0xff]
    %v2022 = vld [vmem:[%s33 + $0x160] sm:$0xff]
    %v2023 = vld [vmem:[%s33 + $0x168] sm:$0xff]
    %v2024 = vld [vmem:[%s33 + $0x170] sm:$0xff]
    %v2025 = vld [vmem:[%s33 + $0x178] sm:$0xff]
    %v2026 = vld [vmem:[%s33 + $0x180] sm:$0xff]
    %v2027 = vld [vmem:[%s33 + $0x188] sm:$0xff]
    %v2028 = vld [vmem:[%s33 + $0x190] sm:$0xff]
    %v2029 = vld [vmem:[%s33 + $0x198] sm:$0xff]
    %v2030 = vld [vmem:[%s33 + $0x1a0] sm:$0xff]
    %v2031 = vld [vmem:[%s33 + $0x1a8] sm:$0xff]
    %v2032 = vld [vmem:[%s33 + $0x1b0] sm:$0xff]
    %v2033 = vld [vmem:[%s33 + $0x1b8] sm:$0xff]
    %v2034 = vld [vmem:[%s33 + $0x1c0] sm:$0xff]
    %v2035 = vld [vmem:[%s33 + $0x1c8] sm:$0xff]
    %v2036 = vld [vmem:[%s33 + $0x1d0] sm:$0xff]
    %v2037 = vld [vmem:[%s33 + $0x1d8] sm:$0xff]
    %v2038 = vld [vmem:[%s33 + $0x1e0] sm:$0xff]
    %v2039 = vld [vmem:[%s33 + $0x1e8] sm:$0xff]
    %v2040 = vld [vmem:[%s33 + $0x1f0] sm:$0xff]
    %v2041 = vld [vmem:[%s33 + $0x1f8] sm:$0xff]
    %v2042 = vld [vmem:[%s33 + $0x200] sm:$0xff]
    %v2043 = vld [vmem:[%s33 + $0x208] sm:$0xff]
    %v2044 = vld [vmem:[%s33 + $0x210] sm:$0xff]
    %v2045 = vld [vmem:[%s33 + $0x218] sm:$0xff]
    %v2046 = vld [vmem:[%s33 + $0x220] sm:$0xff]
    %v2047 = vld [vmem:[%s33 + $0x228] sm:$0xff]
    %v2048 = vld [vmem:[%s33 + $0x230] sm:$0xff]
    %v2049 = vld [vmem:[%s33 + $0x238] sm:$0xff]
    %v2050 = vld [vmem:[%s33 + $0x240] sm:$0xff]
    %v2051 = vld [vmem:[%s33 + $0x248] sm:$0xff]
    %v2052 = vld [vmem:[%s33 + $0x250] sm:$0xff]
    %v2053 = vld [vmem:[%s33 + $0x258] sm:$0xff]
    %v2054 = vld [vmem:[%s33 + $0x260] sm:$0xff]
    %v2055 = vld [vmem:[%s33 + $0x268] sm:$0xff]
    %v2056 = vld [vmem:[%s33 + $0x270] sm:$0xff]
    %v2057 = vld [vmem:[%s33 + $0x278] sm:$0xff]
    %v2058 = vld [vmem:[%s33 + $0x280] sm:$0xff]
    %v2059 = vld [vmem:[%s33 + $0x288] sm:$0xff]
    %v2060 = vld [vmem:[%s33 + $0x290] sm:$0xff]
    %v2061 = vld [vmem:[%s33 + $0x298] sm:$0xff]
    %v2062 = vld [vmem:[%s33 + $0x2a0] sm:$0xff]
    %v2063 = vld [vmem:[%s33 + $0x2a8] sm:$0xff]
    %v2064 = vld [vmem:[%s33 + $0x2b0] sm:$0xff]
    %v2065 = vld [vmem:[%s33 + $0x2b8] sm:$0xff]
    %v2066 = vld [vmem:[%s33 + $0x2c0] sm:$0xff]
    %v2067 = vld [vmem:[%s33 + $0x2c8] sm:$0xff]
    %v2068 = vld [vmem:[%s33 + $0x2d0] sm:$0xff]
    %v2069 = vld [vmem:[%s33 + $0x2d8] sm:$0xff]
    %v2070 = vld [vmem:[%s33 + $0x2e0] sm:$0xff]
    %v2071 = vld [vmem:[%s33 + $0x2e8] sm:$0xff]
    %v2072 = vld [vmem:[%s33 + $0x2f0] sm:$0xff]
    %v2073 = vld [vmem:[%s33 + $0x2f8] sm:$0xff]
    %v2074 = vld [vmem:[%s33 + $0x300] sm:$0xff]
    %v2075 = vld [vmem:[%s33 + $0x308] sm:$0xff]
    %v2076 = vld [vmem:[%s33 + $0x310] sm:$0xff]
    %v2077 = vld [vmem:[%s33 + $0x318] sm:$0xff]
    %v2078 = vld [vmem:[%s33 + $0x320] sm:$0xff]
    %v2079 = vld [vmem:[%s33 + $0x328] sm:$0xff]
    %v2080 = vld [vmem:[%s33 + $0x330] sm:$0xff]
    %v2081 = vld [vmem:[%s33 + $0x338] sm:$0xff]
    %v2082 = vld [vmem:[%s33 + $0x340] sm:$0xff]
    %v2083 = vld [vmem:[%s33 + $0x348] sm:$0xff]
    %v2084 = vld [vmem:[%s33 + $0x350] sm:$0xff]
    %v2085 = vld [vmem:[%s33 + $0x358] sm:$0xff]
    %v2086 = vld [vmem:[%s33 + $0x360] sm:$0xff]
    %v2087 = vld [vmem:[%s33 + $0x368] sm:$0xff]
    %v2088 = vld [vmem:[%s33 + $0x370] sm:$0xff]
    %v2089 = vld [vmem:[%s33 + $0x378] sm:$0xff]
    %v2090 = vld [vmem:[%s33 + $0x380] sm:$0xff]
    %v2091 = vld [vmem:[%s33 + $0x388] sm:$0xff]
    %v2092 = vld [vmem:[%s33 + $0x390] sm:$0xff]
    %v2093 = vld [vmem:[%s33 + $0x398] sm:$0xff]
    %v2094 = vld [vmem:[%s33 + $0x3a0] sm:$0xff]
    %v2095 = vld [vmem:[%s33 + $0x3a8] sm:$0xff]
    %v2096 = vld [vmem:[%s33 + $0x3b0] sm:$0xff]
    %v2097 = vld [vmem:[%s33 + $0x3b8] sm:$0xff]
    %v2098 = vld [vmem:[%s33 + $0x3c0] sm:$0xff]
    %v2099 = vld [vmem:[%s33 + $0x3c8] sm:$0xff]
    %v2100 = vld [vmem:[%s33 + $0x3d0] sm:$0xff]
    %v2101 = vld [vmem:[%s33 + $0x3d8] sm:$0xff]
    %v2102 = vld [vmem:[%s33 + $0x3e0] sm:$0xff]
    %v2103 = vld [vmem:[%s33 + $0x3e8] sm:$0xff]
    %v2104 = vld [vmem:[%s33 + $0x3f0] sm:$0xff]
    %v2105 = vld [vmem:[%s33 + $0x3f8] sm:$0xff]
    %v2106 = vld [vmem:[%s33 + $0x400] sm:$0xff]
    %v2107 = vld [vmem:[%s33 + $0x408] sm:$0xff]
    %v2108 = vld [vmem:[%s33 + $0x410] sm:$0xff]
    %v2109 = vld [vmem:[%s33 + $0x418] sm:$0xff]
    %v2110 = vld [vmem:[%s33 + $0x420] sm:$0xff]
    %v2111 = vld [vmem:[%s33 + $0x428] sm:$0xff]
    %v2112 = vld [vmem:[%s33 + $0x430] sm:$0xff]
    %v2113 = vld [vmem:[%s33 + $0x438] sm:$0xff]
    %v2114 = vld [vmem:[%s33 + $0x440] sm:$0xff]
    %v2115 = vld [vmem:[%s33 + $0x448] sm:$0xff]
    %v2116 = vld [vmem:[%s33 + $0x450] sm:$0xff]
    %v2117 = vld [vmem:[%s33 + $0x458] sm:$0xff]
    %v2118 = vld [vmem:[%s33 + $0x460] sm:$0xff]
    %v2119 = vld [vmem:[%s33 + $0x468] sm:$0xff]
    %v2120 = vld [vmem:[%s33 + $0x470] sm:$0xff]
    %v2121 = vld [vmem:[%s33 + $0x478] sm:$0xff]
    %v2122 = vld [vmem:[%s33 + $0x480] sm:$0xff]
    %v2123 = vld [vmem:[%s33 + $0x488] sm:$0xff]
    %v2124 = vld [vmem:[%s33 + $0x490] sm:$0xff]
    %v2125 = vld [vmem:[%s33 + $0x498] sm:$0xff]
    %v2126 = vld [vmem:[%s33 + $0x4a0] sm:$0xff]
    %v2127 = vld [vmem:[%s33 + $0x4a8] sm:$0xff]
    %v2128 = vld [vmem:[%s33 + $0x4b0] sm:$0xff]
    %v2129 = vld [vmem:[%s33 + $0x4b8] sm:$0xff]
    %v2130 = vld [vmem:[%s33 + $0x4c0] sm:$0xff]
    %v2131 = vld [vmem:[%s33 + $0x4c8] sm:$0xff]
    %v2132 = vld [vmem:[%s33 + $0x4d0] sm:$0xff]
    %v2133 = vld [vmem:[%s33 + $0x4d8] sm:$0xff]
    %v2134 = vld [vmem:[%s33 + $0x4e0] sm:$0xff]
    %v2135 = vld [vmem:[%s33 + $0x4e8] sm:$0xff]
    %v2136 = vld [vmem:[%s33 + $0x4f0] sm:$0xff]
    %v2137 = vld [vmem:[%s33 + $0x4f8] sm:$0xff]
    %v2138 = vld [vmem:[%s33 + $0x500] sm:$0xff]
    %v2139 = vld [vmem:[%s33 + $0x508] sm:$0xff]
    %v2140 = vld [vmem:[%s33 + $0x510] sm:$0xff]
    %v2141 = vld [vmem:[%s33 + $0x518] sm:$0xff]
    %v2142 = vld [vmem:[%s33 + $0x520] sm:$0xff]
    %v2143 = vld [vmem:[%s33 + $0x528] sm:$0xff]
    %v2144 = vld [vmem:[%s33 + $0x530] sm:$0xff]
    %v2145 = vld [vmem:[%s33 + $0x538] sm:$0xff]
    %v2146 = vld [vmem:[%s33 + $0x540] sm:$0xff]
    %v2147 = vld [vmem:[%s33 + $0x548] sm:$0xff]
    %v2148 = vld [vmem:[%s33 + $0x550] sm:$0xff]
    %v2149 = vld [vmem:[%s33 + $0x558] sm:$0xff]
    %v2150 = vld [vmem:[%s33 + $0x560] sm:$0xff]
    %v2151 = vld [vmem:[%s33 + $0x568] sm:$0xff]
    %v2152 = vld [vmem:[%s33 + $0x570] sm:$0xff]
    %v2153 = vld [vmem:[%s33 + $0x578] sm:$0xff]
    %v2154 = vld [vmem:[%s33 + $0x580] sm:$0xff]
    %v2155 = vld [vmem:[%s33 + $0x588] sm:$0xff]
    %v2156 = vld [vmem:[%s33 + $0x590] sm:$0xff]
    %v2157 = vld [vmem:[%s33 + $0x598] sm:$0xff]
    %v2158 = vld [vmem:[%s33 + $0x5a0] sm:$0xff]
    %v2159 = vld [vmem:[%s33 + $0x5a8] sm:$0xff]
    %v2160 = vld [vmem:[%s33 + $0x5b0] sm:$0xff]
    %v2161 = vld [vmem:[%s33 + $0x5b8] sm:$0xff]
    %v2162 = vld [vmem:[%s33 + $0x5c0] sm:$0xff]
    %v2163 = vld [vmem:[%s33 + $0x5c8] sm:$0xff]
    %v2164 = vld [vmem:[%s33 + $0x5d0] sm:$0xff]
    %v2165 = vld [vmem:[%s33 + $0x5d8] sm:$0xff]
    %v2166 = vld [vmem:[%s33 + $0x5e0] sm:$0xff]
    %v2167 = vld [vmem:[%s33 + $0x5e8] sm:$0xff]
    %v2168 = vld [vmem:[%s33 + $0x5f0] sm:$0xff]
    %v2169 = vld [vmem:[%s33 + $0x5f8] sm:$0xff]
    %v2170 = vld [vmem:[%s35] sm:$0xff]
    %v2171 = vld [vmem:[%s35 + $0x8] sm:$0xff]
    %v2174 = vlaneseq
    %v2175 = vshrl.u32 %v2174, 7
    %v2176 = vsub.s32 0, %v2175
    %v2177 = vrot.slane %v2170, %v2176
    %v2178 = vlaneseq
    %v2179 = vshrl.u32 %v2178, 7
    %v2180 = vsub.s32 1, %v2179
    %v2181 = vrot.slane %v2170, %v2180
    %v2182 = vlaneseq
    %v2183 = vshrl.u32 %v2182, 7
    %v2184 = vsub.s32 2, %v2183
    %v2185 = vrot.slane %v2170, %v2184
    %v2186 = vlaneseq
    %v2187 = vshrl.u32 %v2186, 7
    %v2188 = vsub.s32 3, %v2187
    %v2189 = vrot.slane %v2170, %v2188
    %v2190 = vlaneseq
    %v2191 = vshrl.u32 %v2190, 7
    %v2192 = vsub.s32 4, %v2191
    %v2193 = vrot.slane %v2170, %v2192
    %v2194 = vlaneseq
    %v2195 = vshrl.u32 %v2194, 7
    %v2196 = vsub.s32 5, %v2195
    %v2197 = vrot.slane %v2170, %v2196
    %v2198 = vlaneseq
    %v2199 = vshrl.u32 %v2198, 7
    %v2200 = vsub.s32 6, %v2199
    %v2201 = vrot.slane %v2170, %v2200
    %v2202 = vlaneseq
    %v2203 = vshrl.u32 %v2202, 7
    %v2204 = vsub.s32 7, %v2203
    %v2205 = vrot.slane %v2170, %v2204
    %v2206 = vlaneseq
    %v2207 = vshrl.u32 %v2206, 7
    %v2208 = vsub.s32 0, %v2207
    %v2209 = vrot.slane %v2171, %v2208
    %v2210 = vlaneseq
    %v2211 = vshrl.u32 %v2210, 7
    %v2212 = vsub.s32 1, %v2211
    %v2213 = vrot.slane %v2171, %v2212
    %v2214 = vlaneseq
    %v2215 = vshrl.u32 %v2214, 7
    %v2216 = vsub.s32 2, %v2215
    %v2217 = vrot.slane %v2171, %v2216
    %v2218 = vlaneseq
    %v2219 = vshrl.u32 %v2218, 7
    %v2220 = vsub.s32 3, %v2219
    %v2221 = vrot.slane %v2171, %v2220
    %v2222 = vlaneseq
    %v2223 = vshrl.u32 %v2222, 7
    %v2224 = vsub.s32 4, %v2223
    %v2225 = vrot.slane %v2171, %v2224
    %v2226 = vlaneseq
    %v2227 = vshrl.u32 %v2226, 7
    %v2228 = vsub.s32 5, %v2227
    %v2229 = vrot.slane %v2171, %v2228
    %v2230 = vlaneseq
    %v2231 = vshrl.u32 %v2230, 7
    %v2232 = vsub.s32 6, %v2231
    %v2233 = vrot.slane %v2171, %v2232
    %v2234 = vlaneseq
    %v2235 = vshrl.u32 %v2234, 7
    %v2236 = vsub.s32 7, %v2235
    %v2237 = vrot.slane %v2171, %v2236
    %v2262 = vrot.slane %v1971, 7
    %v2263 = vsel %vm307, %v2262, %v1970
    %v2264 = vrot.slane %v1972, 6
    %v2265 = vsel %vm309, %v2264, %v2263
    %v2266 = vrot.slane %v1973, 5
    %v2267 = vsel %vm311, %v2266, %v2265
    %v2268 = vrot.slane %v1974, 4
    %v2269 = vsel %vm313, %v2268, %v2267
    %v2270 = vrot.slane %v1975, 3
    %v2271 = vsel %vm315, %v2270, %v2269
    %v2272 = vrot.slane %v1976, 2
    %v2273 = vsel %vm317, %v2272, %v2271
    %v2274 = vrot.slane %v1977, 1
    %v2275 = vsel %vm319, %v2274, %v2273
    %v2276 = vsel %vm222, %v2275, 0
    %2278 = vmatprep.subr.mxu0 0.0
    %2279 = vmatpush1.msra.mxu0 0.0
    %2280 = vmatprep.subr.mxu0 0.0
    %2281 = vmatpush1.msra.mxu0 0.0
    %2282 = vmatprep.subr.mxu0 0.0
    %2283 = vmatpush1.msra.mxu0 0.0
    %2284 = vmatprep.subr.mxu0 0.0
    %2285 = vmatpush1.msra.mxu0 0.0
    %2286 = vmatprep.subr.mxu0 %v2155
    %2287 = vmatpush1.msra.mxu0 %v2154
    %2288 = vmatprep.subr.mxu0 %v2139
    %2289 = vmatpush1.msra.mxu0 %v2138
    %2290 = vmatprep.subr.mxu0 %v2123
    %2291 = vmatpush1.msra.mxu0 %v2122
    %2292 = vmatprep.subr.mxu0 %v2107
    %2293 = vmatpush1.msra.mxu0 %v2106
    %2294 = vmatprep.subr.mxu0 %v2091
    %2295 = vmatpush1.msra.mxu0 %v2090
    %2296 = vmatprep.subr.mxu0 %v2075
    %2297 = vmatpush1.msra.mxu0 %v2074
    %2298 = vmatprep.subr.mxu0 %v2059
    %2299 = vmatpush1.msra.mxu0 %v2058
    %2300 = vmatprep.subr.mxu0 %v2043
    %2301 = vmatpush1.msra.mxu0 %v2042
    %2302 = vmatprep.subr.mxu0 %v2027
    %2303 = vmatpush1.msra.mxu0 %v2026
    %2304 = vmatprep.subr.mxu0 %v2011
    %2305 = vmatpush1.msra.mxu0 %v2010
    %2306 = vmatprep.subr.mxu0 %v1995
    %2307 = vmatpush1.msra.mxu0 %v1994
    %2308 = vmatprep.subr.mxu0 %v1979
    %2309 = vmatpush1.msra.mxu0 %v1978
    %2310 = vmatprep.subr.mxu0 0.0
    %2311 = vmatpush2.msra.mxu0 0.0
    %2312 = vmatprep.subr.mxu0 0.0
    %2313 = vmatpush2.msra.mxu0 0.0
    %2314 = vmatprep.subr.mxu0 0.0
    %2315 = vmatpush2.msra.mxu0 0.0
    %2316 = vmatprep.subr.mxu0 0.0
    %2317 = vmatpush2.msra.mxu0 0.0
    %2318 = vmatprep.subr.mxu0 0.0
    %2319 = vmatpush2.msra.mxu0 0.0
    %2320 = vmatprep.subr.mxu0 0.0
    %2321 = vmatpush2.msra.mxu0 0.0
    %2322 = vmatprep.subr.mxu0 0.0
    %2323 = vmatpush2.msra.mxu0 0.0
    %2324 = vmatprep.subr.mxu0 0.0
    %2325 = vmatpush2.msra.mxu0 0.0
    %2326 = vmatprep.subr.mxu0 0.0
    %2327 = vmatpush2.msra.mxu0 0.0
    %2328 = vmatprep.subr.mxu0 0.0
    %2329 = vmatpush2.msra.mxu0 0.0
    %2330 = vmatprep.subr.mxu0 0.0
    %2331 = vmatpush2.msra.mxu0 0.0
    %2332 = vmatprep.subr.mxu0 0.0
    %2333 = vmatpush2.msra.mxu0 0.0
    %2334 = vmatprep.subr.mxu0 0.0
    %2335 = vmatpush2.msra.mxu0 0.0
    %2336 = vmatprep.subr.mxu0 0.0
    %2337 = vmatpush2.msra.mxu0 0.0
    %2338 = vmatprep.subr.mxu0 0.0
    %2339 = vmatpush2.msra.mxu0 0.0
    %2340 = vmatprep.subr.mxu0 0.0
    %2341 = vmatpush2.msra.mxu0 0.0
    %2342 = vmatprep.mubr.f32.mxu0 0.0
    %2343 = vmatmul.mubr.f32.gmra.mxu0 %v2276
    %v2344 = vpop.f32.mrf.mxu0
    %v2345 = vadd.f32 %v2177, %v2344
    %v2346 = vpop.f32.mrf.mxu0
    %v2347 = vadd.f32 %v2181, %v2346
    %2348 = vdwg.mxu0
    %2349 = vmatprep.subr.mxu0 0.0
    %2350 = vmatpush1.msra.mxu0 0.0
    %2351 = vmatprep.subr.mxu0 0.0
    %2352 = vmatpush1.msra.mxu0 0.0
    %2353 = vmatprep.subr.mxu0 0.0
    %2354 = vmatpush1.msra.mxu0 0.0
    %2355 = vmatprep.subr.mxu0 0.0
    %2356 = vmatpush1.msra.mxu0 0.0
    %2357 = vmatprep.subr.mxu0 %v2157
    %2358 = vmatpush1.msra.mxu0 %v2156
    %2359 = vmatprep.subr.mxu0 %v2141
    %2360 = vmatpush1.msra.mxu0 %v2140
    %2361 = vmatprep.subr.mxu0 %v2125
    %2362 = vmatpush1.msra.mxu0 %v2124
    %2363 = vmatprep.subr.mxu0 %v2109
    %2364 = vmatpush1.msra.mxu0 %v2108
    %2365 = vmatprep.subr.mxu0 %v2093
    %2366 = vmatpush1.msra.mxu0 %v2092
    %2367 = vmatprep.subr.mxu0 %v2077
    %2368 = vmatpush1.msra.mxu0 %v2076
    %2369 = vmatprep.subr.mxu0 %v2061
    %2370 = vmatpush1.msra.mxu0 %v2060
    %2371 = vmatprep.subr.mxu0 %v2045
    %2372 = vmatpush1.msra.mxu0 %v2044
    %2373 = vmatprep.subr.mxu0 %v2029
    %2374 = vmatpush1.msra.mxu0 %v2028
    %2375 = vmatprep.subr.mxu0 %v2013
    %2376 = vmatpush1.msra.mxu0 %v2012
    %2377 = vmatprep.subr.mxu0 %v1997
    %2378 = vmatpush1.msra.mxu0 %v1996
    %2379 = vmatprep.subr.mxu0 %v1981
    %2380 = vmatpush1.msra.mxu0 %v1980
    %2381 = vmatprep.subr.mxu0 0.0
    %2382 = vmatpush2.msra.mxu0 0.0
    %2383 = vmatprep.subr.mxu0 0.0
    %2384 = vmatpush2.msra.mxu0 0.0
    %2385 = vmatprep.subr.mxu0 0.0
    %2386 = vmatpush2.msra.mxu0 0.0
    %2387 = vmatprep.subr.mxu0 0.0
    %2388 = vmatpush2.msra.mxu0 0.0
    %2389 = vmatprep.subr.mxu0 0.0
    %2390 = vmatpush2.msra.mxu0 0.0
    %2391 = vmatprep.subr.mxu0 0.0
    %2392 = vmatpush2.msra.mxu0 0.0
    %2393 = vmatprep.subr.mxu0 0.0
    %2394 = vmatpush2.msra.mxu0 0.0
    %2395 = vmatprep.subr.mxu0 0.0
    %2396 = vmatpush2.msra.mxu0 0.0
    %2397 = vmatprep.subr.mxu0 0.0
    %2398 = vmatpush2.msra.mxu0 0.0
    %2399 = vmatprep.subr.mxu0 0.0
    %2400 = vmatpush2.msra.mxu0 0.0
    %2401 = vmatprep.subr.mxu0 0.0
    %2402 = vmatpush2.msra.mxu0 0.0
    %2403 = vmatprep.subr.mxu0 0.0
    %2404 = vmatpush2.msra.mxu0 0.0
    %2405 = vmatprep.subr.mxu0 0.0
    %2406 = vmatpush2.msra.mxu0 0.0
    %2407 = vmatprep.subr.mxu0 0.0
    %2408 = vmatpush2.msra.mxu0 0.0
    %2409 = vmatprep.subr.mxu0 0.0
    %2410 = vmatpush2.msra.mxu0 0.0
    %2411 = vmatprep.subr.mxu0 0.0
    %2412 = vmatpush2.msra.mxu0 0.0
    %2413 = vmatprep.mubr.f32.mxu0 0.0
    %2414 = vmatmul.mubr.f32.gmra.mxu0 %v2276
    %v2415 = vpop.f32.mrf.mxu0
    %v2416 = vadd.f32 %v2185, %v2415
    %v2417 = vpop.f32.mrf.mxu0
    %v2418 = vadd.f32 %v2189, %v2417
    %2419 = vdwg.mxu0
    %2420 = vmatprep.subr.mxu0 0.0
    %2421 = vmatpush1.msra.mxu0 0.0
    %2422 = vmatprep.subr.mxu0 0.0
    %2423 = vmatpush1.msra.mxu0 0.0
    %2424 = vmatprep.subr.mxu0 0.0
    %2425 = vmatpush1.msra.mxu0 0.0
    %2426 = vmatprep.subr.mxu0 0.0
    %2427 = vmatpush1.msra.mxu0 0.0
    %2428 = vmatprep.subr.mxu0 %v2159
    %2429 = vmatpush1.msra.mxu0 %v2158
    %2430 = vmatprep.subr.mxu0 %v2143
    %2431 = vmatpush1.msra.mxu0 %v2142
    %2432 = vmatprep.subr.mxu0 %v2127
    %2433 = vmatpush1.msra.mxu0 %v2126
    %2434 = vmatprep.subr.mxu0 %v2111
    %2435 = vmatpush1.msra.mxu0 %v2110
    %2436 = vmatprep.subr.mxu0 %v2095
    %2437 = vmatpush1.msra.mxu0 %v2094
    %2438 = vmatprep.subr.mxu0 %v2079
    %2439 = vmatpush1.msra.mxu0 %v2078
    %2440 = vmatprep.subr.mxu0 %v2063
    %2441 = vmatpush1.msra.mxu0 %v2062
    %2442 = vmatprep.subr.mxu0 %v2047
    %2443 = vmatpush1.msra.mxu0 %v2046
    %2444 = vmatprep.subr.mxu0 %v2031
    %2445 = vmatpush1.msra.mxu0 %v2030
    %2446 = vmatprep.subr.mxu0 %v2015
    %2447 = vmatpush1.msra.mxu0 %v2014
    %2448 = vmatprep.subr.mxu0 %v1999
    %2449 = vmatpush1.msra.mxu0 %v1998
    %2450 = vmatprep.subr.mxu0 %v1983
    %2451 = vmatpush1.msra.mxu0 %v1982
    %2452 = vmatprep.subr.mxu0 0.0
    %2453 = vmatpush2.msra.mxu0 0.0
    %2454 = vmatprep.subr.mxu0 0.0
    %2455 = vmatpush2.msra.mxu0 0.0
    %2456 = vmatprep.subr.mxu0 0.0
    %2457 = vmatpush2.msra.mxu0 0.0
    %2458 = vmatprep.subr.mxu0 0.0
    %2459 = vmatpush2.msra.mxu0 0.0
    %2460 = vmatprep.subr.mxu0 0.0
    %2461 = vmatpush2.msra.mxu0 0.0
    %2462 = vmatprep.subr.mxu0 0.0
    %2463 = vmatpush2.msra.mxu0 0.0
    %2464 = vmatprep.subr.mxu0 0.0
    %2465 = vmatpush2.msra.mxu0 0.0
    %2466 = vmatprep.subr.mxu0 0.0
    %2467 = vmatpush2.msra.mxu0 0.0
    %2468 = vmatprep.subr.mxu0 0.0
    %2469 = vmatpush2.msra.mxu0 0.0
    %2470 = vmatprep.subr.mxu0 0.0
    %2471 = vmatpush2.msra.mxu0 0.0
    %2472 = vmatprep.subr.mxu0 0.0
    %2473 = vmatpush2.msra.mxu0 0.0
    %2474 = vmatprep.subr.mxu0 0.0
    %2475 = vmatpush2.msra.mxu0 0.0
    %2476 = vmatprep.subr.mxu0 0.0
    %2477 = vmatpush2.msra.mxu0 0.0
    %2478 = vmatprep.subr.mxu0 0.0
    %2479 = vmatpush2.msra.mxu0 0.0
    %2480 = vmatprep.subr.mxu0 0.0
    %2481 = vmatpush2.msra.mxu0 0.0
    %2482 = vmatprep.subr.mxu0 0.0
    %2483 = vmatpush2.msra.mxu0 0.0
    %2484 = vmatprep.mubr.f32.mxu0 0.0
    %2485 = vmatmul.mubr.f32.gmra.mxu0 %v2276
    %v2486 = vpop.f32.mrf.mxu0
    %v2487 = vadd.f32 %v2193, %v2486
    %v2488 = vpop.f32.mrf.mxu0
    %v2489 = vadd.f32 %v2197, %v2488
    %2490 = vdwg.mxu0
    %2491 = vmatprep.subr.mxu0 0.0
    %2492 = vmatpush1.msra.mxu0 0.0
    %2493 = vmatprep.subr.mxu0 0.0
    %2494 = vmatpush1.msra.mxu0 0.0
    %2495 = vmatprep.subr.mxu0 0.0
    %2496 = vmatpush1.msra.mxu0 0.0
    %2497 = vmatprep.subr.mxu0 0.0
    %2498 = vmatpush1.msra.mxu0 0.0
    %2499 = vmatprep.subr.mxu0 %v2161
    %2500 = vmatpush1.msra.mxu0 %v2160
    %2501 = vmatprep.subr.mxu0 %v2145
    %2502 = vmatpush1.msra.mxu0 %v2144
    %2503 = vmatprep.subr.mxu0 %v2129
    %2504 = vmatpush1.msra.mxu0 %v2128
    %2505 = vmatprep.subr.mxu0 %v2113
    %2506 = vmatpush1.msra.mxu0 %v2112
    %2507 = vmatprep.subr.mxu0 %v2097
    %2508 = vmatpush1.msra.mxu0 %v2096
    %2509 = vmatprep.subr.mxu0 %v2081
    %2510 = vmatpush1.msra.mxu0 %v2080
    %2511 = vmatprep.subr.mxu0 %v2065
    %2512 = vmatpush1.msra.mxu0 %v2064
    %2513 = vmatprep.subr.mxu0 %v2049
    %2514 = vmatpush1.msra.mxu0 %v2048
    %2515 = vmatprep.subr.mxu0 %v2033
    %2516 = vmatpush1.msra.mxu0 %v2032
    %2517 = vmatprep.subr.mxu0 %v2017
    %2518 = vmatpush1.msra.mxu0 %v2016
    %2519 = vmatprep.subr.mxu0 %v2001
    %2520 = vmatpush1.msra.mxu0 %v2000
    %2521 = vmatprep.subr.mxu0 %v1985
    %2522 = vmatpush1.msra.mxu0 %v1984
    %2523 = vmatprep.subr.mxu0 0.0
    %2524 = vmatpush2.msra.mxu0 0.0
    %2525 = vmatprep.subr.mxu0 0.0
    %2526 = vmatpush2.msra.mxu0 0.0
    %2527 = vmatprep.subr.mxu0 0.0
    %2528 = vmatpush2.msra.mxu0 0.0
    %2529 = vmatprep.subr.mxu0 0.0
    %2530 = vmatpush2.msra.mxu0 0.0
    %2531 = vmatprep.subr.mxu0 0.0
    %2532 = vmatpush2.msra.mxu0 0.0
    %2533 = vmatprep.subr.mxu0 0.0
    %2534 = vmatpush2.msra.mxu0 0.0
    %2535 = vmatprep.subr.mxu0 0.0
    %2536 = vmatpush2.msra.mxu0 0.0
    %2537 = vmatprep.subr.mxu0 0.0
    %2538 = vmatpush2.msra.mxu0 0.0
    %2539 = vmatprep.subr.mxu0 0.0
    %2540 = vmatpush2.msra.mxu0 0.0
    %2541 = vmatprep.subr.mxu0 0.0
    %2542 = vmatpush2.msra.mxu0 0.0
    %2543 = vmatprep.subr.mxu0 0.0
    %2544 = vmatpush2.msra.mxu0 0.0
    %2545 = vmatprep.subr.mxu0 0.0
    %2546 = vmatpush2.msra.mxu0 0.0
    %2547 = vmatprep.subr.mxu0 0.0
    %2548 = vmatpush2.msra.mxu0 0.0
    %2549 = vmatprep.subr.mxu0 0.0
    %2550 = vmatpush2.msra.mxu0 0.0
    %2551 = vmatprep.subr.mxu0 0.0
    %2552 = vmatpush2.msra.mxu0 0.0
    %2553 = vmatprep.subr.mxu0 0.0
    %2554 = vmatpush2.msra.mxu0 0.0
    %2555 = vmatprep.mubr.f32.mxu0 0.0
    %2556 = vmatmul.mubr.f32.gmra.mxu0 %v2276
    %v2557 = vpop.f32.mrf.mxu0
    %v2558 = vadd.f32 %v2201, %v2557
    %v2559 = vpop.f32.mrf.mxu0
    %v2560 = vadd.f32 %v2205, %v2559
    %2561 = vdwg.mxu0
    %2562 = vmatprep.subr.mxu0 0.0
    %2563 = vmatpush1.msra.mxu0 0.0
    %2564 = vmatprep.subr.mxu0 0.0
    %2565 = vmatpush1.msra.mxu0 0.0
    %2566 = vmatprep.subr.mxu0 0.0
    %2567 = vmatpush1.msra.mxu0 0.0
    %2568 = vmatprep.subr.mxu0 0.0
    %2569 = vmatpush1.msra.mxu0 0.0
    %2570 = vmatprep.subr.mxu0 %v2163
    %2571 = vmatpush1.msra.mxu0 %v2162
    %2572 = vmatprep.subr.mxu0 %v2147
    %2573 = vmatpush1.msra.mxu0 %v2146
    %2574 = vmatprep.subr.mxu0 %v2131
    %2575 = vmatpush1.msra.mxu0 %v2130
    %2576 = vmatprep.subr.mxu0 %v2115
    %2577 = vmatpush1.msra.mxu0 %v2114
    %2578 = vmatprep.subr.mxu0 %v2099
    %2579 = vmatpush1.msra.mxu0 %v2098
    %2580 = vmatprep.subr.mxu0 %v2083
    %2581 = vmatpush1.msra.mxu0 %v2082
    %2582 = vmatprep.subr.mxu0 %v2067
    %2583 = vmatpush1.msra.mxu0 %v2066
    %2584 = vmatprep.subr.mxu0 %v2051
    %2585 = vmatpush1.msra.mxu0 %v2050
    %2586 = vmatprep.subr.mxu0 %v2035
    %2587 = vmatpush1.msra.mxu0 %v2034
    %2588 = vmatprep.subr.mxu0 %v2019
    %2589 = vmatpush1.msra.mxu0 %v2018
    %2590 = vmatprep.subr.mxu0 %v2003
    %2591 = vmatpush1.msra.mxu0 %v2002
    %2592 = vmatprep.subr.mxu0 %v1987
    %2593 = vmatpush1.msra.mxu0 %v1986
    %2594 = vmatprep.subr.mxu0 0.0
    %2595 = vmatpush2.msra.mxu0 0.0
    %2596 = vmatprep.subr.mxu0 0.0
    %2597 = vmatpush2.msra.mxu0 0.0
    %2598 = vmatprep.subr.mxu0 0.0
    %2599 = vmatpush2.msra.mxu0 0.0
    %2600 = vmatprep.subr.mxu0 0.0
    %2601 = vmatpush2.msra.mxu0 0.0
    %2602 = vmatprep.subr.mxu0 0.0
    %2603 = vmatpush2.msra.mxu0 0.0
    %2604 = vmatprep.subr.mxu0 0.0
    %2605 = vmatpush2.msra.mxu0 0.0
    %2606 = vmatprep.subr.mxu0 0.0
    %2607 = vmatpush2.msra.mxu0 0.0
    %2608 = vmatprep.subr.mxu0 0.0
    %2609 = vmatpush2.msra.mxu0 0.0
    %2610 = vmatprep.subr.mxu0 0.0
    %2611 = vmatpush2.msra.mxu0 0.0
    %2612 = vmatprep.subr.mxu0 0.0
    %2613 = vmatpush2.msra.mxu0 0.0
    %2614 = vmatprep.subr.mxu0 0.0
    %2615 = vmatpush2.msra.mxu0 0.0
    %2616 = vmatprep.subr.mxu0 0.0
    %2617 = vmatpush2.msra.mxu0 0.0
    %2618 = vmatprep.subr.mxu0 0.0
    %2619 = vmatpush2.msra.mxu0 0.0
    %2620 = vmatprep.subr.mxu0 0.0
    %2621 = vmatpush2.msra.mxu0 0.0
    %2622 = vmatprep.subr.mxu0 0.0
    %2623 = vmatpush2.msra.mxu0 0.0
    %2624 = vmatprep.subr.mxu0 0.0
    %2625 = vmatpush2.msra.mxu0 0.0
    %2626 = vmatprep.mubr.f32.mxu0 0.0
    %2627 = vmatmul.mubr.f32.gmra.mxu0 %v2276
    %v2628 = vpop.f32.mrf.mxu0
    %v2629 = vadd.f32 %v2209, %v2628
    %v2630 = vpop.f32.mrf.mxu0
    %v2631 = vadd.f32 %v2213, %v2630
    %2632 = vdwg.mxu0
    %2633 = vmatprep.subr.mxu0 0.0
    %2634 = vmatpush1.msra.mxu0 0.0
    %2635 = vmatprep.subr.mxu0 0.0
    %2636 = vmatpush1.msra.mxu0 0.0
    %2637 = vmatprep.subr.mxu0 0.0
    %2638 = vmatpush1.msra.mxu0 0.0
    %2639 = vmatprep.subr.mxu0 0.0
    %2640 = vmatpush1.msra.mxu0 0.0
    %2641 = vmatprep.subr.mxu0 %v2165
    %2642 = vmatpush1.msra.mxu0 %v2164
    %2643 = vmatprep.subr.mxu0 %v2149
    %2644 = vmatpush1.msra.mxu0 %v2148
    %2645 = vmatprep.subr.mxu0 %v2133
    %2646 = vmatpush1.msra.mxu0 %v2132
    %2647 = vmatprep.subr.mxu0 %v2117
    %2648 = vmatpush1.msra.mxu0 %v2116
    %2649 = vmatprep.subr.mxu0 %v2101
    %2650 = vmatpush1.msra.mxu0 %v2100
    %2651 = vmatprep.subr.mxu0 %v2085
    %2652 = vmatpush1.msra.mxu0 %v2084
    %2653 = vmatprep.subr.mxu0 %v2069
    %2654 = vmatpush1.msra.mxu0 %v2068
    %2655 = vmatprep.subr.mxu0 %v2053
    %2656 = vmatpush1.msra.mxu0 %v2052
    %2657 = vmatprep.subr.mxu0 %v2037
    %2658 = vmatpush1.msra.mxu0 %v2036
    %2659 = vmatprep.subr.mxu0 %v2021
    %2660 = vmatpush1.msra.mxu0 %v2020
    %2661 = vmatprep.subr.mxu0 %v2005
    %2662 = vmatpush1.msra.mxu0 %v2004
    %2663 = vmatprep.subr.mxu0 %v1989
    %2664 = vmatpush1.msra.mxu0 %v1988
    %2665 = vmatprep.subr.mxu0 0.0
    %2666 = vmatpush2.msra.mxu0 0.0
    %2667 = vmatprep.subr.mxu0 0.0
    %2668 = vmatpush2.msra.mxu0 0.0
    %2669 = vmatprep.subr.mxu0 0.0
    %2670 = vmatpush2.msra.mxu0 0.0
    %2671 = vmatprep.subr.mxu0 0.0
    %2672 = vmatpush2.msra.mxu0 0.0
    %2673 = vmatprep.subr.mxu0 0.0
    %2674 = vmatpush2.msra.mxu0 0.0
    %2675 = vmatprep.subr.mxu0 0.0
    %2676 = vmatpush2.msra.mxu0 0.0
    %2677 = vmatprep.subr.mxu0 0.0
    %2678 = vmatpush2.msra.mxu0 0.0
    %2679 = vmatprep.subr.mxu0 0.0
    %2680 = vmatpush2.msra.mxu0 0.0
    %2681 = vmatprep.subr.mxu0 0.0
    %2682 = vmatpush2.msra.mxu0 0.0
    %2683 = vmatprep.subr.mxu0 0.0
    %2684 = vmatpush2.msra.mxu0 0.0
    %2685 = vmatprep.subr.mxu0 0.0
    %2686 = vmatpush2.msra.mxu0 0.0
    %2687 = vmatprep.subr.mxu0 0.0
    %2688 = vmatpush2.msra.mxu0 0.0
    %2689 = vmatprep.subr.mxu0 0.0
    %2690 = vmatpush2.msra.mxu0 0.0
    %2691 = vmatprep.subr.mxu0 0.0
    %2692 = vmatpush2.msra.mxu0 0.0
    %2693 = vmatprep.subr.mxu0 0.0
    %2694 = vmatpush2.msra.mxu0 0.0
    %2695 = vmatprep.subr.mxu0 0.0
    %2696 = vmatpush2.msra.mxu0 0.0
    %2697 = vmatprep.mubr.f32.mxu0 0.0
    %2698 = vmatmul.mubr.f32.gmra.mxu0 %v2276
    %v2699 = vpop.f32.mrf.mxu0
    %v2700 = vadd.f32 %v2217, %v2699
    %v2701 = vpop.f32.mrf.mxu0
    %v2702 = vadd.f32 %v2221, %v2701
    %2703 = vdwg.mxu0
    %2704 = vmatprep.subr.mxu0 0.0
    %2705 = vmatpush1.msra.mxu0 0.0
    %2706 = vmatprep.subr.mxu0 0.0
    %2707 = vmatpush1.msra.mxu0 0.0
    %2708 = vmatprep.subr.mxu0 0.0
    %2709 = vmatpush1.msra.mxu0 0.0
    %2710 = vmatprep.subr.mxu0 0.0
    %2711 = vmatpush1.msra.mxu0 0.0
    %2712 = vmatprep.subr.mxu0 %v2167
    %2713 = vmatpush1.msra.mxu0 %v2166
    %2714 = vmatprep.subr.mxu0 %v2151
    %2715 = vmatpush1.msra.mxu0 %v2150
    %2716 = vmatprep.subr.mxu0 %v2135
    %2717 = vmatpush1.msra.mxu0 %v2134
    %2718 = vmatprep.subr.mxu0 %v2119
    %2719 = vmatpush1.msra.mxu0 %v2118
    %2720 = vmatprep.subr.mxu0 %v2103
    %2721 = vmatpush1.msra.mxu0 %v2102
    %2722 = vmatprep.subr.mxu0 %v2087
    %2723 = vmatpush1.msra.mxu0 %v2086
    %2724 = vmatprep.subr.mxu0 %v2071
    %2725 = vmatpush1.msra.mxu0 %v2070
    %2726 = vmatprep.subr.mxu0 %v2055
    %2727 = vmatpush1.msra.mxu0 %v2054
    %2728 = vmatprep.subr.mxu0 %v2039
    %2729 = vmatpush1.msra.mxu0 %v2038
    %2730 = vmatprep.subr.mxu0 %v2023
    %2731 = vmatpush1.msra.mxu0 %v2022
    %2732 = vmatprep.subr.mxu0 %v2007
    %2733 = vmatpush1.msra.mxu0 %v2006
    %2734 = vmatprep.subr.mxu0 %v1991
    %2735 = vmatpush1.msra.mxu0 %v1990
    %2736 = vmatprep.subr.mxu0 0.0
    %2737 = vmatpush2.msra.mxu0 0.0
    %2738 = vmatprep.subr.mxu0 0.0
    %2739 = vmatpush2.msra.mxu0 0.0
    %2740 = vmatprep.subr.mxu0 0.0
    %2741 = vmatpush2.msra.mxu0 0.0
    %2742 = vmatprep.subr.mxu0 0.0
    %2743 = vmatpush2.msra.mxu0 0.0
    %2744 = vmatprep.subr.mxu0 0.0
    %2745 = vmatpush2.msra.mxu0 0.0
    %2746 = vmatprep.subr.mxu0 0.0
    %2747 = vmatpush2.msra.mxu0 0.0
    %2748 = vmatprep.subr.mxu0 0.0
    %2749 = vmatpush2.msra.mxu0 0.0
    %2750 = vmatprep.subr.mxu0 0.0
    %2751 = vmatpush2.msra.mxu0 0.0
    %2752 = vmatprep.subr.mxu0 0.0
    %2753 = vmatpush2.msra.mxu0 0.0
    %2754 = vmatprep.subr.mxu0 0.0
    %2755 = vmatpush2.msra.mxu0 0.0
    %2756 = vmatprep.subr.mxu0 0.0
    %2757 = vmatpush2.msra.mxu0 0.0
    %2758 = vmatprep.subr.mxu0 0.0
    %2759 = vmatpush2.msra.mxu0 0.0
    %2760 = vmatprep.subr.mxu0 0.0
    %2761 = vmatpush2.msra.mxu0 0.0
    %2762 = vmatprep.subr.mxu0 0.0
    %2763 = vmatpush2.msra.mxu0 0.0
    %2764 = vmatprep.subr.mxu0 0.0
    %2765 = vmatpush2.msra.mxu0 0.0
    %2766 = vmatprep.subr.mxu0 0.0
    %2767 = vmatpush2.msra.mxu0 0.0
    %2768 = vmatprep.mubr.f32.mxu0 0.0
    %2769 = vmatmul.mubr.f32.gmra.mxu0 %v2276
    %v2770 = vpop.f32.mrf.mxu0
    %v2771 = vadd.f32 %v2225, %v2770
    %v2772 = vpop.f32.mrf.mxu0
    %v2773 = vadd.f32 %v2229, %v2772
    %2774 = vdwg.mxu0
    %2775 = vmatprep.subr.mxu0 0.0
    %2776 = vmatpush1.msra.mxu0 0.0
    %2777 = vmatprep.subr.mxu0 0.0
    %2778 = vmatpush1.msra.mxu0 0.0
    %2779 = vmatprep.subr.mxu0 0.0
    %2780 = vmatpush1.msra.mxu0 0.0
    %2781 = vmatprep.subr.mxu0 0.0
    %2782 = vmatpush1.msra.mxu0 0.0
    %2783 = vmatprep.subr.mxu0 %v2169
    %2784 = vmatpush1.msra.mxu0 %v2168
    %2785 = vmatprep.subr.mxu0 %v2153
    %2786 = vmatpush1.msra.mxu0 %v2152
    %2787 = vmatprep.subr.mxu0 %v2137
    %2788 = vmatpush1.msra.mxu0 %v2136
    %2789 = vmatprep.subr.mxu0 %v2121
    %2790 = vmatpush1.msra.mxu0 %v2120
    %2791 = vmatprep.subr.mxu0 %v2105
    %2792 = vmatpush1.msra.mxu0 %v2104
    %2793 = vmatprep.subr.mxu0 %v2089
    %2794 = vmatpush1.msra.mxu0 %v2088
    %2795 = vmatprep.subr.mxu0 %v2073
    %2796 = vmatpush1.msra.mxu0 %v2072
    %2797 = vmatprep.subr.mxu0 %v2057
    %2798 = vmatpush1.msra.mxu0 %v2056
    %2799 = vmatprep.subr.mxu0 %v2041
    %2800 = vmatpush1.msra.mxu0 %v2040
    %2801 = vmatprep.subr.mxu0 %v2025
    %2802 = vmatpush1.msra.mxu0 %v2024
    %2803 = vmatprep.subr.mxu0 %v2009
    %2804 = vmatpush1.msra.mxu0 %v2008
    %2805 = vmatprep.subr.mxu0 %v1993
    %2806 = vmatpush1.msra.mxu0 %v1992
    %2807 = vmatprep.subr.mxu0 0.0
    %2808 = vmatpush2.msra.mxu0 0.0
    %2809 = vmatprep.subr.mxu0 0.0
    %2810 = vmatpush2.msra.mxu0 0.0
    %2811 = vmatprep.subr.mxu0 0.0
    %2812 = vmatpush2.msra.mxu0 0.0
    %2813 = vmatprep.subr.mxu0 0.0
    %2814 = vmatpush2.msra.mxu0 0.0
    %2815 = vmatprep.subr.mxu0 0.0
    %2816 = vmatpush2.msra.mxu0 0.0
    %2817 = vmatprep.subr.mxu0 0.0
    %2818 = vmatpush2.msra.mxu0 0.0
    %2819 = vmatprep.subr.mxu0 0.0
    %2820 = vmatpush2.msra.mxu0 0.0
    %2821 = vmatprep.subr.mxu0 0.0
    %2822 = vmatpush2.msra.mxu0 0.0
    %2823 = vmatprep.subr.mxu0 0.0
    %2824 = vmatpush2.msra.mxu0 0.0
    %2825 = vmatprep.subr.mxu0 0.0
    %2826 = vmatpush2.msra.mxu0 0.0
    %2827 = vmatprep.subr.mxu0 0.0
    %2828 = vmatpush2.msra.mxu0 0.0
    %2829 = vmatprep.subr.mxu0 0.0
    %2830 = vmatpush2.msra.mxu0 0.0
    %2831 = vmatprep.subr.mxu0 0.0
    %2832 = vmatpush2.msra.mxu0 0.0
    %2833 = vmatprep.subr.mxu0 0.0
    %2834 = vmatpush2.msra.mxu0 0.0
    %2835 = vmatprep.subr.mxu0 0.0
    %2836 = vmatpush2.msra.mxu0 0.0
    %2837 = vmatprep.subr.mxu0 0.0
    %2838 = vmatpush2.msra.mxu0 0.0
    %2839 = vmatprep.mubr.f32.mxu0 0.0
    %2840 = vmatmul.mubr.f32.gmra.mxu0 %v2276
    %v2841 = vpop.f32.mrf.mxu0
    %v2842 = vadd.f32 %v2233, %v2841
    %v2843 = vpop.f32.mrf.mxu0
    %v2844 = vadd.f32 %v2237, %v2843
    %2845 = vdwg.mxu0
    %v2846 = vmax.f32 %v2345, 0.0
    %v2847 = vmax.f32 %v2347, 0.0
    %v2848 = vmax.f32 %v2416, 0.0
    %v2849 = vmax.f32 %v2418, 0.0
    %v2850 = vmax.f32 %v2487, 0.0
    %v2851 = vmax.f32 %v2489, 0.0
    %v2852 = vmax.f32 %v2558, 0.0
    %v2853 = vmax.f32 %v2560, 0.0
    %v2854 = vmax.f32 %v2629, 0.0
    %v2855 = vmax.f32 %v2631, 0.0
    %v2856 = vmax.f32 %v2700, 0.0
    %v2857 = vmax.f32 %v2702, 0.0
    %v2858 = vmax.f32 %v2771, 0.0
    %v2859 = vmax.f32 %v2773, 0.0
    %v2860 = vmax.f32 %v2842, 0.0
    %v2861 = vmax.f32 %v2844, 0.0
    %v2862 = vld [vmem:[%s37] sm:$0xff]
    %v2863 = vld [vmem:[%s37 + $0x8] sm:$0xff]
    %v2864 = vld [vmem:[%s37 + $0x10] sm:$0xff]
    %v2865 = vld [vmem:[%s37 + $0x18] sm:$0xff]
    %v2866 = vld [vmem:[%s37 + $0x20] sm:$0xff]
    %v2867 = vld [vmem:[%s37 + $0x28] sm:$0xff]
    %v2868 = vld [vmem:[%s37 + $0x30] sm:$0xff]
    %v2869 = vld [vmem:[%s37 + $0x38] sm:$0xff]
    %v2870 = vld [vmem:[%s37 + $0x40] sm:$0xff]
    %v2871 = vld [vmem:[%s37 + $0x48] sm:$0xff]
    %v2872 = vld [vmem:[%s37 + $0x50] sm:$0xff]
    %v2873 = vld [vmem:[%s37 + $0x58] sm:$0xff]
    %v2874 = vld [vmem:[%s37 + $0x60] sm:$0xff]
    %v2875 = vld [vmem:[%s37 + $0x68] sm:$0xff]
    %v2876 = vld [vmem:[%s37 + $0x70] sm:$0xff]
    %v2877 = vld [vmem:[%s37 + $0x78] sm:$0xff]
    %v2878 = vld [vmem:[%s37 + $0x80] sm:$0xff]
    %v2879 = vld [vmem:[%s37 + $0x88] sm:$0xff]
    %v2880 = vld [vmem:[%s37 + $0x90] sm:$0xff]
    %v2881 = vld [vmem:[%s37 + $0x98] sm:$0xff]
    %v2882 = vld [vmem:[%s37 + $0xa0] sm:$0xff]
    %v2883 = vld [vmem:[%s37 + $0xa8] sm:$0xff]
    %v2884 = vld [vmem:[%s37 + $0xb0] sm:$0xff]
    %v2885 = vld [vmem:[%s37 + $0xb8] sm:$0xff]
    %v2886 = vld [vmem:[%s37 + $0xc0] sm:$0xff]
    %v2887 = vld [vmem:[%s37 + $0xc8] sm:$0xff]
    %v2888 = vld [vmem:[%s37 + $0xd0] sm:$0xff]
    %v2889 = vld [vmem:[%s37 + $0xd8] sm:$0xff]
    %v2890 = vld [vmem:[%s37 + $0xe0] sm:$0xff]
    %v2891 = vld [vmem:[%s37 + $0xe8] sm:$0xff]
    %v2892 = vld [vmem:[%s37 + $0xf0] sm:$0xff]
    %v2893 = vld [vmem:[%s37 + $0xf8] sm:$0xff]
    %v2894 = vld [vmem:[%s37 + $0x100] sm:$0xff]
    %v2895 = vld [vmem:[%s37 + $0x108] sm:$0xff]
    %v2896 = vld [vmem:[%s37 + $0x110] sm:$0xff]
    %v2897 = vld [vmem:[%s37 + $0x118] sm:$0xff]
    %v2898 = vld [vmem:[%s37 + $0x120] sm:$0xff]
    %v2899 = vld [vmem:[%s37 + $0x128] sm:$0xff]
    %v2900 = vld [vmem:[%s37 + $0x130] sm:$0xff]
    %v2901 = vld [vmem:[%s37 + $0x138] sm:$0xff]
    %v2902 = vld [vmem:[%s37 + $0x140] sm:$0xff]
    %v2903 = vld [vmem:[%s37 + $0x148] sm:$0xff]
    %v2904 = vld [vmem:[%s37 + $0x150] sm:$0xff]
    %v2905 = vld [vmem:[%s37 + $0x158] sm:$0xff]
    %v2906 = vld [vmem:[%s37 + $0x160] sm:$0xff]
    %v2907 = vld [vmem:[%s37 + $0x168] sm:$0xff]
    %v2908 = vld [vmem:[%s37 + $0x170] sm:$0xff]
    %v2909 = vld [vmem:[%s37 + $0x178] sm:$0xff]
    %v2910 = vld [vmem:[%s37 + $0x180] sm:$0xff]
    %v2911 = vld [vmem:[%s37 + $0x188] sm:$0xff]
    %v2912 = vld [vmem:[%s37 + $0x190] sm:$0xff]
    %v2913 = vld [vmem:[%s37 + $0x198] sm:$0xff]
    %v2914 = vld [vmem:[%s37 + $0x1a0] sm:$0xff]
    %v2915 = vld [vmem:[%s37 + $0x1a8] sm:$0xff]
    %v2916 = vld [vmem:[%s37 + $0x1b0] sm:$0xff]
    %v2917 = vld [vmem:[%s37 + $0x1b8] sm:$0xff]
    %v2918 = vld [vmem:[%s37 + $0x1c0] sm:$0xff]
    %v2919 = vld [vmem:[%s37 + $0x1c8] sm:$0xff]
    %v2920 = vld [vmem:[%s37 + $0x1d0] sm:$0xff]
    %v2921 = vld [vmem:[%s37 + $0x1d8] sm:$0xff]
    %v2922 = vld [vmem:[%s37 + $0x1e0] sm:$0xff]
    %v2923 = vld [vmem:[%s37 + $0x1e8] sm:$0xff]
    %v2924 = vld [vmem:[%s37 + $0x1f0] sm:$0xff]
    %v2925 = vld [vmem:[%s37 + $0x1f8] sm:$0xff]
    %v2926 = vld [vmem:[%s37 + $0x200] sm:$0xff]
    %v2927 = vld [vmem:[%s37 + $0x208] sm:$0xff]
    %v2928 = vld [vmem:[%s37 + $0x210] sm:$0xff]
    %v2929 = vld [vmem:[%s37 + $0x218] sm:$0xff]
    %v2930 = vld [vmem:[%s37 + $0x220] sm:$0xff]
    %v2931 = vld [vmem:[%s37 + $0x228] sm:$0xff]
    %v2932 = vld [vmem:[%s37 + $0x230] sm:$0xff]
    %v2933 = vld [vmem:[%s37 + $0x238] sm:$0xff]
    %v2934 = vld [vmem:[%s37 + $0x240] sm:$0xff]
    %v2935 = vld [vmem:[%s37 + $0x248] sm:$0xff]
    %v2936 = vld [vmem:[%s37 + $0x250] sm:$0xff]
    %v2937 = vld [vmem:[%s37 + $0x258] sm:$0xff]
    %v2938 = vld [vmem:[%s37 + $0x260] sm:$0xff]
    %v2939 = vld [vmem:[%s37 + $0x268] sm:$0xff]
    %v2940 = vld [vmem:[%s37 + $0x270] sm:$0xff]
    %v2941 = vld [vmem:[%s37 + $0x278] sm:$0xff]
    %v2942 = vld [vmem:[%s37 + $0x280] sm:$0xff]
    %v2943 = vld [vmem:[%s37 + $0x288] sm:$0xff]
    %v2944 = vld [vmem:[%s37 + $0x290] sm:$0xff]
    %v2945 = vld [vmem:[%s37 + $0x298] sm:$0xff]
    %v2946 = vld [vmem:[%s37 + $0x2a0] sm:$0xff]
    %v2947 = vld [vmem:[%s37 + $0x2a8] sm:$0xff]
    %v2948 = vld [vmem:[%s37 + $0x2b0] sm:$0xff]
    %v2949 = vld [vmem:[%s37 + $0x2b8] sm:$0xff]
    %v2950 = vld [vmem:[%s37 + $0x2c0] sm:$0xff]
    %v2951 = vld [vmem:[%s37 + $0x2c8] sm:$0xff]
    %v2952 = vld [vmem:[%s37 + $0x2d0] sm:$0xff]
    %v2953 = vld [vmem:[%s37 + $0x2d8] sm:$0xff]
    %v2954 = vld [vmem:[%s37 + $0x2e0] sm:$0xff]
    %v2955 = vld [vmem:[%s37 + $0x2e8] sm:$0xff]
    %v2956 = vld [vmem:[%s37 + $0x2f0] sm:$0xff]
    %v2957 = vld [vmem:[%s37 + $0x2f8] sm:$0xff]
    %v2958 = vld [vmem:[%s37 + $0x300] sm:$0xff]
    %v2959 = vld [vmem:[%s37 + $0x308] sm:$0xff]
    %v2960 = vld [vmem:[%s37 + $0x310] sm:$0xff]
    %v2961 = vld [vmem:[%s37 + $0x318] sm:$0xff]
    %v2962 = vld [vmem:[%s37 + $0x320] sm:$0xff]
    %v2963 = vld [vmem:[%s37 + $0x328] sm:$0xff]
    %v2964 = vld [vmem:[%s37 + $0x330] sm:$0xff]
    %v2965 = vld [vmem:[%s37 + $0x338] sm:$0xff]
    %v2966 = vld [vmem:[%s37 + $0x340] sm:$0xff]
    %v2967 = vld [vmem:[%s37 + $0x348] sm:$0xff]
    %v2968 = vld [vmem:[%s37 + $0x350] sm:$0xff]
    %v2969 = vld [vmem:[%s37 + $0x358] sm:$0xff]
    %v2970 = vld [vmem:[%s37 + $0x360] sm:$0xff]
    %v2971 = vld [vmem:[%s37 + $0x368] sm:$0xff]
    %v2972 = vld [vmem:[%s37 + $0x370] sm:$0xff]
    %v2973 = vld [vmem:[%s37 + $0x378] sm:$0xff]
    %v2974 = vld [vmem:[%s37 + $0x380] sm:$0xff]
    %v2975 = vld [vmem:[%s37 + $0x388] sm:$0xff]
    %v2976 = vld [vmem:[%s37 + $0x390] sm:$0xff]
    %v2977 = vld [vmem:[%s37 + $0x398] sm:$0xff]
    %v2978 = vld [vmem:[%s37 + $0x3a0] sm:$0xff]
    %v2979 = vld [vmem:[%s37 + $0x3a8] sm:$0xff]
    %v2980 = vld [vmem:[%s37 + $0x3b0] sm:$0xff]
    %v2981 = vld [vmem:[%s37 + $0x3b8] sm:$0xff]
    %v2982 = vld [vmem:[%s37 + $0x3c0] sm:$0xff]
    %v2983 = vld [vmem:[%s37 + $0x3c8] sm:$0xff]
    %v2984 = vld [vmem:[%s37 + $0x3d0] sm:$0xff]
    %v2985 = vld [vmem:[%s37 + $0x3d8] sm:$0xff]
    %v2986 = vld [vmem:[%s37 + $0x3e0] sm:$0xff]
    %v2987 = vld [vmem:[%s37 + $0x3e8] sm:$0xff]
    %v2988 = vld [vmem:[%s37 + $0x3f0] sm:$0xff]
    %v2989 = vld [vmem:[%s37 + $0x3f8] sm:$0xff]
    %v2990 = vld [vmem:[%s37 + $0x400] sm:$0xff]
    %v2991 = vld [vmem:[%s37 + $0x408] sm:$0xff]
    %v2992 = vld [vmem:[%s37 + $0x410] sm:$0xff]
    %v2993 = vld [vmem:[%s37 + $0x418] sm:$0xff]
    %v2994 = vld [vmem:[%s37 + $0x420] sm:$0xff]
    %v2995 = vld [vmem:[%s37 + $0x428] sm:$0xff]
    %v2996 = vld [vmem:[%s37 + $0x430] sm:$0xff]
    %v2997 = vld [vmem:[%s37 + $0x438] sm:$0xff]
    %v2998 = vld [vmem:[%s37 + $0x440] sm:$0xff]
    %v2999 = vld [vmem:[%s37 + $0x448] sm:$0xff]
    %v3000 = vld [vmem:[%s37 + $0x450] sm:$0xff]
    %v3001 = vld [vmem:[%s37 + $0x458] sm:$0xff]
    %v3002 = vld [vmem:[%s37 + $0x460] sm:$0xff]
    %v3003 = vld [vmem:[%s37 + $0x468] sm:$0xff]
    %v3004 = vld [vmem:[%s37 + $0x470] sm:$0xff]
    %v3005 = vld [vmem:[%s37 + $0x478] sm:$0xff]
    %v3006 = vld [vmem:[%s37 + $0x480] sm:$0xff]
    %v3007 = vld [vmem:[%s37 + $0x488] sm:$0xff]
    %v3008 = vld [vmem:[%s37 + $0x490] sm:$0xff]
    %v3009 = vld [vmem:[%s37 + $0x498] sm:$0xff]
    %v3010 = vld [vmem:[%s37 + $0x4a0] sm:$0xff]
    %v3011 = vld [vmem:[%s37 + $0x4a8] sm:$0xff]
    %v3012 = vld [vmem:[%s37 + $0x4b0] sm:$0xff]
    %v3013 = vld [vmem:[%s37 + $0x4b8] sm:$0xff]
    %v3014 = vld [vmem:[%s37 + $0x4c0] sm:$0xff]
    %v3015 = vld [vmem:[%s37 + $0x4c8] sm:$0xff]
    %v3016 = vld [vmem:[%s37 + $0x4d0] sm:$0xff]
    %v3017 = vld [vmem:[%s37 + $0x4d8] sm:$0xff]
    %v3018 = vld [vmem:[%s37 + $0x4e0] sm:$0xff]
    %v3019 = vld [vmem:[%s37 + $0x4e8] sm:$0xff]
    %v3020 = vld [vmem:[%s37 + $0x4f0] sm:$0xff]
    %v3021 = vld [vmem:[%s37 + $0x4f8] sm:$0xff]
    %v3022 = vld [vmem:[%s37 + $0x500] sm:$0xff]
    %v3023 = vld [vmem:[%s37 + $0x508] sm:$0xff]
    %v3024 = vld [vmem:[%s37 + $0x510] sm:$0xff]
    %v3025 = vld [vmem:[%s37 + $0x518] sm:$0xff]
    %v3026 = vld [vmem:[%s37 + $0x520] sm:$0xff]
    %v3027 = vld [vmem:[%s37 + $0x528] sm:$0xff]
    %v3028 = vld [vmem:[%s37 + $0x530] sm:$0xff]
    %v3029 = vld [vmem:[%s37 + $0x538] sm:$0xff]
    %v3030 = vld [vmem:[%s37 + $0x540] sm:$0xff]
    %v3031 = vld [vmem:[%s37 + $0x548] sm:$0xff]
    %v3032 = vld [vmem:[%s37 + $0x550] sm:$0xff]
    %v3033 = vld [vmem:[%s37 + $0x558] sm:$0xff]
    %v3034 = vld [vmem:[%s37 + $0x560] sm:$0xff]
    %v3035 = vld [vmem:[%s37 + $0x568] sm:$0xff]
    %v3036 = vld [vmem:[%s37 + $0x570] sm:$0xff]
    %v3037 = vld [vmem:[%s37 + $0x578] sm:$0xff]
    %v3038 = vld [vmem:[%s37 + $0x580] sm:$0xff]
    %v3039 = vld [vmem:[%s37 + $0x588] sm:$0xff]
    %v3040 = vld [vmem:[%s37 + $0x590] sm:$0xff]
    %v3041 = vld [vmem:[%s37 + $0x598] sm:$0xff]
    %v3042 = vld [vmem:[%s37 + $0x5a0] sm:$0xff]
    %v3043 = vld [vmem:[%s37 + $0x5a8] sm:$0xff]
    %v3044 = vld [vmem:[%s37 + $0x5b0] sm:$0xff]
    %v3045 = vld [vmem:[%s37 + $0x5b8] sm:$0xff]
    %v3046 = vld [vmem:[%s37 + $0x5c0] sm:$0xff]
    %v3047 = vld [vmem:[%s37 + $0x5c8] sm:$0xff]
    %v3048 = vld [vmem:[%s37 + $0x5d0] sm:$0xff]
    %v3049 = vld [vmem:[%s37 + $0x5d8] sm:$0xff]
    %v3050 = vld [vmem:[%s37 + $0x5e0] sm:$0xff]
    %v3051 = vld [vmem:[%s37 + $0x5e8] sm:$0xff]
    %v3052 = vld [vmem:[%s37 + $0x5f0] sm:$0xff]
    %v3053 = vld [vmem:[%s37 + $0x5f8] sm:$0xff]
    %v3054 = vld [vmem:[%s37 + $0x600] sm:$0xff]
    %v3055 = vld [vmem:[%s37 + $0x608] sm:$0xff]
    %v3056 = vld [vmem:[%s37 + $0x610] sm:$0xff]
    %v3057 = vld [vmem:[%s37 + $0x618] sm:$0xff]
    %v3058 = vld [vmem:[%s37 + $0x620] sm:$0xff]
    %v3059 = vld [vmem:[%s37 + $0x628] sm:$0xff]
    %v3060 = vld [vmem:[%s37 + $0x630] sm:$0xff]
    %v3061 = vld [vmem:[%s37 + $0x638] sm:$0xff]
    %v3062 = vld [vmem:[%s37 + $0x640] sm:$0xff]
    %v3063 = vld [vmem:[%s37 + $0x648] sm:$0xff]
    %v3064 = vld [vmem:[%s37 + $0x650] sm:$0xff]
    %v3065 = vld [vmem:[%s37 + $0x658] sm:$0xff]
    %v3066 = vld [vmem:[%s37 + $0x660] sm:$0xff]
    %v3067 = vld [vmem:[%s37 + $0x668] sm:$0xff]
    %v3068 = vld [vmem:[%s37 + $0x670] sm:$0xff]
    %v3069 = vld [vmem:[%s37 + $0x678] sm:$0xff]
    %v3070 = vld [vmem:[%s37 + $0x680] sm:$0xff]
    %v3071 = vld [vmem:[%s37 + $0x688] sm:$0xff]
    %v3072 = vld [vmem:[%s37 + $0x690] sm:$0xff]
    %v3073 = vld [vmem:[%s37 + $0x698] sm:$0xff]
    %v3074 = vld [vmem:[%s37 + $0x6a0] sm:$0xff]
    %v3075 = vld [vmem:[%s37 + $0x6a8] sm:$0xff]
    %v3076 = vld [vmem:[%s37 + $0x6b0] sm:$0xff]
    %v3077 = vld [vmem:[%s37 + $0x6b8] sm:$0xff]
    %v3078 = vld [vmem:[%s37 + $0x6c0] sm:$0xff]
    %v3079 = vld [vmem:[%s37 + $0x6c8] sm:$0xff]
    %v3080 = vld [vmem:[%s37 + $0x6d0] sm:$0xff]
    %v3081 = vld [vmem:[%s37 + $0x6d8] sm:$0xff]
    %v3082 = vld [vmem:[%s37 + $0x6e0] sm:$0xff]
    %v3083 = vld [vmem:[%s37 + $0x6e8] sm:$0xff]
    %v3084 = vld [vmem:[%s37 + $0x6f0] sm:$0xff]
    %v3085 = vld [vmem:[%s37 + $0x6f8] sm:$0xff]
    %v3086 = vld [vmem:[%s37 + $0x700] sm:$0xff]
    %v3087 = vld [vmem:[%s37 + $0x708] sm:$0xff]
    %v3088 = vld [vmem:[%s37 + $0x710] sm:$0xff]
    %v3089 = vld [vmem:[%s37 + $0x718] sm:$0xff]
    %v3090 = vld [vmem:[%s37 + $0x720] sm:$0xff]
    %v3091 = vld [vmem:[%s37 + $0x728] sm:$0xff]
    %v3092 = vld [vmem:[%s37 + $0x730] sm:$0xff]
    %v3093 = vld [vmem:[%s37 + $0x738] sm:$0xff]
    %v3094 = vld [vmem:[%s37 + $0x740] sm:$0xff]
    %v3095 = vld [vmem:[%s37 + $0x748] sm:$0xff]
    %v3096 = vld [vmem:[%s37 + $0x750] sm:$0xff]
    %v3097 = vld [vmem:[%s37 + $0x758] sm:$0xff]
    %v3098 = vld [vmem:[%s37 + $0x760] sm:$0xff]
    %v3099 = vld [vmem:[%s37 + $0x768] sm:$0xff]
    %v3100 = vld [vmem:[%s37 + $0x770] sm:$0xff]
    %v3101 = vld [vmem:[%s37 + $0x778] sm:$0xff]
    %v3102 = vld [vmem:[%s37 + $0x780] sm:$0xff]
    %v3103 = vld [vmem:[%s37 + $0x788] sm:$0xff]
    %v3104 = vld [vmem:[%s37 + $0x790] sm:$0xff]
    %v3105 = vld [vmem:[%s37 + $0x798] sm:$0xff]
    %v3106 = vld [vmem:[%s37 + $0x7a0] sm:$0xff]
    %v3107 = vld [vmem:[%s37 + $0x7a8] sm:$0xff]
    %v3108 = vld [vmem:[%s37 + $0x7b0] sm:$0xff]
    %v3109 = vld [vmem:[%s37 + $0x7b8] sm:$0xff]
    %v3110 = vld [vmem:[%s37 + $0x7c0] sm:$0xff]
    %v3111 = vld [vmem:[%s37 + $0x7c8] sm:$0xff]
    %v3112 = vld [vmem:[%s37 + $0x7d0] sm:$0xff]
    %v3113 = vld [vmem:[%s37 + $0x7d8] sm:$0xff]
    %v3114 = vld [vmem:[%s37 + $0x7e0] sm:$0xff]
    %v3115 = vld [vmem:[%s37 + $0x7e8] sm:$0xff]
    %v3116 = vld [vmem:[%s37 + $0x7f0] sm:$0xff]
    %v3117 = vld [vmem:[%s37 + $0x7f8] sm:$0xff]
    %v3118 = vld [vmem:[%s39] sm:$0x1]
    %v3120 = vlaneseq
    %v3121 = vshrl.u32 %v3120, 7
    %v3122 = vsub.s32 0, %v3121
    %v3123 = vrot.slane %v3118, %v3122
    %3125 = vmatprep.subr.mxu0 0.0
    %3126 = vmatpush1.msra.mxu0 %v2877
    %3127 = vmatprep.subr.mxu0 0.0
    %3128 = vmatpush1.msra.mxu0 %v2876
    %3129 = vmatprep.subr.mxu0 0.0
    %3130 = vmatpush1.msra.mxu0 %v2875
    %3131 = vmatprep.subr.mxu0 0.0
    %3132 = vmatpush1.msra.mxu0 %v2874
    %3133 = vmatprep.subr.mxu0 0.0
    %3134 = vmatpush1.msra.mxu0 %v2873
    %3135 = vmatprep.subr.mxu0 0.0
    %3136 = vmatpush1.msra.mxu0 %v2872
    %3137 = vmatprep.subr.mxu0 0.0
    %3138 = vmatpush1.msra.mxu0 %v2871
    %3139 = vmatprep.subr.mxu0 0.0
    %3140 = vmatpush1.msra.mxu0 %v2870
    %3141 = vmatprep.subr.mxu0 0.0
    %3142 = vmatpush1.msra.mxu0 %v2869
    %3143 = vmatprep.subr.mxu0 0.0
    %3144 = vmatpush1.msra.mxu0 %v2868
    %3145 = vmatprep.subr.mxu0 0.0
    %3146 = vmatpush1.msra.mxu0 %v2867
    %3147 = vmatprep.subr.mxu0 0.0
    %3148 = vmatpush1.msra.mxu0 %v2866
    %3149 = vmatprep.subr.mxu0 0.0
    %3150 = vmatpush1.msra.mxu0 %v2865
    %3151 = vmatprep.subr.mxu0 0.0
    %3152 = vmatpush1.msra.mxu0 %v2864
    %3153 = vmatprep.subr.mxu0 0.0
    %3154 = vmatpush1.msra.mxu0 %v2863
    %3155 = vmatprep.subr.mxu0 0.0
    %3156 = vmatpush1.msra.mxu0 %v2862
    %3157 = vmatprep.subr.mxu0 0.0
    %3158 = vmatpush2.msra.mxu0 %v2893
    %3159 = vmatprep.subr.mxu0 0.0
    %3160 = vmatpush2.msra.mxu0 %v2892
    %3161 = vmatprep.subr.mxu0 0.0
    %3162 = vmatpush2.msra.mxu0 %v2891
    %3163 = vmatprep.subr.mxu0 0.0
    %3164 = vmatpush2.msra.mxu0 %v2890
    %3165 = vmatprep.subr.mxu0 0.0
    %3166 = vmatpush2.msra.mxu0 %v2889
    %3167 = vmatprep.subr.mxu0 0.0
    %3168 = vmatpush2.msra.mxu0 %v2888
    %3169 = vmatprep.subr.mxu0 0.0
    %3170 = vmatpush2.msra.mxu0 %v2887
    %3171 = vmatprep.subr.mxu0 0.0
    %3172 = vmatpush2.msra.mxu0 %v2886
    %3173 = vmatprep.subr.mxu0 0.0
    %3174 = vmatpush2.msra.mxu0 %v2885
    %3175 = vmatprep.subr.mxu0 0.0
    %3176 = vmatpush2.msra.mxu0 %v2884
    %3177 = vmatprep.subr.mxu0 0.0
    %3178 = vmatpush2.msra.mxu0 %v2883
    %3179 = vmatprep.subr.mxu0 0.0
    %3180 = vmatpush2.msra.mxu0 %v2882
    %3181 = vmatprep.subr.mxu0 0.0
    %3182 = vmatpush2.msra.mxu0 %v2881
    %3183 = vmatprep.subr.mxu0 0.0
    %3184 = vmatpush2.msra.mxu0 %v2880
    %3185 = vmatprep.subr.mxu0 0.0
    %3186 = vmatpush2.msra.mxu0 %v2879
    %3187 = vmatprep.subr.mxu0 0.0
    %3188 = vmatpush2.msra.mxu0 %v2878
    %3189 = vmatprep.mubr.f32.mxu0 %v2847
    %3190 = vmatmul.mubr.f32.gmra.mxu0 %v2846
    %v3191 = vpop.f32.mrf.mxu0
    %v3192 = vadd.f32 %v3123, %v3191
    %v3193 = vpop.f32.mrf.mxu0
    %3194 = vdwg.mxu0
    %3195 = vmatprep.subr.mxu0 0.0
    %3196 = vmatpush1.msra.mxu0 %v2909
    %3197 = vmatprep.subr.mxu0 0.0
    %3198 = vmatpush1.msra.mxu0 %v2908
    %3199 = vmatprep.subr.mxu0 0.0
    %3200 = vmatpush1.msra.mxu0 %v2907
    %3201 = vmatprep.subr.mxu0 0.0
    %3202 = vmatpush1.msra.mxu0 %v2906
    %3203 = vmatprep.subr.mxu0 0.0
    %3204 = vmatpush1.msra.mxu0 %v2905
    %3205 = vmatprep.subr.mxu0 0.0
    %3206 = vmatpush1.msra.mxu0 %v2904
    %3207 = vmatprep.subr.mxu0 0.0
    %3208 = vmatpush1.msra.mxu0 %v2903
    %3209 = vmatprep.subr.mxu0 0.0
    %3210 = vmatpush1.msra.mxu0 %v2902
    %3211 = vmatprep.subr.mxu0 0.0
    %3212 = vmatpush1.msra.mxu0 %v2901
    %3213 = vmatprep.subr.mxu0 0.0
    %3214 = vmatpush1.msra.mxu0 %v2900
    %3215 = vmatprep.subr.mxu0 0.0
    %3216 = vmatpush1.msra.mxu0 %v2899
    %3217 = vmatprep.subr.mxu0 0.0
    %3218 = vmatpush1.msra.mxu0 %v2898
    %3219 = vmatprep.subr.mxu0 0.0
    %3220 = vmatpush1.msra.mxu0 %v2897
    %3221 = vmatprep.subr.mxu0 0.0
    %3222 = vmatpush1.msra.mxu0 %v2896
    %3223 = vmatprep.subr.mxu0 0.0
    %3224 = vmatpush1.msra.mxu0 %v2895
    %3225 = vmatprep.subr.mxu0 0.0
    %3226 = vmatpush1.msra.mxu0 %v2894
    %3227 = vmatprep.subr.mxu0 0.0
    %3228 = vmatpush2.msra.mxu0 %v2925
    %3229 = vmatprep.subr.mxu0 0.0
    %3230 = vmatpush2.msra.mxu0 %v2924
    %3231 = vmatprep.subr.mxu0 0.0
    %3232 = vmatpush2.msra.mxu0 %v2923
    %3233 = vmatprep.subr.mxu0 0.0
    %3234 = vmatpush2.msra.mxu0 %v2922
    %3235 = vmatprep.subr.mxu0 0.0
    %3236 = vmatpush2.msra.mxu0 %v2921
    %3237 = vmatprep.subr.mxu0 0.0
    %3238 = vmatpush2.msra.mxu0 %v2920
    %3239 = vmatprep.subr.mxu0 0.0
    %3240 = vmatpush2.msra.mxu0 %v2919
    %3241 = vmatprep.subr.mxu0 0.0
    %3242 = vmatpush2.msra.mxu0 %v2918
    %3243 = vmatprep.subr.mxu0 0.0
    %3244 = vmatpush2.msra.mxu0 %v2917
    %3245 = vmatprep.subr.mxu0 0.0
    %3246 = vmatpush2.msra.mxu0 %v2916
    %3247 = vmatprep.subr.mxu0 0.0
    %3248 = vmatpush2.msra.mxu0 %v2915
    %3249 = vmatprep.subr.mxu0 0.0
    %3250 = vmatpush2.msra.mxu0 %v2914
    %3251 = vmatprep.subr.mxu0 0.0
    %3252 = vmatpush2.msra.mxu0 %v2913
    %3253 = vmatprep.subr.mxu0 0.0
    %3254 = vmatpush2.msra.mxu0 %v2912
    %3255 = vmatprep.subr.mxu0 0.0
    %3256 = vmatpush2.msra.mxu0 %v2911
    %3257 = vmatprep.subr.mxu0 0.0
    %3258 = vmatpush2.msra.mxu0 %v2910
    %3259 = vmatprep.mubr.f32.mxu0 %v2849
    %3260 = vmatmul.mubr.f32.gmra.mxu0 %v2848
    %v3261 = vpop.f32.mrf.mxu0
    %v3262 = vadd.f32 %v3192, %v3261
    %v3263 = vpop.f32.mrf.mxu0
    %3264 = vdwg.mxu0
    %3265 = vmatprep.subr.mxu0 0.0
    %3266 = vmatpush1.msra.mxu0 %v2941
    %3267 = vmatprep.subr.mxu0 0.0
    %3268 = vmatpush1.msra.mxu0 %v2940
    %3269 = vmatprep.subr.mxu0 0.0
    %3270 = vmatpush1.msra.mxu0 %v2939
    %3271 = vmatprep.subr.mxu0 0.0
    %3272 = vmatpush1.msra.mxu0 %v2938
    %3273 = vmatprep.subr.mxu0 0.0
    %3274 = vmatpush1.msra.mxu0 %v2937
    %3275 = vmatprep.subr.mxu0 0.0
    %3276 = vmatpush1.msra.mxu0 %v2936
    %3277 = vmatprep.subr.mxu0 0.0
    %3278 = vmatpush1.msra.mxu0 %v2935
    %3279 = vmatprep.subr.mxu0 0.0
    %3280 = vmatpush1.msra.mxu0 %v2934
    %3281 = vmatprep.subr.mxu0 0.0
    %3282 = vmatpush1.msra.mxu0 %v2933
    %3283 = vmatprep.subr.mxu0 0.0
    %3284 = vmatpush1.msra.mxu0 %v2932
    %3285 = vmatprep.subr.mxu0 0.0
    %3286 = vmatpush1.msra.mxu0 %v2931
    %3287 = vmatprep.subr.mxu0 0.0
    %3288 = vmatpush1.msra.mxu0 %v2930
    %3289 = vmatprep.subr.mxu0 0.0
    %3290 = vmatpush1.msra.mxu0 %v2929
    %3291 = vmatprep.subr.mxu0 0.0
    %3292 = vmatpush1.msra.mxu0 %v2928
    %3293 = vmatprep.subr.mxu0 0.0
    %3294 = vmatpush1.msra.mxu0 %v2927
    %3295 = vmatprep.subr.mxu0 0.0
    %3296 = vmatpush1.msra.mxu0 %v2926
    %3297 = vmatprep.subr.mxu0 0.0
    %3298 = vmatpush2.msra.mxu0 %v2957
    %3299 = vmatprep.subr.mxu0 0.0
    %3300 = vmatpush2.msra.mxu0 %v2956
    %3301 = vmatprep.subr.mxu0 0.0
    %3302 = vmatpush2.msra.mxu0 %v2955
    %3303 = vmatprep.subr.mxu0 0.0
    %3304 = vmatpush2.msra.mxu0 %v2954
    %3305 = vmatprep.subr.mxu0 0.0
    %3306 = vmatpush2.msra.mxu0 %v2953
    %3307 = vmatprep.subr.mxu0 0.0
    %3308 = vmatpush2.msra.mxu0 %v2952
    %3309 = vmatprep.subr.mxu0 0.0
    %3310 = vmatpush2.msra.mxu0 %v2951
    %3311 = vmatprep.subr.mxu0 0.0
    %3312 = vmatpush2.msra.mxu0 %v2950
    %3313 = vmatprep.subr.mxu0 0.0
    %3314 = vmatpush2.msra.mxu0 %v2949
    %3315 = vmatprep.subr.mxu0 0.0
    %3316 = vmatpush2.msra.mxu0 %v2948
    %3317 = vmatprep.subr.mxu0 0.0
    %3318 = vmatpush2.msra.mxu0 %v2947
    %3319 = vmatprep.subr.mxu0 0.0
    %3320 = vmatpush2.msra.mxu0 %v2946
    %3321 = vmatprep.subr.mxu0 0.0
    %3322 = vmatpush2.msra.mxu0 %v2945
    %3323 = vmatprep.subr.mxu0 0.0
    %3324 = vmatpush2.msra.mxu0 %v2944
    %3325 = vmatprep.subr.mxu0 0.0
    %3326 = vmatpush2.msra.mxu0 %v2943
    %3327 = vmatprep.subr.mxu0 0.0
    %3328 = vmatpush2.msra.mxu0 %v2942
    %3329 = vmatprep.mubr.f32.mxu0 %v2851
    %3330 = vmatmul.mubr.f32.gmra.mxu0 %v2850
    %v3331 = vpop.f32.mrf.mxu0
    %v3332 = vadd.f32 %v3262, %v3331
    %v3333 = vpop.f32.mrf.mxu0
    %3334 = vdwg.mxu0
    %3335 = vmatprep.subr.mxu0 0.0
    %3336 = vmatpush1.msra.mxu0 %v2973
    %3337 = vmatprep.subr.mxu0 0.0
    %3338 = vmatpush1.msra.mxu0 %v2972
    %3339 = vmatprep.subr.mxu0 0.0
    %3340 = vmatpush1.msra.mxu0 %v2971
    %3341 = vmatprep.subr.mxu0 0.0
    %3342 = vmatpush1.msra.mxu0 %v2970
    %3343 = vmatprep.subr.mxu0 0.0
    %3344 = vmatpush1.msra.mxu0 %v2969
    %3345 = vmatprep.subr.mxu0 0.0
    %3346 = vmatpush1.msra.mxu0 %v2968
    %3347 = vmatprep.subr.mxu0 0.0
    %3348 = vmatpush1.msra.mxu0 %v2967
    %3349 = vmatprep.subr.mxu0 0.0
    %3350 = vmatpush1.msra.mxu0 %v2966
    %3351 = vmatprep.subr.mxu0 0.0
    %3352 = vmatpush1.msra.mxu0 %v2965
    %3353 = vmatprep.subr.mxu0 0.0
    %3354 = vmatpush1.msra.mxu0 %v2964
    %3355 = vmatprep.subr.mxu0 0.0
    %3356 = vmatpush1.msra.mxu0 %v2963
    %3357 = vmatprep.subr.mxu0 0.0
    %3358 = vmatpush1.msra.mxu0 %v2962
    %3359 = vmatprep.subr.mxu0 0.0
    %3360 = vmatpush1.msra.mxu0 %v2961
    %3361 = vmatprep.subr.mxu0 0.0
    %3362 = vmatpush1.msra.mxu0 %v2960
    %3363 = vmatprep.subr.mxu0 0.0
    %3364 = vmatpush1.msra.mxu0 %v2959
    %3365 = vmatprep.subr.mxu0 0.0
    %3366 = vmatpush1.msra.mxu0 %v2958
    %3367 = vmatprep.subr.mxu0 0.0
    %3368 = vmatpush2.msra.mxu0 %v2989
    %3369 = vmatprep.subr.mxu0 0.0
    %3370 = vmatpush2.msra.mxu0 %v2988
    %3371 = vmatprep.subr.mxu0 0.0
    %3372 = vmatpush2.msra.mxu0 %v2987
    %3373 = vmatprep.subr.mxu0 0.0
    %3374 = vmatpush2.msra.mxu0 %v2986
    %3375 = vmatprep.subr.mxu0 0.0
    %3376 = vmatpush2.msra.mxu0 %v2985
    %3377 = vmatprep.subr.mxu0 0.0
    %3378 = vmatpush2.msra.mxu0 %v2984
    %3379 = vmatprep.subr.mxu0 0.0
    %3380 = vmatpush2.msra.mxu0 %v2983
    %3381 = vmatprep.subr.mxu0 0.0
    %3382 = vmatpush2.msra.mxu0 %v2982
    %3383 = vmatprep.subr.mxu0 0.0
    %3384 = vmatpush2.msra.mxu0 %v2981
    %3385 = vmatprep.subr.mxu0 0.0
    %3386 = vmatpush2.msra.mxu0 %v2980
    %3387 = vmatprep.subr.mxu0 0.0
    %3388 = vmatpush2.msra.mxu0 %v2979
    %3389 = vmatprep.subr.mxu0 0.0
    %3390 = vmatpush2.msra.mxu0 %v2978
    %3391 = vmatprep.subr.mxu0 0.0
    %3392 = vmatpush2.msra.mxu0 %v2977
    %3393 = vmatprep.subr.mxu0 0.0
    %3394 = vmatpush2.msra.mxu0 %v2976
    %3395 = vmatprep.subr.mxu0 0.0
    %3396 = vmatpush2.msra.mxu0 %v2975
    %3397 = vmatprep.subr.mxu0 0.0
    %3398 = vmatpush2.msra.mxu0 %v2974
    %3399 = vmatprep.mubr.f32.mxu0 %v2853
    %3400 = vmatmul.mubr.f32.gmra.mxu0 %v2852
    %v3401 = vpop.f32.mrf.mxu0
    %v3402 = vadd.f32 %v3332, %v3401
    %v3403 = vpop.f32.mrf.mxu0
    %3404 = vdwg.mxu0
    %3405 = vmatprep.subr.mxu0 0.0
    %3406 = vmatpush1.msra.mxu0 %v3005
    %3407 = vmatprep.subr.mxu0 0.0
    %3408 = vmatpush1.msra.mxu0 %v3004
    %3409 = vmatprep.subr.mxu0 0.0
    %3410 = vmatpush1.msra.mxu0 %v3003
    %3411 = vmatprep.subr.mxu0 0.0
    %3412 = vmatpush1.msra.mxu0 %v3002
    %3413 = vmatprep.subr.mxu0 0.0
    %3414 = vmatpush1.msra.mxu0 %v3001
    %3415 = vmatprep.subr.mxu0 0.0
    %3416 = vmatpush1.msra.mxu0 %v3000
    %3417 = vmatprep.subr.mxu0 0.0
    %3418 = vmatpush1.msra.mxu0 %v2999
    %3419 = vmatprep.subr.mxu0 0.0
    %3420 = vmatpush1.msra.mxu0 %v2998
    %3421 = vmatprep.subr.mxu0 0.0
    %3422 = vmatpush1.msra.mxu0 %v2997
    %3423 = vmatprep.subr.mxu0 0.0
    %3424 = vmatpush1.msra.mxu0 %v2996
    %3425 = vmatprep.subr.mxu0 0.0
    %3426 = vmatpush1.msra.mxu0 %v2995
    %3427 = vmatprep.subr.mxu0 0.0
    %3428 = vmatpush1.msra.mxu0 %v2994
    %3429 = vmatprep.subr.mxu0 0.0
    %3430 = vmatpush1.msra.mxu0 %v2993
    %3431 = vmatprep.subr.mxu0 0.0
    %3432 = vmatpush1.msra.mxu0 %v2992
    %3433 = vmatprep.subr.mxu0 0.0
    %3434 = vmatpush1.msra.mxu0 %v2991
    %3435 = vmatprep.subr.mxu0 0.0
    %3436 = vmatpush1.msra.mxu0 %v2990
    %3437 = vmatprep.subr.mxu0 0.0
    %3438 = vmatpush2.msra.mxu0 %v3021
    %3439 = vmatprep.subr.mxu0 0.0
    %3440 = vmatpush2.msra.mxu0 %v3020
    %3441 = vmatprep.subr.mxu0 0.0
    %3442 = vmatpush2.msra.mxu0 %v3019
    %3443 = vmatprep.subr.mxu0 0.0
    %3444 = vmatpush2.msra.mxu0 %v3018
    %3445 = vmatprep.subr.mxu0 0.0
    %3446 = vmatpush2.msra.mxu0 %v3017
    %3447 = vmatprep.subr.mxu0 0.0
    %3448 = vmatpush2.msra.mxu0 %v3016
    %3449 = vmatprep.subr.mxu0 0.0
    %3450 = vmatpush2.msra.mxu0 %v3015
    %3451 = vmatprep.subr.mxu0 0.0
    %3452 = vmatpush2.msra.mxu0 %v3014
    %3453 = vmatprep.subr.mxu0 0.0
    %3454 = vmatpush2.msra.mxu0 %v3013
    %3455 = vmatprep.subr.mxu0 0.0
    %3456 = vmatpush2.msra.mxu0 %v3012
    %3457 = vmatprep.subr.mxu0 0.0
    %3458 = vmatpush2.msra.mxu0 %v3011
    %3459 = vmatprep.subr.mxu0 0.0
    %3460 = vmatpush2.msra.mxu0 %v3010
    %3461 = vmatprep.subr.mxu0 0.0
    %3462 = vmatpush2.msra.mxu0 %v3009
    %3463 = vmatprep.subr.mxu0 0.0
    %3464 = vmatpush2.msra.mxu0 %v3008
    %3465 = vmatprep.subr.mxu0 0.0
    %3466 = vmatpush2.msra.mxu0 %v3007
    %3467 = vmatprep.subr.mxu0 0.0
    %3468 = vmatpush2.msra.mxu0 %v3006
    %3469 = vmatprep.mubr.f32.mxu0 %v2855
    %3470 = vmatmul.mubr.f32.gmra.mxu0 %v2854
    %v3471 = vpop.f32.mrf.mxu0
    %v3472 = vadd.f32 %v3402, %v3471
    %v3473 = vpop.f32.mrf.mxu0
    %3474 = vdwg.mxu0
    %3475 = vmatprep.subr.mxu0 0.0
    %3476 = vmatpush1.msra.mxu0 %v3037
    %3477 = vmatprep.subr.mxu0 0.0
    %3478 = vmatpush1.msra.mxu0 %v3036
    %3479 = vmatprep.subr.mxu0 0.0
    %3480 = vmatpush1.msra.mxu0 %v3035
    %3481 = vmatprep.subr.mxu0 0.0
    %3482 = vmatpush1.msra.mxu0 %v3034
    %3483 = vmatprep.subr.mxu0 0.0
    %3484 = vmatpush1.msra.mxu0 %v3033
    %3485 = vmatprep.subr.mxu0 0.0
    %3486 = vmatpush1.msra.mxu0 %v3032
    %3487 = vmatprep.subr.mxu0 0.0
    %3488 = vmatpush1.msra.mxu0 %v3031
    %3489 = vmatprep.subr.mxu0 0.0
    %3490 = vmatpush1.msra.mxu0 %v3030
    %3491 = vmatprep.subr.mxu0 0.0
    %3492 = vmatpush1.msra.mxu0 %v3029
    %3493 = vmatprep.subr.mxu0 0.0
    %3494 = vmatpush1.msra.mxu0 %v3028
    %3495 = vmatprep.subr.mxu0 0.0
    %3496 = vmatpush1.msra.mxu0 %v3027
    %3497 = vmatprep.subr.mxu0 0.0
    %3498 = vmatpush1.msra.mxu0 %v3026
    %3499 = vmatprep.subr.mxu0 0.0
    %3500 = vmatpush1.msra.mxu0 %v3025
    %3501 = vmatprep.subr.mxu0 0.0
    %3502 = vmatpush1.msra.mxu0 %v3024
    %3503 = vmatprep.subr.mxu0 0.0
    %3504 = vmatpush1.msra.mxu0 %v3023
    %3505 = vmatprep.subr.mxu0 0.0
    %3506 = vmatpush1.msra.mxu0 %v3022
    %3507 = vmatprep.subr.mxu0 0.0
    %3508 = vmatpush2.msra.mxu0 %v3053
    %3509 = vmatprep.subr.mxu0 0.0
    %3510 = vmatpush2.msra.mxu0 %v3052
    %3511 = vmatprep.subr.mxu0 0.0
    %3512 = vmatpush2.msra.mxu0 %v3051
    %3513 = vmatprep.subr.mxu0 0.0
    %3514 = vmatpush2.msra.mxu0 %v3050
    %3515 = vmatprep.subr.mxu0 0.0
    %3516 = vmatpush2.msra.mxu0 %v3049
    %3517 = vmatprep.subr.mxu0 0.0
    %3518 = vmatpush2.msra.mxu0 %v3048
    %3519 = vmatprep.subr.mxu0 0.0
    %3520 = vmatpush2.msra.mxu0 %v3047
    %3521 = vmatprep.subr.mxu0 0.0
    %3522 = vmatpush2.msra.mxu0 %v3046
    %3523 = vmatprep.subr.mxu0 0.0
    %3524 = vmatpush2.msra.mxu0 %v3045
    %3525 = vmatprep.subr.mxu0 0.0
    %3526 = vmatpush2.msra.mxu0 %v3044
    %3527 = vmatprep.subr.mxu0 0.0
    %3528 = vmatpush2.msra.mxu0 %v3043
    %3529 = vmatprep.subr.mxu0 0.0
    %3530 = vmatpush2.msra.mxu0 %v3042
    %3531 = vmatprep.subr.mxu0 0.0
    %3532 = vmatpush2.msra.mxu0 %v3041
    %3533 = vmatprep.subr.mxu0 0.0
    %3534 = vmatpush2.msra.mxu0 %v3040
    %3535 = vmatprep.subr.mxu0 0.0
    %3536 = vmatpush2.msra.mxu0 %v3039
    %3537 = vmatprep.subr.mxu0 0.0
    %3538 = vmatpush2.msra.mxu0 %v3038
    %3539 = vmatprep.mubr.f32.mxu0 %v2857
    %3540 = vmatmul.mubr.f32.gmra.mxu0 %v2856
    %v3541 = vpop.f32.mrf.mxu0
    %v3542 = vadd.f32 %v3472, %v3541
    %v3543 = vpop.f32.mrf.mxu0
    %3544 = vdwg.mxu0
    %3545 = vmatprep.subr.mxu0 0.0
    %3546 = vmatpush1.msra.mxu0 %v3069
    %3547 = vmatprep.subr.mxu0 0.0
    %3548 = vmatpush1.msra.mxu0 %v3068
    %3549 = vmatprep.subr.mxu0 0.0
    %3550 = vmatpush1.msra.mxu0 %v3067
    %3551 = vmatprep.subr.mxu0 0.0
    %3552 = vmatpush1.msra.mxu0 %v3066
    %3553 = vmatprep.subr.mxu0 0.0
    %3554 = vmatpush1.msra.mxu0 %v3065
    %3555 = vmatprep.subr.mxu0 0.0
    %3556 = vmatpush1.msra.mxu0 %v3064
    %3557 = vmatprep.subr.mxu0 0.0
    %3558 = vmatpush1.msra.mxu0 %v3063
    %3559 = vmatprep.subr.mxu0 0.0
    %3560 = vmatpush1.msra.mxu0 %v3062
    %3561 = vmatprep.subr.mxu0 0.0
    %3562 = vmatpush1.msra.mxu0 %v3061
    %3563 = vmatprep.subr.mxu0 0.0
    %3564 = vmatpush1.msra.mxu0 %v3060
    %3565 = vmatprep.subr.mxu0 0.0
    %3566 = vmatpush1.msra.mxu0 %v3059
    %3567 = vmatprep.subr.mxu0 0.0
    %3568 = vmatpush1.msra.mxu0 %v3058
    %3569 = vmatprep.subr.mxu0 0.0
    %3570 = vmatpush1.msra.mxu0 %v3057
    %3571 = vmatprep.subr.mxu0 0.0
    %3572 = vmatpush1.msra.mxu0 %v3056
    %3573 = vmatprep.subr.mxu0 0.0
    %3574 = vmatpush1.msra.mxu0 %v3055
    %3575 = vmatprep.subr.mxu0 0.0
    %3576 = vmatpush1.msra.mxu0 %v3054
    %3577 = vmatprep.subr.mxu0 0.0
    %3578 = vmatpush2.msra.mxu0 %v3085
    %3579 = vmatprep.subr.mxu0 0.0
    %3580 = vmatpush2.msra.mxu0 %v3084
    %3581 = vmatprep.subr.mxu0 0.0
    %3582 = vmatpush2.msra.mxu0 %v3083
    %3583 = vmatprep.subr.mxu0 0.0
    %3584 = vmatpush2.msra.mxu0 %v3082
    %3585 = vmatprep.subr.mxu0 0.0
    %3586 = vmatpush2.msra.mxu0 %v3081
    %3587 = vmatprep.subr.mxu0 0.0
    %3588 = vmatpush2.msra.mxu0 %v3080
    %3589 = vmatprep.subr.mxu0 0.0
    %3590 = vmatpush2.msra.mxu0 %v3079
    %3591 = vmatprep.subr.mxu0 0.0
    %3592 = vmatpush2.msra.mxu0 %v3078
    %3593 = vmatprep.subr.mxu0 0.0
    %3594 = vmatpush2.msra.mxu0 %v3077
    %3595 = vmatprep.subr.mxu0 0.0
    %3596 = vmatpush2.msra.mxu0 %v3076
    %3597 = vmatprep.subr.mxu0 0.0
    %3598 = vmatpush2.msra.mxu0 %v3075
    %3599 = vmatprep.subr.mxu0 0.0
    %3600 = vmatpush2.msra.mxu0 %v3074
    %3601 = vmatprep.subr.mxu0 0.0
    %3602 = vmatpush2.msra.mxu0 %v3073
    %3603 = vmatprep.subr.mxu0 0.0
    %3604 = vmatpush2.msra.mxu0 %v3072
    %3605 = vmatprep.subr.mxu0 0.0
    %3606 = vmatpush2.msra.mxu0 %v3071
    %3607 = vmatprep.subr.mxu0 0.0
    %3608 = vmatpush2.msra.mxu0 %v3070
    %3609 = vmatprep.mubr.f32.mxu0 %v2859
    %3610 = vmatmul.mubr.f32.gmra.mxu0 %v2858
    %v3611 = vpop.f32.mrf.mxu0
    %v3612 = vadd.f32 %v3542, %v3611
    %v3613 = vpop.f32.mrf.mxu0
    %3614 = vdwg.mxu0
    %3615 = vmatprep.subr.mxu0 0.0
    %3616 = vmatpush1.msra.mxu0 %v3101
    %3617 = vmatprep.subr.mxu0 0.0
    %3618 = vmatpush1.msra.mxu0 %v3100
    %3619 = vmatprep.subr.mxu0 0.0
    %3620 = vmatpush1.msra.mxu0 %v3099
    %3621 = vmatprep.subr.mxu0 0.0
    %3622 = vmatpush1.msra.mxu0 %v3098
    %3623 = vmatprep.subr.mxu0 0.0
    %3624 = vmatpush1.msra.mxu0 %v3097
    %3625 = vmatprep.subr.mxu0 0.0
    %3626 = vmatpush1.msra.mxu0 %v3096
    %3627 = vmatprep.subr.mxu0 0.0
    %3628 = vmatpush1.msra.mxu0 %v3095
    %3629 = vmatprep.subr.mxu0 0.0
    %3630 = vmatpush1.msra.mxu0 %v3094
    %3631 = vmatprep.subr.mxu0 0.0
    %3632 = vmatpush1.msra.mxu0 %v3093
    %3633 = vmatprep.subr.mxu0 0.0
    %3634 = vmatpush1.msra.mxu0 %v3092
    %3635 = vmatprep.subr.mxu0 0.0
    %3636 = vmatpush1.msra.mxu0 %v3091
    %3637 = vmatprep.subr.mxu0 0.0
    %3638 = vmatpush1.msra.mxu0 %v3090
    %3639 = vmatprep.subr.mxu0 0.0
    %3640 = vmatpush1.msra.mxu0 %v3089
    %3641 = vmatprep.subr.mxu0 0.0
    %3642 = vmatpush1.msra.mxu0 %v3088
    %3643 = vmatprep.subr.mxu0 0.0
    %3644 = vmatpush1.msra.mxu0 %v3087
    %3645 = vmatprep.subr.mxu0 0.0
    %3646 = vmatpush1.msra.mxu0 %v3086
    %3647 = vmatprep.subr.mxu0 0.0
    %3648 = vmatpush2.msra.mxu0 %v3117
    %3649 = vmatprep.subr.mxu0 0.0
    %3650 = vmatpush2.msra.mxu0 %v3116
    %3651 = vmatprep.subr.mxu0 0.0
    %3652 = vmatpush2.msra.mxu0 %v3115
    %3653 = vmatprep.subr.mxu0 0.0
    %3654 = vmatpush2.msra.mxu0 %v3114
    %3655 = vmatprep.subr.mxu0 0.0
    %3656 = vmatpush2.msra.mxu0 %v3113
    %3657 = vmatprep.subr.mxu0 0.0
    %3658 = vmatpush2.msra.mxu0 %v3112
    %3659 = vmatprep.subr.mxu0 0.0
    %3660 = vmatpush2.msra.mxu0 %v3111
    %3661 = vmatprep.subr.mxu0 0.0
    %3662 = vmatpush2.msra.mxu0 %v3110
    %3663 = vmatprep.subr.mxu0 0.0
    %3664 = vmatpush2.msra.mxu0 %v3109
    %3665 = vmatprep.subr.mxu0 0.0
    %3666 = vmatpush2.msra.mxu0 %v3108
    %3667 = vmatprep.subr.mxu0 0.0
    %3668 = vmatpush2.msra.mxu0 %v3107
    %3669 = vmatprep.subr.mxu0 0.0
    %3670 = vmatpush2.msra.mxu0 %v3106
    %3671 = vmatprep.subr.mxu0 0.0
    %3672 = vmatpush2.msra.mxu0 %v3105
    %3673 = vmatprep.subr.mxu0 0.0
    %3674 = vmatpush2.msra.mxu0 %v3104
    %3675 = vmatprep.subr.mxu0 0.0
    %3676 = vmatpush2.msra.mxu0 %v3103
    %3677 = vmatprep.subr.mxu0 0.0
    %3678 = vmatpush2.msra.mxu0 %v3102
    %3679 = vmatprep.mubr.f32.mxu0 %v2861
    %3680 = vmatmul.mubr.f32.gmra.mxu0 %v2860
    %v3681 = vpop.f32.mrf.mxu0
    %v3682 = vadd.f32 %v3612, %v3681
    %v3683 = vpop.f32.mrf.mxu0
    %3684 = vdwg.mxu0
    %v3686 = vrot.slane %v3682, 1
    %v3687 = vrot.slane %v3682, 2
    %v3688 = vrot.slane %v3682, 3
    %v3689 = vrot.slane %v3682, 4
    %v3690 = vrot.slane %v3682, 5
    %v3691 = vrot.slane %v3682, 6
    %v3692 = vrot.slane %v3682, 7
    %v3701 = vadd.f32 %v1970, %v3682
    %v3702 = vadd.f32 %v1971, %v3686
    %v3703 = vadd.f32 %v1972, %v3687
    %v3704 = vadd.f32 %v1973, %v3688
    %v3705 = vadd.f32 %v1974, %v3689
    %v3706 = vadd.f32 %v1975, %v3690
    %v3707 = vadd.f32 %v1976, %v3691
    %v3708 = vadd.f32 %v1977, %v3692
    %v3709 = vld [vmem:[%s29] sm:$0x1]
    %v3710 = vld [vmem:[%s31] sm:$0x1]
    %v3719 = vrot.slane %v3702, 7
    %v3720 = vsel %vm307, %v3719, %v3701
    %v3721 = vrot.slane %v3703, 6
    %v3722 = vsel %vm309, %v3721, %v3720
    %v3723 = vrot.slane %v3704, 5
    %v3724 = vsel %vm311, %v3723, %v3722
    %v3725 = vrot.slane %v3705, 4
    %v3726 = vsel %vm313, %v3725, %v3724
    %v3727 = vrot.slane %v3706, 3
    %v3728 = vsel %vm315, %v3727, %v3726
    %v3729 = vrot.slane %v3707, 2
    %v3730 = vsel %vm317, %v3729, %v3728
    %v3731 = vrot.slane %v3708, 1
    %v3732 = vsel %vm319, %v3731, %v3730
    %v3734 = vsel %vm222, %v3732, 0.0
    %3735 = vadd.xlane.f32.xlu0 %v3734
    %v3736 = vpop.xlane.xlu0 %3735
    %v3737 = vmul.f32 %v3736, %v1863
    %v3739 = vrot.slane %v3737, 1
    %v3740 = vrot.slane %v3737, 2
    %v3741 = vrot.slane %v3737, 3
    %v3742 = vrot.slane %v3737, 4
    %v3743 = vrot.slane %v3737, 5
    %v3744 = vrot.slane %v3737, 6
    %v3745 = vrot.slane %v3737, 7
    %v3754 = vsub.f32 %v3701, %v3737
    %v3755 = vsub.f32 %v3702, %v3739
    %v3756 = vsub.f32 %v3703, %v3740
    %v3757 = vsub.f32 %v3704, %v3741
    %v3758 = vsub.f32 %v3705, %v3742
    %v3759 = vsub.f32 %v3706, %v3743
    %v3760 = vsub.f32 %v3707, %v3744
    %v3761 = vsub.f32 %v3708, %v3745
    %v3762 = vmul.f32 %v3754, %v3754
    %v3763 = vmul.f32 %v3755, %v3755
    %v3764 = vmul.f32 %v3756, %v3756
    %v3765 = vmul.f32 %v3757, %v3757
    %v3766 = vmul.f32 %v3758, %v3758
    %v3767 = vmul.f32 %v3759, %v3759
    %v3768 = vmul.f32 %v3760, %v3760
    %v3769 = vmul.f32 %v3761, %v3761
    %v3778 = vrot.slane %v3763, 7
    %v3779 = vsel %vm307, %v3778, %v3762
    %v3780 = vrot.slane %v3764, 6
    %v3781 = vsel %vm309, %v3780, %v3779
    %v3782 = vrot.slane %v3765, 5
    %v3783 = vsel %vm311, %v3782, %v3781
    %v3784 = vrot.slane %v3766, 4
    %v3785 = vsel %vm313, %v3784, %v3783
    %v3786 = vrot.slane %v3767, 3
    %v3787 = vsel %vm315, %v3786, %v3785
    %v3788 = vrot.slane %v3768, 2
    %v3789 = vsel %vm317, %v3788, %v3787
    %v3790 = vrot.slane %v3769, 1
    %v3791 = vsel %vm319, %v3790, %v3789
    %v3793 = vsel %vm222, %v3791, 0.0
    %3794 = vadd.xlane.f32.xlu0 %v3793
    %v3795 = vpop.xlane.xlu0 %3794
    %v3796 = vmul.f32 %v3795, %v1863
    %v3797 = vadd.f32 %v3796, 1e-05
    %v3798 = vrsqrt.pop %v3797
    %v3800 = vrot.slane %v3798, 1
    %v3801 = vrot.slane %v3798, 2
    %v3802 = vrot.slane %v3798, 3
    %v3803 = vrot.slane %v3798, 4
    %v3804 = vrot.slane %v3798, 5
    %v3805 = vrot.slane %v3798, 6
    %v3806 = vrot.slane %v3798, 7
    %v3815 = vmul.f32 %v3754, %v3798
    %v3816 = vmul.f32 %v3755, %v3800
    %v3817 = vmul.f32 %v3756, %v3801
    %v3818 = vmul.f32 %v3757, %v3802
    %v3819 = vmul.f32 %v3758, %v3803
    %v3820 = vmul.f32 %v3759, %v3804
    %v3821 = vmul.f32 %v3760, %v3805
    %v3822 = vmul.f32 %v3761, %v3806
    %v3824 = vlaneseq
    %v3825 = vshrl.u32 %v3824, 7
    %v3826 = vsub.s32 0, %v3825
    %v3827 = vrot.slane %v3709, %v3826
    %v3829 = vmul.f32 %v3815, %v3827
    %v3830 = vmul.f32 %v3816, %v3827
    %v3831 = vmul.f32 %v3817, %v3827
    %v3832 = vmul.f32 %v3818, %v3827
    %v3833 = vmul.f32 %v3819, %v3827
    %v3834 = vmul.f32 %v3820, %v3827
    %v3835 = vmul.f32 %v3821, %v3827
    %v3836 = vmul.f32 %v3822, %v3827
    %v3838 = vlaneseq
    %v3839 = vshrl.u32 %v3838, 7
    %v3840 = vsub.s32 0, %v3839
    %v3841 = vrot.slane %v3710, %v3840
    %v3843 = vadd.f32 %v3829, %v3841
    %v3844 = vadd.f32 %v3830, %v3841
    %v3845 = vadd.f32 %v3831, %v3841
    %v3846 = vadd.f32 %v3832, %v3841
    %v3847 = vadd.f32 %v3833, %v3841
    %v3848 = vadd.f32 %v3834, %v3841
    %v3849 = vadd.f32 %v3835, %v3841
    %v3850 = vadd.f32 %v3836, %v3841
    %v3851 = vld [vmem:[%s5] sm:$0xf]
    %v3852 = vld [vmem:[%s41] sm:$0xff]
    %v3853 = vld [vmem:[%s41 + $0x8] sm:$0xff]
    %v3854 = vld [vmem:[%s41 + $0x10] sm:$0xff]
    %v3855 = vld [vmem:[%s41 + $0x18] sm:$0xff]
    %v3856 = vld [vmem:[%s41 + $0x20] sm:$0xff]
    %v3857 = vld [vmem:[%s41 + $0x28] sm:$0xff]
    %v3858 = vld [vmem:[%s41 + $0x30] sm:$0xff]
    %v3859 = vld [vmem:[%s41 + $0x38] sm:$0xff]
    %v3860 = vld [vmem:[%s41 + $0x40] sm:$0xff]
    %v3861 = vld [vmem:[%s41 + $0x48] sm:$0xff]
    %v3862 = vld [vmem:[%s41 + $0x50] sm:$0xff]
    %v3863 = vld [vmem:[%s41 + $0x58] sm:$0xff]
    %v3865 = vsel %vm222, %v3851, 0
    %3867 = vmatprep.subr.mxu0 0.0
    %3868 = vmatpush1.msra.mxu0 0.0
    %3869 = vmatprep.subr.mxu0 0.0
    %3870 = vmatpush1.msra.mxu0 0.0
    %3871 = vmatprep.subr.mxu0 0.0
    %3872 = vmatpush1.msra.mxu0 0.0
    %3873 = vmatprep.subr.mxu0 0.0
    %3874 = vmatpush1.msra.mxu0 0.0
    %3875 = vmatprep.subr.mxu0 0.0
    %3876 = vmatpush1.msra.mxu0 %v3863
    %3877 = vmatprep.subr.mxu0 0.0
    %3878 = vmatpush1.msra.mxu0 %v3862
    %3879 = vmatprep.subr.mxu0 0.0
    %3880 = vmatpush1.msra.mxu0 %v3861
    %3881 = vmatprep.subr.mxu0 0.0
    %3882 = vmatpush1.msra.mxu0 %v3860
    %3883 = vmatprep.subr.mxu0 0.0
    %3884 = vmatpush1.msra.mxu0 %v3859
    %3885 = vmatprep.subr.mxu0 0.0
    %3886 = vmatpush1.msra.mxu0 %v3858
    %3887 = vmatprep.subr.mxu0 0.0
    %3888 = vmatpush1.msra.mxu0 %v3857
    %3889 = vmatprep.subr.mxu0 0.0
    %3890 = vmatpush1.msra.mxu0 %v3856
    %3891 = vmatprep.subr.mxu0 0.0
    %3892 = vmatpush1.msra.mxu0 %v3855
    %3893 = vmatprep.subr.mxu0 0.0
    %3894 = vmatpush1.msra.mxu0 %v3854
    %3895 = vmatprep.subr.mxu0 0.0
    %3896 = vmatpush1.msra.mxu0 %v3853
    %3897 = vmatprep.subr.mxu0 0.0
    %3898 = vmatpush1.msra.mxu0 %v3852
    %3899 = vmatprep.subr.mxu0 0.0
    %3900 = vmatpush2.msra.mxu0 0.0
    %3901 = vmatprep.subr.mxu0 0.0
    %3902 = vmatpush2.msra.mxu0 0.0
    %3903 = vmatprep.subr.mxu0 0.0
    %3904 = vmatpush2.msra.mxu0 0.0
    %3905 = vmatprep.subr.mxu0 0.0
    %3906 = vmatpush2.msra.mxu0 0.0
    %3907 = vmatprep.subr.mxu0 0.0
    %3908 = vmatpush2.msra.mxu0 0.0
    %3909 = vmatprep.subr.mxu0 0.0
    %3910 = vmatpush2.msra.mxu0 0.0
    %3911 = vmatprep.subr.mxu0 0.0
    %3912 = vmatpush2.msra.mxu0 0.0
    %3913 = vmatprep.subr.mxu0 0.0
    %3914 = vmatpush2.msra.mxu0 0.0
    %3915 = vmatprep.subr.mxu0 0.0
    %3916 = vmatpush2.msra.mxu0 0.0
    %3917 = vmatprep.subr.mxu0 0.0
    %3918 = vmatpush2.msra.mxu0 0.0
    %3919 = vmatprep.subr.mxu0 0.0
    %3920 = vmatpush2.msra.mxu0 0.0
    %3921 = vmatprep.subr.mxu0 0.0
    %3922 = vmatpush2.msra.mxu0 0.0
    %3923 = vmatprep.subr.mxu0 0.0
    %3924 = vmatpush2.msra.mxu0 0.0
    %3925 = vmatprep.subr.mxu0 0.0
    %3926 = vmatpush2.msra.mxu0 0.0
    %3927 = vmatprep.subr.mxu0 0.0
    %3928 = vmatpush2.msra.mxu0 0.0
    %3929 = vmatprep.subr.mxu0 0.0
    %3930 = vmatpush2.msra.mxu0 0.0
    %3931 = vmatprep.mubr.f32.mxu0 0.0
    %3932 = vmatmul.mubr.f32.gmra.mxu0 %v3865
    %v3933 = vpop.f32.mrf.mxu0
    %v3934 = vadd.f32 0.0, %v3933
    %v3935 = vpop.f32.mrf.mxu0
    %3936 = vdwg.mxu0
    %v3937 = vld [vmem:[%s43] sm:$0xff]
    %v3938 = vld [vmem:[%s43 + $0x8] sm:$0xff]
    %v3939 = vld [vmem:[%s43 + $0x10] sm:$0xff]
    %v3940 = vld [vmem:[%s43 + $0x18] sm:$0xff]
    %v3941 = vld [vmem:[%s43 + $0x20] sm:$0xff]
    %v3942 = vld [vmem:[%s43 + $0x28] sm:$0xff]
    %v3943 = vld [vmem:[%s43 + $0x30] sm:$0xff]
    %v3944 = vld [vmem:[%s43 + $0x38] sm:$0xff]
    %v3945 = vld [vmem:[%s43 + $0x40] sm:$0xff]
    %v3946 = vld [vmem:[%s43 + $0x48] sm:$0xff]
    %v3947 = vld [vmem:[%s43 + $0x50] sm:$0xff]
    %v3948 = vld [vmem:[%s43 + $0x58] sm:$0xff]
    %3949 = vmatprep.subr.mxu0 0.0
    %3950 = vmatpush1.msra.mxu0 0.0
    %3951 = vmatprep.subr.mxu0 0.0
    %3952 = vmatpush1.msra.mxu0 0.0
    %3953 = vmatprep.subr.mxu0 0.0
    %3954 = vmatpush1.msra.mxu0 0.0
    %3955 = vmatprep.subr.mxu0 0.0
    %3956 = vmatpush1.msra.mxu0 0.0
    %3957 = vmatprep.subr.mxu0 0.0
    %3958 = vmatpush1.msra.mxu0 %v3948
    %3959 = vmatprep.subr.mxu0 0.0
    %3960 = vmatpush1.msra.mxu0 %v3947
    %3961 = vmatprep.subr.mxu0 0.0
    %3962 = vmatpush1.msra.mxu0 %v3946
    %3963 = vmatprep.subr.mxu0 0.0
    %3964 = vmatpush1.msra.mxu0 %v3945
    %3965 = vmatprep.subr.mxu0 0.0
    %3966 = vmatpush1.msra.mxu0 %v3944
    %3967 = vmatprep.subr.mxu0 0.0
    %3968 = vmatpush1.msra.mxu0 %v3943
    %3969 = vmatprep.subr.mxu0 0.0
    %3970 = vmatpush1.msra.mxu0 %v3942
    %3971 = vmatprep.subr.mxu0 0.0
    %3972 = vmatpush1.msra.mxu0 %v3941
    %3973 = vmatprep.subr.mxu0 0.0
    %3974 = vmatpush1.msra.mxu0 %v3940
    %3975 = vmatprep.subr.mxu0 0.0
    %3976 = vmatpush1.msra.mxu0 %v3939
    %3977 = vmatprep.subr.mxu0 0.0
    %3978 = vmatpush1.msra.mxu0 %v3938
    %3979 = vmatprep.subr.mxu0 0.0
    %3980 = vmatpush1.msra.mxu0 %v3937
    %3981 = vmatprep.subr.mxu0 0.0
    %3982 = vmatpush2.msra.mxu0 0.0
    %3983 = vmatprep.subr.mxu0 0.0
    %3984 = vmatpush2.msra.mxu0 0.0
    %3985 = vmatprep.subr.mxu0 0.0
    %3986 = vmatpush2.msra.mxu0 0.0
    %3987 = vmatprep.subr.mxu0 0.0
    %3988 = vmatpush2.msra.mxu0 0.0
    %3989 = vmatprep.subr.mxu0 0.0
    %3990 = vmatpush2.msra.mxu0 0.0
    %3991 = vmatprep.subr.mxu0 0.0
    %3992 = vmatpush2.msra.mxu0 0.0
    %3993 = vmatprep.subr.mxu0 0.0
    %3994 = vmatpush2.msra.mxu0 0.0
    %3995 = vmatprep.subr.mxu0 0.0
    %3996 = vmatpush2.msra.mxu0 0.0
    %3997 = vmatprep.subr.mxu0 0.0
    %3998 = vmatpush2.msra.mxu0 0.0
    %3999 = vmatprep.subr.mxu0 0.0
    %4000 = vmatpush2.msra.mxu0 0.0
    %4001 = vmatprep.subr.mxu0 0.0
    %4002 = vmatpush2.msra.mxu0 0.0
    %4003 = vmatprep.subr.mxu0 0.0
    %4004 = vmatpush2.msra.mxu0 0.0
    %4005 = vmatprep.subr.mxu0 0.0
    %4006 = vmatpush2.msra.mxu0 0.0
    %4007 = vmatprep.subr.mxu0 0.0
    %4008 = vmatpush2.msra.mxu0 0.0
    %4009 = vmatprep.subr.mxu0 0.0
    %4010 = vmatpush2.msra.mxu0 0.0
    %4011 = vmatprep.subr.mxu0 0.0
    %4012 = vmatpush2.msra.mxu0 0.0
    %4013 = vmatprep.mubr.f32.mxu0 0.0
    %4014 = vmatmul.mubr.f32.gmra.mxu0 %v3865
    %v4015 = vpop.f32.mrf.mxu0
    %v4016 = vadd.f32 0.0, %v4015
    %v4017 = vpop.f32.mrf.mxu0
    %4018 = vdwg.mxu0
    %v4023 = vrot.slane %v3844, 7
    %v4024 = vsel %vm307, %v4023, %v3843
    %v4025 = vrot.slane %v3845, 6
    %v4026 = vsel %vm309, %v4025, %v4024
    %v4027 = vrot.slane %v3846, 5
    %v4028 = vsel %vm311, %v4027, %v4026
    %4029 = vrot.lane.b32.xlu0 %v4028, 32
    %v4030 = vpop.permute.xlu0 %4029
    %vm4032 = vcmask 261120
    %v4033 = vsel %vm4032, %v3934, %v4030
    %v4038 = vrot.slane %v3848, 7
    %v4039 = vsel %vm307, %v4038, %v3847
    %v4040 = vrot.slane %v3849, 6
    %v4041 = vsel %vm309, %v4040, %v4039
    %v4042 = vrot.slane %v3850, 5
    %v4043 = vsel %vm311, %v4042, %v4041
    %4044 = vrot.lane.b32.xlu0 %v4043, 32
    %v4045 = vpop.permute.xlu0 %4044
    %v4047 = vsel %vm4032, %v4016, %v4045
    %v4048 = vld [vmem:[%s45] sm:$0x1]
    %v4049 = vld [vmem:[%s47] sm:$0x1]
    %vm4050 = vcmask 1043456
    %v4051 = vsel %vm4050, %v4033, 0.0
    %4052 = vadd.xlane.f32.xlu0 %v4051
    %v4053 = vpop.xlane.xlu0 %4052
    %v4054 = vrcp.pop 128.0
    %v4055 = vmul.f32 %v4053, %v4054
    %v4056 = vsub.f32 %v4033, %v4055
    %v4057 = vmul.f32 %v4056, %v4056
    %v4058 = vsel %vm4050, %v4057, 0.0
    %4059 = vadd.xlane.f32.xlu0 %v4058
    %v4060 = vpop.xlane.xlu0 %4059
    %v4061 = vmul.f32 %v4060, %v4054
    %v4062 = vadd.f32 %v4061, 1e-05
    %v4063 = vrsqrt.pop %v4062
    %v4064 = vmul.f32 %v4056, %v4063
    %v4066 = vlaneseq
    %v4067 = vshrl.u32 %v4066, 7
    %v4068 = vsub.s32 0, %v4067
    %v4069 = vrot.slane %v4048, %v4068
    %v4071 = vmul.f32 %v4064, %v4069
    %v4073 = vlaneseq
    %v4074 = vshrl.u32 %v4073, 7
    %v4075 = vsub.s32 0, %v4074
    %v4076 = vrot.slane %v4049, %v4075
    %v4078 = vadd.f32 %v4071, %v4076
    %v4079 = vld [vmem:[%s49] sm:$0xff]
    %v4080 = vld [vmem:[%s49 + $0x8] sm:$0xff]
    %v4081 = vld [vmem:[%s49 + $0x10] sm:$0xff]
    %v4082 = vld [vmem:[%s49 + $0x18] sm:$0xff]
    %v4083 = vld [vmem:[%s49 + $0x20] sm:$0xff]
    %v4084 = vld [vmem:[%s49 + $0x28] sm:$0xff]
    %v4085 = vld [vmem:[%s49 + $0x30] sm:$0xff]
    %v4086 = vld [vmem:[%s49 + $0x38] sm:$0xff]
    %v4087 = vld [vmem:[%s49 + $0x40] sm:$0xff]
    %v4088 = vld [vmem:[%s49 + $0x48] sm:$0xff]
    %v4089 = vld [vmem:[%s49 + $0x50] sm:$0xff]
    %v4090 = vld [vmem:[%s49 + $0x58] sm:$0xff]
    %v4091 = vld [vmem:[%s49 + $0x60] sm:$0xff]
    %v4092 = vld [vmem:[%s49 + $0x68] sm:$0xff]
    %v4093 = vld [vmem:[%s49 + $0x70] sm:$0xff]
    %v4094 = vld [vmem:[%s49 + $0x78] sm:$0xff]
    %4095 = vmatprep.subr.mxu0 0.0
    %4096 = vmatpush1.msra.mxu0 %v4094
    %4097 = vmatprep.subr.mxu0 0.0
    %4098 = vmatpush1.msra.mxu0 %v4093
    %4099 = vmatprep.subr.mxu0 0.0
    %4100 = vmatpush1.msra.mxu0 %v4092
    %4101 = vmatprep.subr.mxu0 0.0
    %4102 = vmatpush1.msra.mxu0 %v4091
    %4103 = vmatprep.subr.mxu0 0.0
    %4104 = vmatpush1.msra.mxu0 %v4090
    %4105 = vmatprep.subr.mxu0 0.0
    %4106 = vmatpush1.msra.mxu0 %v4089
    %4107 = vmatprep.subr.mxu0 0.0
    %4108 = vmatpush1.msra.mxu0 %v4088
    %4109 = vmatprep.subr.mxu0 0.0
    %4110 = vmatpush1.msra.mxu0 %v4087
    %4111 = vmatprep.subr.mxu0 0.0
    %4112 = vmatpush1.msra.mxu0 %v4086
    %4113 = vmatprep.subr.mxu0 0.0
    %4114 = vmatpush1.msra.mxu0 %v4085
    %4115 = vmatprep.subr.mxu0 0.0
    %4116 = vmatpush1.msra.mxu0 %v4084
    %4117 = vmatprep.subr.mxu0 0.0
    %4118 = vmatpush1.msra.mxu0 %v4083
    %4119 = vmatprep.subr.mxu0 0.0
    %4120 = vmatpush1.msra.mxu0 %v4082
    %4121 = vmatprep.subr.mxu0 0.0
    %4122 = vmatpush1.msra.mxu0 %v4081
    %4123 = vmatprep.subr.mxu0 0.0
    %4124 = vmatpush1.msra.mxu0 %v4080
    %4125 = vmatprep.subr.mxu0 0.0
    %4126 = vmatpush1.msra.mxu0 %v4079
    %4127 = vmatprep.subr.mxu0 0.0
    %4128 = vmatpush2.msra.mxu0 0.0
    %4129 = vmatprep.subr.mxu0 0.0
    %4130 = vmatpush2.msra.mxu0 0.0
    %4131 = vmatprep.subr.mxu0 0.0
    %4132 = vmatpush2.msra.mxu0 0.0
    %4133 = vmatprep.subr.mxu0 0.0
    %4134 = vmatpush2.msra.mxu0 0.0
    %4135 = vmatprep.subr.mxu0 0.0
    %4136 = vmatpush2.msra.mxu0 0.0
    %4137 = vmatprep.subr.mxu0 0.0
    %4138 = vmatpush2.msra.mxu0 0.0
    %4139 = vmatprep.subr.mxu0 0.0
    %4140 = vmatpush2.msra.mxu0 0.0
    %4141 = vmatprep.subr.mxu0 0.0
    %4142 = vmatpush2.msra.mxu0 0.0
    %4143 = vmatprep.subr.mxu0 0.0
    %4144 = vmatpush2.msra.mxu0 0.0
    %4145 = vmatprep.subr.mxu0 0.0
    %4146 = vmatpush2.msra.mxu0 0.0
    %4147 = vmatprep.subr.mxu0 0.0
    %4148 = vmatpush2.msra.mxu0 0.0
    %4149 = vmatprep.subr.mxu0 0.0
    %4150 = vmatpush2.msra.mxu0 0.0
    %4151 = vmatprep.subr.mxu0 0.0
    %4152 = vmatpush2.msra.mxu0 0.0
    %4153 = vmatprep.subr.mxu0 0.0
    %4154 = vmatpush2.msra.mxu0 0.0
    %4155 = vmatprep.subr.mxu0 0.0
    %4156 = vmatpush2.msra.mxu0 0.0
    %4157 = vmatprep.subr.mxu0 0.0
    %4158 = vmatpush2.msra.mxu0 0.0
    %4159 = vmatprep.mubr.f32.mxu0 0.0
    %4160 = vmatmul.mubr.f32.gmra.mxu0 %v4078
    %v4161 = vpop.f32.mrf.mxu0
    %v4162 = vadd.f32 0.0, %v4161
    %v4163 = vpop.f32.mrf.mxu0
    %4164 = vdwg.mxu0
    %v4165 = vld [vmem:[%s51] sm:$0x1]
    %v4166 = vld [vmem:[%s53] sm:$0x1]
    %v4167 = vsel %vm4050, %v4047, 0.0
    %4168 = vadd.xlane.f32.xlu0 %v4167
    %v4169 = vpop.xlane.xlu0 %4168
    %v4170 = vmul.f32 %v4169, %v4054
    %v4171 = vsub.f32 %v4047, %v4170
    %v4172 = vmul.f32 %v4171, %v4171
    %v4173 = vsel %vm4050, %v4172, 0.0
    %4174 = vadd.xlane.f32.xlu0 %v4173
    %v4175 = vpop.xlane.xlu0 %4174
    %v4176 = vmul.f32 %v4175, %v4054
    %v4177 = vadd.f32 %v4176, 1e-05
    %v4178 = vrsqrt.pop %v4177
    %v4179 = vmul.f32 %v4171, %v4178
    %v4181 = vlaneseq
    %v4182 = vshrl.u32 %v4181, 7
    %v4183 = vsub.s32 0, %v4182
    %v4184 = vrot.slane %v4165, %v4183
    %v4186 = vmul.f32 %v4179, %v4184
    %v4188 = vlaneseq
    %v4189 = vshrl.u32 %v4188, 7
    %v4190 = vsub.s32 0, %v4189
    %v4191 = vrot.slane %v4166, %v4190
    %v4193 = vadd.f32 %v4186, %v4191
    %v4194 = vld [vmem:[%s55] sm:$0xff]
    %v4195 = vld [vmem:[%s55 + $0x8] sm:$0xff]
    %v4196 = vld [vmem:[%s55 + $0x10] sm:$0xff]
    %v4197 = vld [vmem:[%s55 + $0x18] sm:$0xff]
    %v4198 = vld [vmem:[%s55 + $0x20] sm:$0xff]
    %v4199 = vld [vmem:[%s55 + $0x28] sm:$0xff]
    %v4200 = vld [vmem:[%s55 + $0x30] sm:$0xff]
    %v4201 = vld [vmem:[%s55 + $0x38] sm:$0xff]
    %v4202 = vld [vmem:[%s55 + $0x40] sm:$0xff]
    %v4203 = vld [vmem:[%s55 + $0x48] sm:$0xff]
    %v4204 = vld [vmem:[%s55 + $0x50] sm:$0xff]
    %v4205 = vld [vmem:[%s55 + $0x58] sm:$0xff]
    %v4206 = vld [vmem:[%s55 + $0x60] sm:$0xff]
    %v4207 = vld [vmem:[%s55 + $0x68] sm:$0xff]
    %v4208 = vld [vmem:[%s55 + $0x70] sm:$0xff]
    %v4209 = vld [vmem:[%s55 + $0x78] sm:$0xff]
    %4210 = vmatprep.subr.mxu0 0.0
    %4211 = vmatpush1.msra.mxu0 %v4209
    %4212 = vmatprep.subr.mxu0 0.0
    %4213 = vmatpush1.msra.mxu0 %v4208
    %4214 = vmatprep.subr.mxu0 0.0
    %4215 = vmatpush1.msra.mxu0 %v4207
    %4216 = vmatprep.subr.mxu0 0.0
    %4217 = vmatpush1.msra.mxu0 %v4206
    %4218 = vmatprep.subr.mxu0 0.0
    %4219 = vmatpush1.msra.mxu0 %v4205
    %4220 = vmatprep.subr.mxu0 0.0
    %4221 = vmatpush1.msra.mxu0 %v4204
    %4222 = vmatprep.subr.mxu0 0.0
    %4223 = vmatpush1.msra.mxu0 %v4203
    %4224 = vmatprep.subr.mxu0 0.0
    %4225 = vmatpush1.msra.mxu0 %v4202
    %4226 = vmatprep.subr.mxu0 0.0
    %4227 = vmatpush1.msra.mxu0 %v4201
    %4228 = vmatprep.subr.mxu0 0.0
    %4229 = vmatpush1.msra.mxu0 %v4200
    %4230 = vmatprep.subr.mxu0 0.0
    %4231 = vmatpush1.msra.mxu0 %v4199
    %4232 = vmatprep.subr.mxu0 0.0
    %4233 = vmatpush1.msra.mxu0 %v4198
    %4234 = vmatprep.subr.mxu0 0.0
    %4235 = vmatpush1.msra.mxu0 %v4197
    %4236 = vmatprep.subr.mxu0 0.0
    %4237 = vmatpush1.msra.mxu0 %v4196
    %4238 = vmatprep.subr.mxu0 0.0
    %4239 = vmatpush1.msra.mxu0 %v4195
    %4240 = vmatprep.subr.mxu0 0.0
    %4241 = vmatpush1.msra.mxu0 %v4194
    %4242 = vmatprep.subr.mxu0 0.0
    %4243 = vmatpush2.msra.mxu0 0.0
    %4244 = vmatprep.subr.mxu0 0.0
    %4245 = vmatpush2.msra.mxu0 0.0
    %4246 = vmatprep.subr.mxu0 0.0
    %4247 = vmatpush2.msra.mxu0 0.0
    %4248 = vmatprep.subr.mxu0 0.0
    %4249 = vmatpush2.msra.mxu0 0.0
    %4250 = vmatprep.subr.mxu0 0.0
    %4251 = vmatpush2.msra.mxu0 0.0
    %4252 = vmatprep.subr.mxu0 0.0
    %4253 = vmatpush2.msra.mxu0 0.0
    %4254 = vmatprep.subr.mxu0 0.0
    %4255 = vmatpush2.msra.mxu0 0.0
    %4256 = vmatprep.subr.mxu0 0.0
    %4257 = vmatpush2.msra.mxu0 0.0
    %4258 = vmatprep.subr.mxu0 0.0
    %4259 = vmatpush2.msra.mxu0 0.0
    %4260 = vmatprep.subr.mxu0 0.0
    %4261 = vmatpush2.msra.mxu0 0.0
    %4262 = vmatprep.subr.mxu0 0.0
    %4263 = vmatpush2.msra.mxu0 0.0
    %4264 = vmatprep.subr.mxu0 0.0
    %4265 = vmatpush2.msra.mxu0 0.0
    %4266 = vmatprep.subr.mxu0 0.0
    %4267 = vmatpush2.msra.mxu0 0.0
    %4268 = vmatprep.subr.mxu0 0.0
    %4269 = vmatpush2.msra.mxu0 0.0
    %4270 = vmatprep.subr.mxu0 0.0
    %4271 = vmatpush2.msra.mxu0 0.0
    %4272 = vmatprep.subr.mxu0 0.0
    %4273 = vmatpush2.msra.mxu0 0.0
    %4274 = vmatprep.mubr.f32.mxu0 0.0
    %4275 = vmatmul.mubr.f32.gmra.mxu0 %v4193
    %v4276 = vpop.f32.mrf.mxu0
    %v4277 = vadd.f32 0.0, %v4276
    %v4278 = vpop.f32.mrf.mxu0
    %4279 = vdwg.mxu0
    %v4280 = vmax.f32 %v4162, %v4277
    %v4281 = vsel %vm4050, %v4280, -inf
    %4282 = vmax.xlane.f32.xlu0 %v4281
    %v4283 = vpop.xlane.xlu0 %4282
    %v4284 = vsub.f32 %v4280, %v4283
    %v4285 = vmul.f32 %v4284, 1.442695
    %v4286 = vpow.pop %v4285
    %v4287 = vsel %vm4050, %v4286, 0.0
    %4288 = vadd.xlane.f32.xlu0 %v4287
    %v4289 = vpop.xlane.xlu0 %4288
    %v4290 = vrcp.pop %v4289
    %v4291 = vmul.f32 %v4286, %v4290
    %4292 = vst [vmem:[#allocation4] sm:$0xf] %v4291
    %v4293 = vsel %vm4050, %v4162, -inf
    %4294 = vmax.xlane.f32.xlu0 %v4293
    %v4295 = vpop.xlane.xlu0 %4294
    %v4296 = vsub.f32 %v4162, %v4295
    %v4297 = vmul.f32 %v4296, 1.442695
    %v4298 = vpow.pop %v4297
    %v4299 = vsel %vm4050, %v4298, 0.0
    %4300 = vadd.xlane.f32.xlu0 %v4299
    %v4301 = vpop.xlane.xlu0 %4300
    %v4302 = vrcp.pop %v4301
    %v4303 = vmul.f32 %v4298, %v4302
    %4304 = vst [vmem:[#allocation6] sm:$0xf] %v4303
    %v4305 = vsel %vm4050, %v4277, -inf
    %4306 = vmax.xlane.f32.xlu0 %v4305
    %v4307 = vpop.xlane.xlu0 %4306
    %v4308 = vsub.f32 %v4277, %v4307
    %v4309 = vmul.f32 %v4308, 1.442695
    %v4310 = vpow.pop %v4309
    %v4311 = vsel %vm4050, %v4310, 0.0
    %4312 = vadd.xlane.f32.xlu0 %v4311
    %v4313 = vpop.xlane.xlu0 %4312
    %v4314 = vrcp.pop %v4313
    %v4315 = vmul.f32 %v4310, %v4314
    %4316 = vst [vmem:[#allocation7] sm:$0xf] %v4315
    %v4317 = vlog2.pop %v4289
    %v4318 = vmul.f32 %v4317, 0.6931472
    %v4319 = vsub.f32 %v4284, %v4318
    %v4320 = vld [vmem:[%s7] sm:$0xf]
    %v4321 = vmul.f32 %v4320, %v4319
    %v4322 = vsel %vm4050, %v4321, 0.0
    %4323 = vadd.xlane.f32.xlu0 %v4322
    %v4324 = vpop.xlane.xlu0 %4323
    %v4325 = vsub.f32 0.0, %v4324
    %vm4326 = vcmask 3072
    %v4327 = vsel %vm4326, %v4325, 0.0
    %4328 = vadd.xlane.f32.xlu0 %v4327
    %v4329 = vpop.xlane.xlu0 %4328
    %v4330 = vrot.slane %v4329, 4
    %v4331 = vadd.f32 %v4329, %v4330
    %v4332 = vrot.slane %v4331, 2
    %v4333 = vadd.f32 %v4331, %v4332
    %v4334 = vrot.slane %v4333, 1
    %v4335 = vadd.f32 %v4333, %v4334
    %s4336 = vtos %v4335
    %v4337 = vrcp.pop 4.0
    %s4338 = vtos %v4337
    %s4339 = smul.f32 %s4336, %s4338
    %v4340 = vmul.f32 %v3843, %v3843
    %v4341 = vmul.f32 %v3844, %v3844
    %v4342 = vmul.f32 %v3845, %v3845
    %v4343 = vmul.f32 %v3846, %v3846
    %v4348 = vrot.slane %v4341, 7
    %v4349 = vsel %vm307, %v4348, %v4340
    %v4350 = vrot.slane %v4342, 6
    %v4351 = vsel %vm309, %v4350, %v4349
    %v4352 = vrot.slane %v4343, 5
    %v4353 = vsel %vm311, %v4352, %v4351
    %vm4355 = vcmask 781312
    %v4356 = vsel %vm4355, %v4353, 0.0
    %4357 = vadd.xlane.f32.xlu0 %v4356
    %v4358 = vpop.xlane.xlu0 %4357
    %v4359 = vrsqrt.pop %v4358
    %v4360 = vmul.f32 %v4358, %v4359
    %vm4361 = vcmp.eq.f32.partialorder %v4358, inf
    %v4362 = vsel %vm4361, %v4358, %v4360
    %vm4363 = vcmp.eq.f32.partialorder %v4358, 0.0
    %v4364 = vand.u32 %v4358, 2147483648
    %v4365 = vsel %vm4363, %v4364, %v4362
    %v4366 = vmax.f32 %v4365, 1e-12
    %v4368 = vrot.slane %v4366, 1
    %v4369 = vrot.slane %v4366, 2
    %v4370 = vrot.slane %v4366, 3
    %v4375 = vrcp.pop %v4366
    %v4376 = vmul.f32 %v3843, %v4375
    %v4377 = vrcp.pop %v4368
    %v4378 = vmul.f32 %v3844, %v4377
    %v4379 = vrcp.pop %v4369
    %v4380 = vmul.f32 %v3845, %v4379
    %v4381 = vrcp.pop %v4370
    %v4382 = vmul.f32 %v3846, %v4381
    %v4383 = vmul.f32 %v3847, %v3847
    %v4384 = vmul.f32 %v3848, %v3848
    %v4385 = vmul.f32 %v3849, %v3849
    %v4386 = vmul.f32 %v3850, %v3850
    %v4391 = vrot.slane %v4384, 7
    %v4392 = vsel %vm307, %v4391, %v4383
    %v4393 = vrot.slane %v4385, 6
    %v4394 = vsel %vm309, %v4393, %v4392
    %v4395 = vrot.slane %v4386, 5
    %v4396 = vsel %vm311, %v4395, %v4394
    %v4398 = vsel %vm4355, %v4396, 0.0
    %4399 = vadd.xlane.f32.xlu0 %v4398
    %v4400 = vpop.xlane.xlu0 %4399
    %v4401 = vrsqrt.pop %v4400
    %v4402 = vmul.f32 %v4400, %v4401
    %vm4403 = vcmp.eq.f32.partialorder %v4400, inf
    %v4404 = vsel %vm4403, %v4400, %v4402
    %vm4405 = vcmp.eq.f32.partialorder %v4400, 0.0
    %v4406 = vand.u32 %v4400, 2147483648
    %v4407 = vsel %vm4405, %v4406, %v4404
    %v4408 = vmax.f32 %v4407, 1e-12
    %v4410 = vrot.slane %v4408, 1
    %v4411 = vrot.slane %v4408, 2
    %v4412 = vrot.slane %v4408, 3
    %v4417 = vrcp.pop %v4408
    %v4418 = vmul.f32 %v3847, %v4417
    %v4419 = vrcp.pop %v4410
    %v4420 = vmul.f32 %v3848, %v4419
    %v4421 = vrcp.pop %v4411
    %v4422 = vmul.f32 %v3849, %v4421
    %v4423 = vrcp.pop %v4412
    %v4424 = vmul.f32 %v3850, %v4423
    %v4425 = vmul.f32 %v4376, %v4418
    %v4426 = vmul.f32 %v4378, %v4420
    %v4427 = vmul.f32 %v4380, %v4422
    %v4428 = vmul.f32 %v4382, %v4424
    %v4433 = vrot.slane %v4426, 7
    %v4434 = vsel %vm307, %v4433, %v4425
    %v4435 = vrot.slane %v4427, 6
    %v4436 = vsel %vm309, %v4435, %v4434
    %v4437 = vrot.slane %v4428, 5
    %v4438 = vsel %vm311, %v4437, %v4436
    %v4440 = vsel %vm4355, %v4438, 0.0
    %4441 = vadd.xlane.f32.xlu0 %v4440
    %v4442 = vpop.xlane.xlu0 %4441
    %v4443 = vrcp.pop 0.1
    %v4444 = vmul.f32 %v4442, %v4443
    %v4445 = vmul.f32 %v4444, 1.442695
    %v4446 = vpow.pop %v4445
    %v4451 = vrot.slane %v4378, 7
    %v4452 = vsel %vm307, %v4451, %v4376
    %v4453 = vrot.slane %v4380, 6
    %v4454 = vsel %vm309, %v4453, %v4452
    %v4455 = vrot.slane %v4382, 5
    %v4456 = vsel %vm311, %v4455, %v4454
    %v4461 = vrot.slane %v4420, 7
    %v4462 = vsel %vm307, %v4461, %v4418
    %v4463 = vrot.slane %v4422, 6
    %v4464 = vsel %vm309, %v4463, %v4462
    %v4465 = vrot.slane %v4424, 5
    %v4466 = vsel %vm311, %v4465, %v4464
    %v4467 = vsel %vm222, %v4456, 0
    %v4469 = vsel %vm222, %v4466, 0
    %4471 = vmatprep.subr.mxu0 0.0
    %4472 = vmatpush1.xpose.msra.mxu0 0.0
    %4473 = vmatprep.subr.mxu0 0.0
    %4474 = vmatpush1.xpose.msra.mxu0 0.0
    %4475 = vmatprep.subr.mxu0 0.0
    %4476 = vmatpush1.xpose.msra.mxu0 0.0
    %4477 = vmatprep.subr.mxu0 0.0
    %4478 = vmatpush1.xpose.msra.mxu0 0.0
    %4479 = vmatprep.subr.mxu0 0.0
    %4480 = vmatpush1.xpose.msra.mxu0 0.0
    %4481 = vmatprep.subr.mxu0 0.0
    %4482 = vmatpush1.xpose.msra.mxu0 0.0
    %4483 = vmatprep.subr.mxu0 0.0
    %4484 = vmatpush1.xpose.msra.mxu0 0.0
    %4485 = vmatprep.subr.mxu0 0.0
    %4486 = vmatpush1.xpose.msra.mxu0 0.0
    %4487 = vmatprep.subr.mxu0 0.0
    %4488 = vmatpush1.xpose.msra.mxu0 0.0
    %4489 = vmatprep.subr.mxu0 0.0
    %4490 = vmatpush1.xpose.msra.mxu0 0.0
    %4491 = vmatprep.subr.mxu0 0.0
    %4492 = vmatpush1.xpose.msra.mxu0 0.0
    %4493 = vmatprep.subr.mxu0 0.0
    %4494 = vmatpush1.xpose.msra.mxu0 0.0
    %4495 = vmatprep.subr.mxu0 0.0
    %4496 = vmatpush1.xpose.msra.mxu0 0.0
    %4497 = vmatprep.subr.mxu0 0.0
    %4498 = vmatpush1.xpose.msra.mxu0 0.0
    %4499 = vmatprep.subr.mxu0 0.0
    %4500 = vmatpush1.xpose.msra.mxu0 0.0
    %4501 = vmatprep.subr.mxu0 0.0
    %4502 = vmatpush1.xpose.msra.mxu0 %v4469
    %4503 = vmatprep.subr.mxu0 0.0
    %4504 = vmatpush2.xpose.msra.mxu0 0.0
    %4505 = vmatprep.subr.mxu0 0.0
    %4506 = vmatpush2.xpose.msra.mxu0 0.0
    %4507 = vmatprep.subr.mxu0 0.0
    %4508 = vmatpush2.xpose.msra.mxu0 0.0
    %4509 = vmatprep.subr.mxu0 0.0
    %4510 = vmatpush2.xpose.msra.mxu0 0.0
    %4511 = vmatprep.subr.mxu0 0.0
    %4512 = vmatpush2.xpose.msra.mxu0 0.0
    %4513 = vmatprep.subr.mxu0 0.0
    %4514 = vmatpush2.xpose.msra.mxu0 0.0
    %4515 = vmatprep.subr.mxu0 0.0
    %4516 = vmatpush2.xpose.msra.mxu0 0.0
    %4517 = vmatprep.subr.mxu0 0.0
    %4518 = vmatpush2.xpose.msra.mxu0 0.0
    %4519 = vmatprep.subr.mxu0 0.0
    %4520 = vmatpush2.xpose.msra.mxu0 0.0
    %4521 = vmatprep.subr.mxu0 0.0
    %4522 = vmatpush2.xpose.msra.mxu0 0.0
    %4523 = vmatprep.subr.mxu0 0.0
    %4524 = vmatpush2.xpose.msra.mxu0 0.0
    %4525 = vmatprep.subr.mxu0 0.0
    %4526 = vmatpush2.xpose.msra.mxu0 0.0
    %4527 = vmatprep.subr.mxu0 0.0
    %4528 = vmatpush2.xpose.msra.mxu0 0.0
    %4529 = vmatprep.subr.mxu0 0.0
    %4530 = vmatpush2.xpose.msra.mxu0 0.0
    %4531 = vmatprep.subr.mxu0 0.0
    %4532 = vmatpush2.xpose.msra.mxu0 0.0
    %4533 = vmatprep.subr.mxu0 0.0
    %4534 = vmatpush2.xpose.msra.mxu0 0.0
    %4535 = vmatprep.mubr.f32.mxu0 0.0
    %4536 = vmatmul.mubr.f32.gmra.mxu0 %v4467
    %v4537 = vpop.f32.mrf.mxu0
    %v4538 = vadd.f32 0.0, %v4537
    %v4539 = vpop.f32.mrf.mxu0
    %4540 = vdwg.mxu0
    %v4541 = vmul.f32 %v4538, %v4443
    %v4542 = vmul.f32 %v4541, 1.442695
    %v4543 = vpow.pop %v4542
    %vm4544 = vcmask 27648
    %v4545 = vsel %vm4544, %v4543, 0.0
    %4546 = vadd.xlane.f32.xlu0 %v4545
    %v4547 = vpop.xlane.xlu0 %4546
    %v4548 = vadd.f32 %v4547, 1e-08
    %v4549 = vrcp.pop %v4548
    %v4550 = vmul.f32 %v4446, %v4549
    %v4551 = vlog2.pop %v4550
    %v4552 = vmul.f32 %v4551, 0.6931472
    %v4553 = vsub.f32 0.0, %v4552
    %v4554 = vsel %vm4326, %v4553, 0.0
    %4555 = vadd.xlane.f32.xlu0 %v4554
    %v4556 = vpop.xlane.xlu0 %4555
    %v4557 = vrot.slane %v4556, 4
    %v4558 = vadd.f32 %v4556, %v4557
    %v4559 = vrot.slane %v4558, 2
    %v4560 = vadd.f32 %v4558, %v4559
    %v4561 = vrot.slane %v4560, 1
    %v4562 = vadd.f32 %v4560, %v4561
    %s4563 = vtos %v4562
    %s4564 = smul.f32 %s4563, 0.5
    %s4565 = sadd.f32 %s4564, %s4339
    %v4566 = vstv %s4565
    %vm4567 = vcmask 0
    %4568 = vst.msk [vmem:[#allocation2] sm:$0x1] %vm4567, %v4566
    // Predicated region
    $region114: #{rec_layer_forward.1} parent=1 // pred_check
      _
    $region115: #{rec_layer_forward.1} parent=1 // pred_check_branch
      %4570 = sbr.rel (0) target = $region117
    $region116: #{rec_layer_forward.1} parent=1 // pred_region
      %s4572 = ssub.s32 16, 16
      %4573 = vsyncadd [#allocation3], %s4572
      %s4575 = sshll.u32 [#allocation2], 4
      %s4576 = int_to_ptr.vmem [resolvable:$true] %s4575
      %4578 = dma.vmem_to_hbm [thread:$0]  %s4576, 16, %s57, [#allocation3]
    $region117: #{rec_layer_forward.1} parent=1 // pred_fallthru
      _
    // Predicated region
    $region118: #{rec_layer_forward.1} parent=1 // pred_check
      _
    $region119: #{rec_layer_forward.1} parent=1 // pred_check_branch
      %4580 = sbr.rel (0) target = $region121
    $region120: #{rec_layer_forward.1} parent=1 // pred_region
      %s4582 = ssub.s32 64, 64
      %4583 = vsyncadd [#allocation5], %s4582
      %s4585 = sshll.u32 [#allocation4], 4
      %s4586 = int_to_ptr.vmem [resolvable:$true] %s4585
      %4588 = dma.vmem_to_hbm [thread:$0]  %s4586, 64, %s59, [#allocation5]
    $region121: #{rec_layer_forward.1} parent=1 // pred_fallthru
      _
    // Predicated region
    $region122: #{rec_layer_forward.1} parent=1 // pred_check
      _
    $region123: #{rec_layer_forward.1} parent=1 // pred_check_branch
      %4590 = sbr.rel (0) target = $region125
    $region124: #{rec_layer_forward.1} parent=1 // pred_region
      %s4592 = ssub.s32 64, 64
      %4593 = vsyncadd [#allocation5], %s4592
      %s4595 = sshll.u32 [#allocation6], 4
      %s4596 = int_to_ptr.vmem [resolvable:$true] %s4595
      %4598 = dma.vmem_to_hbm [thread:$0]  %s4596, 64, %s61, [#allocation5]
    $region125: #{rec_layer_forward.1} parent=1 // pred_fallthru
      _
    // Predicated region
    $region126: #{rec_layer_forward.1} parent=1 // pred_check
      _
    $region127: #{rec_layer_forward.1} parent=1 // pred_check_branch
      %4600 = sbr.rel (0) target = $region129
    $region128: #{rec_layer_forward.1} parent=1 // pred_region
      %s4602 = ssub.s32 64, 64
      %4603 = vsyncadd [#allocation8], %s4602
      %s4605 = sshll.u32 [#allocation7], 4
      %s4606 = int_to_ptr.vmem [resolvable:$true] %s4605
      %4608 = dma.vmem_to_hbm [thread:$0]  %s4606, 64, %s63, [#allocation8]
    $region129: #{rec_layer_forward.1} parent=1 // pred_fallthru
      _
    // Predicated region
    $region130: #{rec_layer_forward.1} parent=1 // pred_check
      _
    $region131: #{rec_layer_forward.1} parent=1 // pred_check_branch
      %4610 = sbr.rel (0) target = $region133
    $region132: #{rec_layer_forward.1} parent=1 // pred_region
      %4611 = dma.done [#allocation3], 16
    $region133: #{rec_layer_forward.1} parent=1 // pred_fallthru
      _
    // Predicated region
    $region134: #{rec_layer_forward.1} parent=1 // pred_check
      _
    $region135: #{rec_layer_forward.1} parent=1 // pred_check_branch
      %4613 = sbr.rel (0) target = $region137
    $region136: #{rec_layer_forward.1} parent=1 // pred_region
      %4614 = dma.done [#allocation5], 64
    $region137: #{rec_layer_forward.1} parent=1 // pred_fallthru
      _
    // Predicated region
    $region138: #{rec_layer_forward.1} parent=1 // pred_check
      _
    $region139: #{rec_layer_forward.1} parent=1 // pred_check_branch
      %4616 = sbr.rel (0) target = $region141
    $region140: #{rec_layer_forward.1} parent=1 // pred_region
      %4617 = dma.done [#allocation5], 64
    $region141: #{rec_layer_forward.1} parent=1 // pred_fallthru
      _
    // Predicated region
    $region142: #{rec_layer_forward.1} parent=1 // pred_check
      _
    $region143: #{rec_layer_forward.1} parent=1 // pred_check_branch
      %4619 = sbr.rel (0) target = $region145
    $region144: #{rec_layer_forward.1} parent=1 // pred_region
      %4620 = dma.done [#allocation8], 64
    $region145: #{rec_layer_forward.1} parent=1 // pred_fallthru
      _
    %4621 = vsyncpa [#allocation3], 1
    %4622 = vsyncpa [#allocation5], 1
    %4623 = vsyncpa [#allocation8], 1

</llo_original>
